<compile_context>
chip_gen: v7x
topology: tpu7x:2x2x1
jax: 0.10.0
libtpu: 0.0.40
codegen_flags: <defaults>
</compile_context>

<pallas_src>
import functools

import jax
import jax.numpy as jnp
import numpy as np
from jax.experimental import pallas as pl
from jax.experimental.pallas import tpu as pltpu

EXPANSION = 4
_BN_EPS = 1e-5
_LANES = 128


def _round_up(x, m):
    return (x + m - 1) // m * m


def _cdiv(a, b):
    return -(-a // b)


def _pad_to(a, axis, target):
    pad = target - a.shape[axis]
    if pad <= 0:
        return a
    cfg = [(0, 0)] * a.ndim
    cfg[axis] = (0, pad)
    return jnp.pad(a, cfg)


@functools.lru_cache(maxsize=1)
def _vmem_limit_bytes():
    # Generation-aware scoped-VMEM limit: ~3/4 of physical, capped at 64 MiB.
    # (v5e/v6e: 128 MiB physical -> 64 MiB; v7x: 64 MiB physical -> 48 MiB.)
    cap = 64 * 1024 * 1024
    try:
        info = pltpu.get_tpu_info()
        cap = int(getattr(info, "vmem_capacity_bytes", cap))
    except Exception:
        pass
    return max(32 * 1024 * 1024, min(cap * 3 // 4, 64 * 1024 * 1024))


def _compiler_params(semantics):
    return pltpu.CompilerParams(
        dimension_semantics=semantics,
        vmem_limit_bytes=_vmem_limit_bytes(),
    )


def _choose_row_tile(n_rows, per_row_bytes, fixed_bytes, budget):
    # Largest row tile whose double-buffered blocks (actual byte widths) fit the budget after
    # accounting for the (double-buffered) weight blocks, keeping >= 2 grid steps if possible.
    avail = max(budget - fixed_bytes, 2 << 20)
    for t in (4096, 2048, 1024, 512, 256, 128, 64, 32, 16, 8):
        if 2 * t * per_row_bytes <= avail and (n_rows > t or t == 8):
            return t
    return 8


def _pick_strip_rows(ho, wt, stride, wx, cin_p, cpl, vmem_limit):
    # Output rows per strip for the fused conv1+conv2 kernel.
    cap = max(1, 256 // max(wt, 8))            # target ~256 output rows per strip
    if stride > 1:
        cap = min(cap, 8)                      # stride>1 path unrolls a per-row loop
    if ho >= 8:
        cap = min(cap, max(1, ho // 2))        # keep >= 2 strips (pipelining / megacore)
    # rough per-output-row VMEM cost of in-kernel temporaries (x slice, h1, g1, acc)
    row_bytes = wx * stride * (cin_p * 2 + cpl * 6) + wt * (3 * cpl * 4 + cpl * 6)
    cap = min(cap, max(1, (vmem_limit // 4) // max(row_bytes, 1)))
    cap = max(1, min(cap, ho))
    for sh in range(cap, max(1, cap // 2) - 1, -1):
        if ho % sh == 0:                       # prefer a divisor (no padded output rows)
            return sh
    return cap


# ----------------------------- Pallas kernels ------------------------------


def _fused_conv12_kernel(x_ref, w1_ref, w2_ref, b2_ref, o_ref, *, sh, wt, wx, r, stride):
    # x_ref : (Hc*Wx, cin_p) bf16  zero-padded input canvas of one image, rows flattened so
    #         canvas pixel (y, x) lives at row y*wx + x (ones-channel appended at col cin).
    # w1_ref: (cin_p, cpl)   bf16  conv1 weight, BN folded, b1 stored as the ones-channel row.
    # w2_ref: (3, 3*cpl, cpl) bf16 width-im2col conv2 weights: w2_ref[dy][dx*cpl + cin, cout].
    # b2_ref: (1, cpl)        f32  conv2 bias (BN folded).
    # o_ref : (sh*wt, cpl)   bf16  dense conv2 output rows for this strip.
    cpl = w1_ref.shape[1]
    strip = pl.program_id(1)

    # conv1 (1x1) + bn1 + relu over the strip's canvas rows (+ halo).  Zero-padded canvas
    # pixels stay exactly zero because the bias only enters through the ones-channel.
    start = pl.multiple_of(strip * (sh * stride * wx), 8)
    x2d = x_ref[pl.ds(start, r * wx), :]
    h1 = jnp.dot(x2d, w1_ref[...], preferred_element_type=jnp.float32)
    h1 = jnp.maximum(h1, 0.0).astype(jnp.bfloat16).reshape(r, wx, cpl)

    # Width-only im2col: dx folded into the channel axis, K = 3*cpl.
    g1 = jnp.concatenate(
        [h1[:, 0:wt, :], h1[:, 1:wt + 1, :], h1[:, 2:wt + 2, :]], axis=-1)

    b2 = b2_ref[...]
    if stride == 1:
        # All sh output rows of the strip in three chained dots (contiguous dy windows).
        g1f = g1.reshape(r * wt, 3 * cpl)
        acc = jnp.dot(g1f[0:sh * wt], w2_ref[0], preferred_element_type=jnp.float32)
        acc = acc + jnp.dot(g1f[wt:wt + sh * wt], w2_ref[1],
                            preferred_element_type=jnp.float32)
        acc = acc + jnp.dot(g1f[2 * wt:2 * wt + sh * wt], w2_ref[2],
                            preferred_element_type=jnp.float32)
        o_ref[...] = jnp.maximum(acc + b2, 0.0).astype(o_ref.dtype)
    else:
        # Strided rows: only the needed output rows are computed (3 dots per row).
        for y in range(sh):
            acc = jnp.dot(g1[y * stride], w2_ref[0], preferred_element_type=jnp.float32)
            acc = acc + jnp.dot(g1[y * stride + 1], w2_ref[1],
                                preferred_element_type=jnp.float32)
            acc = acc + jnp.dot(g1[y * stride + 2], w2_ref[2],
                                preferred_element_type=jnp.float32)
            o_ref[pl.ds(y * wt, wt), :] = jnp.maximum(acc + b2, 0.0).astype(o_ref.dtype)


def _residual_proj_kernel(h_ref, w3_ref, b3_ref, xs_ref, ws_ref, o_ref):
    # main = relu(conv3(h2) + b3); shortcut = 1x1 conv(x) (+bs via ones-channel);
    # out = relu(main + shortcut).
    main = jnp.maximum(
        jnp.dot(h_ref[...], w3_ref[...], preferred_element_type=jnp.float32) + b3_ref[...],
        0.0)
    sc = jnp.dot(xs_ref[...], ws_ref[...], preferred_element_type=jnp.float32)
    o_ref[...] = jnp.maximum(main + sc, 0.0).astype(o_ref.dtype)


def _residual_identity_kernel(h_ref, w3_ref, b3_ref, xs_ref, o_ref):
    # Identity shortcut: no shortcut matmul; bf16 residual widened to f32 before the add.
    main = jnp.maximum(
        jnp.dot(h_ref[...], w3_ref[...], preferred_element_type=jnp.float32) + b3_ref[...],
        0.0)
    o_ref[...] = jnp.maximum(main + xs_ref[...].astype(jnp.float32), 0.0).astype(o_ref.dtype)


# ----------------------------- kernel wrappers ------------------------------


def _fused_conv12(x_aug_bf16, w1a, w2row, b2p, *, H, W, stride, Ho, Wo):
    # x_aug_bf16: (B, H, W, cin_p) bf16 with the ones-channel at col cin.
    B = x_aug_bf16.shape[0]
    cin_p = x_aug_bf16.shape[-1]
    cpl = w1a.shape[1]
    vmem_limit = _vmem_limit_bytes()

    Wt = _round_up(W, 8)                 # dense output width (== W for W % 8 == 0)
    Wx = _round_up(Wt + 2, 8)            # canvas row pitch (left/right zero pad + scrap)

    sh = _pick_strip_rows(Ho, Wt, stride, Wx, cin_p, cpl, vmem_limit)
    n_strips = _cdiv(Ho, sh)
    Ho_p = n_strips * sh
    r = (sh - 1) * stride + 3            # canvas rows read per strip (incl. halo)
    Hc = max((Ho_p - 1) * stride + 3, H + 1)

    canvas = jnp.pad(x_aug_bf16,
                     ((0, 0), (1, Hc - H - 1), (1, Wx - W - 1), (0, 0)))
    canvas = canvas.reshape(B, Hc * Wx, cin_p)

    kernel = functools.partial(_fused_conv12_kernel,
                               sh=sh, wt=Wt, wx=Wx, r=r, stride=stride)
    out = pl.pallas_call(
        kernel,
        out_shape=jax.ShapeDtypeStruct((B, Ho_p * Wt, cpl), jnp.bfloat16),
        grid_spec=pltpu.PrefetchScalarGridSpec(
            num_scalar_prefetch=0,
            grid=(B, n_strips),
            in_specs=[
                # whole canvas of one image; constant along the strip axis -> DMAed once per b
                pl.BlockSpec((None, Hc * Wx, cin_p), lambda b, s: (b, 0, 0)),
                pl.BlockSpec((cin_p, cpl), lambda b, s: (0, 0)),
                pl.BlockSpec((3, 3 * cpl, cpl), lambda b, s: (0, 0, 0)),
                pl.BlockSpec((1, cpl), lambda b, s: (0, 0)),
            ],
            out_specs=pl.BlockSpec((None, sh * Wt, cpl), lambda b, s: (b, s, 0)),
        ),
        compiler_params=_compiler_params(("parallel", "parallel")),
    )(canvas, w1a, w2row, b2p)

    h2 = out.reshape(B, Ho_p, Wt, cpl)
    if stride > 1:
        h2 = h2[:, :, ::stride, :]        # TODO(synk): column striding in-kernel
    h2 = h2[:, :Ho, :Wo, :]               # no-op when strips/width are exact (common case)
    return h2.reshape(B * Ho * Wo, cpl)    # bf16


def _residual_proj(h2d, w3, b3, xs2d, ws, out_dtype):
    n, k3 = h2d.shape
    ks = xs2d.shape[1]
    co = w3.shape[1]
    vmem_limit = _vmem_limit_bytes()
    per_row = (k3 + ks) * 2 + co * 4                     # bf16 inputs, f32 output
    fixed = 2 * ((k3 + ks) * co * 2 + co * 4)            # double-buffered weights + bias
    tile = _choose_row_tile(n, per_row, fixed, vmem_limit // 2)
    n_pad = _round_up(n, tile)
    if n_pad != n:
        h2d = jnp.pad(h2d, ((0, n_pad - n), (0, 0)))
        xs2d = jnp.pad(xs2d, ((0, n_pad - n), (0, 0)))
    out = pl.pallas_call(
        _residual_proj_kernel,
        out_shape=jax.ShapeDtypeStruct((n_pad, co), out_dtype),
        grid_spec=pltpu.PrefetchScalarGridSpec(
            num_scalar_prefetch=0,
            grid=(n_pad // tile,),
            in_specs=[
                pl.BlockSpec((tile, k3), lambda i: (i, 0)),
                pl.BlockSpec((k3, co), lambda i: (0, 0)),
                pl.BlockSpec((1, co), lambda i: (0, 0)),
                pl.BlockSpec((tile, ks), lambda i: (i, 0)),
                pl.BlockSpec((ks, co), lambda i: (0, 0)),
            ],
            out_specs=pl.BlockSpec((tile, co), lambda i: (i, 0)),
        ),
        compiler_params=_compiler_params(("parallel",)),
    )(h2d, w3, b3, xs2d, ws)
    return out[:n]


def _residual_identity(h2d, w3, b3, xs2d, out_dtype):
    n, k3 = h2d.shape
    co = w3.shape[1]
    vmem_limit = _vmem_limit_bytes()
    per_row = k3 * 2 + co * 2 + co * 4                   # bf16 h2/xs, f32 output
    fixed = 2 * (k3 * co * 2 + co * 4)
    tile = _choose_row_tile(n, per_row, fixed, vmem_limit // 2)
    n_pad = _round_up(n, tile)
    if n_pad != n:
        h2d = jnp.pad(h2d, ((0, n_pad - n), (0, 0)))
        xs2d = jnp.pad(xs2d, ((0, n_pad - n), (0, 0)))
    out = pl.pallas_call(
        _residual_identity_kernel,
        out_shape=jax.ShapeDtypeStruct((n_pad, co), out_dtype),
        grid_spec=pltpu.PrefetchScalarGridSpec(
            num_scalar_prefetch=0,
            grid=(n_pad // tile,),
            in_specs=[
                pl.BlockSpec((tile, k3), lambda i: (i, 0)),
                pl.BlockSpec((k3, co), lambda i: (0, 0)),
                pl.BlockSpec((1, co), lambda i: (0, 0)),
                pl.BlockSpec((tile, co), lambda i: (i, 0)),
            ],
            out_specs=pl.BlockSpec((tile, co), lambda i: (i, 0)),
        ),
        compiler_params=_compiler_params(("parallel",)),
    )(h2d, w3, b3, xs2d)
    return out[:n]


# ------------------------------- parameters --------------------------------


def init_params(key, in_planes, planes, stride):
    cout = EXPANSION * planes
    ks = list(jax.random.split(key, 8))

    def conv_w(k, shape):
        return 0.1 * jax.random.normal(k, shape, jnp.float32)

    def bn(k, c):
        kg, kb, km, kv = jax.random.split(k, 4)
        return dict(
            gamma=1.0 + 0.1 * jax.random.normal(kg, (c,), jnp.float32),
            beta=0.1 * jax.random.normal(kb, (c,), jnp.float32),
            mean=0.1 * jax.random.normal(km, (c,), jnp.float32),
            var=jnp.abs(jax.random.normal(kv, (c,), jnp.float32)) + 0.5,
        )

    p = {
        "w1": conv_w(ks[0], (in_planes, planes)),        # 1x1 conv: (cin, cout)
        "bn1": bn(ks[1], planes),
        "w2": conv_w(ks[2], (3, 3, planes, planes)),     # 3x3 conv: (kh, kw, cin, cout)
        "bn2": bn(ks[3], planes),
        "w3": conv_w(ks[4], (planes, cout)),             # 1x1 conv: (cin, cout)
        "bn3": bn(ks[5], cout),
    }
    if stride != 1 or in_planes != cout:
        p["ws"] = conv_w(ks[6], (in_planes, cout))       # shortcut 1x1 conv
        p["bns"] = bn(ks[7], cout)
    return p


def _fold_bn(w, bn):
    # eval-mode BatchNorm folded into the preceding conv (scale on the cout axis).
    scale = bn["gamma"] / jnp.sqrt(bn["var"] + _BN_EPS)
    bias = bn["beta"] - bn["mean"] * scale
    return w * scale, bias


# -------------------------------- forward ----------------------------------


def bottleneck_forward(x_nchw, params, stride=1):
    B, cin, H, W = x_nchw.shape
    planes = params["w1"].shape[1]
    cout = EXPANSION * planes
    has_proj = (stride != 1) or (cin != cout)

    cin_p = _round_up(cin + 1, _LANES)        # +1: ones-channel carries conv1/shortcut bias
    cpl = _round_up(planes, _LANES)
    cout_p = _round_up(cout, _LANES)

    Ho = (H - 1) // stride + 1
    Wo = (W - 1) // stride + 1

    # --- weight prep (constant-folds under jit): fold BN, pad channels, bf16 operands ---
    w1, b1 = _fold_bn(params["w1"], params["bn1"])
    w2, b2 = _fold_bn(params["w2"], params["bn2"])
    w3, b3 = _fold_bn(params["w3"], params["bn3"])

    w1a = jnp.concatenate([w1, b1[None, :]], axis=0)            # bias as ones-channel row
    w1a = _pad_to(_pad_to(w1a, 0, cin_p), 1, cpl).astype(jnp.bfloat16)

    w2p = _pad_to(_pad_to(w2, 2, cpl), 3, cpl)                   # (3, 3, cpl, cpl)
    w2row = w2p.reshape(3, 3 * cpl, cpl).astype(jnp.bfloat16)    # width-im2col weights
    b2p = _pad_to(b2, 0, cpl).reshape(1, cpl)

    w3p = _pad_to(_pad_to(w3, 0, cpl), 1, cout_p).astype(jnp.bfloat16)
    b3p = _pad_to(b3, 0, cout_p).reshape(1, cout_p)

    # --- activations: NCHW -> NHWC, append ones-channel, pad channels (glue) ---
    x = jnp.transpose(x_nchw, (0, 2, 3, 1)).astype(jnp.float32)          # (B,H,W,cin)
    ones = jnp.ones((B, H, W, 1), jnp.float32)
    x_aug = _pad_to(jnp.concatenate([x, ones], axis=-1), 3, cin_p)
    x_aug = x_aug.astype(jnp.bfloat16)

    # --- fused conv1(1x1)+bn1+relu + conv2(3x3,stride,pad=1)+bn2+relu ---
    h2_2d = _fused_conv12(x_aug, w1a, w2row, b2p,
                          H=H, W=W, stride=stride, Ho=Ho, Wo=Wo)          # (B*Ho*Wo, cpl) bf16

    # --- conv3(1x1)+bn3+relu, shortcut, residual add, final relu ---
    if has_proj:
        ws, bs = _fold_bn(params["ws"], params["bns"])
        wsa = jnp.concatenate([ws, bs[None, :]], axis=0)                  # bias via ones-channel
        wsa = _pad_to(_pad_to(wsa, 0, cin_p), 1, cout_p).astype(jnp.bfloat16)
        xs = x_aug[:, ::stride, ::stride, :][:, :Ho, :Wo, :]
        xs2d = xs.reshape(B * Ho * Wo, cin_p)
        out2d = _residual_proj(h2_2d, w3p, b3p, xs2d, wsa, jnp.float32)
    else:
        # identity shortcut (stride 1, cin == cout): residual fed as bf16, no matmul.
        xs2d = _pad_to(x, 3, cout_p).reshape(B * H * W, cout_p).astype(jnp.bfloat16)
        out2d = _residual_identity(h2_2d, w3p, b3p, xs2d, jnp.float32)

    out = out2d[:, :cout].reshape(B, Ho, Wo, cout)
    return jnp.transpose(out, (0, 3, 1, 2))  # back to NCHW


# ------------------------------- reference ---------------------------------


def bottleneck_reference(x_nchw, params, stride=1):
    # Pure-JAX f32 reference mirroring the PyTorch module exactly (eval-mode BN).
    def conv(x, w_oihw, s=1, pad=0):
        return jax.lax.conv_general_dilated(
            x, w_oihw, (s, s), [(pad, pad), (pad, pad)],
            dimension_numbers=("NCHW", "OIHW", "NCHW"))

    def bn(y, b):
        scale = b["gamma"] / jnp.sqrt(b["var"] + _BN_EPS)
        bias = b["beta"] - b["mean"] * scale
        return y * scale[None, :, None, None] + bias[None, :, None, None]

    w1 = params["w1"].T[:, :, None, None]
    w2 = jnp.transpose(params["w2"], (3, 2, 0, 1))
    w3 = params["w3"].T[:, :, None, None]

    o = jax.nn.relu(bn(conv(x_nchw, w1), params["bn1"]))
    o = jax.nn.relu(bn(conv(o, w2, s=stride, pad=1), params["bn2"]))
    o = jax.nn.relu(bn(conv(o, w3), params["bn3"]))          # relu before the add (spec)
    if "ws" in params:
        sc = bn(conv(x_nchw, params["ws"].T[:, :, None, None], s=stride), params["bns"])
    else:
        sc = x_nchw
    return jax.nn.relu(o + sc)


# --------------------------------- main -------------------------------------


def _run_case(name, key, B, in_planes, planes, H, W, stride):
    kx, kp = jax.random.split(key)
    x = jax.random.normal(kx, (B, in_planes, H, W), jnp.float32)
    params = init_params(kp, in_planes, planes, stride)

    fwd = jax.jit(functools.partial(bottleneck_forward, stride=stride))
    ref_fn = jax.jit(functools.partial(bottleneck_reference, stride=stride))

    out = jax.block_until_ready(fwd(x, params))
    ref = jax.block_until_ready(ref_fn(x, params))

    Ho = (H - 1) // stride + 1
    Wo = (W - 1) // stride + 1
    assert out.shape == (B, EXPANSION * planes, Ho, Wo), (name, out.shape)
    # bf16 MXU operands / bf16 residual vs f32 conv reference -> loosened tolerance.
    np.testing.assert_allclose(np.asarray(out), np.asarray(ref),
                               rtol=2e-2, atol=3e-2, err_msg=name)


if __name__ == "__main__":
    key = jax.random.PRNGKey(0)
    k1, k2, k3 = jax.random.split(key, 3)
    # Projection shortcut, stride 1 (primary test shape: x = [2, 4, 16, 16]).
    _run_case("proj_s1", k1, B=2, in_planes=4, planes=4, H=16, W=16, stride=1)
    # Identity shortcut (in_planes == 4*planes, stride 1) -> shortcut matmul skipped.
    _run_case("identity", k2, B=2, in_planes=16, planes=4, H=8, W=8, stride=1)
    # Strided projection shortcut.
    _run_case("proj_s2", k3, B=2, in_planes=8, planes=4, H=16, W=16, stride=2)
    print("KERNEL_OK")
</pallas_src>

<mosaic_0001>
module attributes {stable_mosaic.version = 11 : i64} {
  func.func @_residual_proj_kernel(%arg0: i32, %arg1: memref<256x128xbf16, #tpu.memory_space<vmem>>, %arg2: memref<128x128xbf16, #tpu.memory_space<vmem>>, %arg3: memref<1x128xf32, #tpu.memory_space<vmem>>, %arg4: memref<256x128xbf16, #tpu.memory_space<vmem>>, %arg5: memref<128x128xbf16, #tpu.memory_space<vmem>>, %arg6: memref<256x128xf32, #tpu.memory_space<vmem>>) attributes {dimension_semantics = [#tpu.dimension_semantics<parallel>], iteration_bounds = array<i64: 2>, scalar_prefetch = 0 : i64, scratch_operands = 0 : i64, tpu.core_type = #tpu.core_type<tc>, window_params = [{transform_indices = @transform_0, window_bounds = array<i64: 256, 128>}, {pipeline_mode = #tpu.pipeline_mode<synchronous>, transform_indices = @transform_1, window_bounds = array<i64: 128, 128>}, {pipeline_mode = #tpu.pipeline_mode<synchronous>, transform_indices = @transform_2, window_bounds = array<i64: 1, 128>}, {transform_indices = @transform_3, window_bounds = array<i64: 256, 128>}, {pipeline_mode = #tpu.pipeline_mode<synchronous>, transform_indices = @transform_4, window_bounds = array<i64: 128, 128>}, {transform_indices = @transform_5, window_bounds = array<i64: 256, 128>}]} {
    %c0 = arith.constant 0 : index
    %c0_0 = arith.constant 0 : index
    %0 = vector.load %arg1[%c0, %c0_0] : memref<256x128xbf16, #tpu.memory_space<vmem>>, vector<256x128xbf16>
    %c0_1 = arith.constant 0 : index
    %c0_2 = arith.constant 0 : index
    %1 = vector.load %arg2[%c0_1, %c0_2] : memref<128x128xbf16, #tpu.memory_space<vmem>>, vector<128x128xbf16>
    %cst = arith.constant dense<0.000000e+00> : vector<256x128xf32>
    %2 = tpu.matmul %0, %1, %cst {dimension_numbers = #tpu.dot_dimension_numbers<[1], [0], [0], [1], [0, 0, 1, 1], [], []>} : vector<256x128xbf16>, vector<128x128xbf16>, vector<256x128xf32> -> vector<256x128xf32>
    %c0_3 = arith.constant 0 : index
    %c0_4 = arith.constant 0 : index
    %3 = vector.load %arg3[%c0_3, %c0_4] : memref<1x128xf32, #tpu.memory_space<vmem>>, vector<1x128xf32>
    %4 = vector.broadcast %3 : vector<1x128xf32> to vector<256x128xf32>
    %5 = arith.addf %2, %4 : vector<256x128xf32>
    %cst_5 = arith.constant 0.000000e+00 : f32
    %6 = vector.broadcast %cst_5 : f32 to vector<256x128xf32>
    %7 = arith.maximumf %5, %6 : vector<256x128xf32>
    %c0_6 = arith.constant 0 : index
    %c0_7 = arith.constant 0 : index
    %8 = vector.load %arg4[%c0_6, %c0_7] : memref<256x128xbf16, #tpu.memory_space<vmem>>, vector<256x128xbf16>
    %c0_8 = arith.constant 0 : index
    %c0_9 = arith.constant 0 : index
    %9 = vector.load %arg5[%c0_8, %c0_9] : memref<128x128xbf16, #tpu.memory_space<vmem>>, vector<128x128xbf16>
    %cst_10 = arith.constant dense<0.000000e+00> : vector<256x128xf32>
    %10 = tpu.matmul %8, %9, %cst_10 {dimension_numbers = #tpu.dot_dimension_numbers<[1], [0], [0], [1], [0, 0, 1, 1], [], []>} : vector<256x128xbf16>, vector<128x128xbf16>, vector<256x128xf32> -> vector<256x128xf32>
    %11 = arith.addf %7, %10 : vector<256x128xf32>
    %cst_11 = arith.constant 0.000000e+00 : f32
    %12 = vector.broadcast %cst_11 : f32 to vector<256x128xf32>
    %13 = arith.maximumf %11, %12 : vector<256x128xf32>
    %c0_12 = arith.constant 0 : index
    %c0_13 = arith.constant 0 : index
    %14 = vector.load %arg6[%c0_12, %c0_13] : memref<256x128xf32, #tpu.memory_space<vmem>>, vector<256x128xf32>
    tpu.vector_store %arg6[%c0_12, %c0_13], %13 {strides = array<i32>} : memref<256x128xf32, #tpu.memory_space<vmem>>, vector<256x128xf32>,
    return
  }
  func.func @transform_0(%arg0: i32) -> (i32, i32) {
    %c0_i32 = arith.constant 0 : i32
    %c0_i32_0 = arith.constant 0 : i32
    return %arg0, %c0_i32 : i32, i32
  }
  func.func @transform_1(%arg0: i32) -> (i32, i32) {
    %c0_i32 = arith.constant 0 : i32
    %c0_i32_0 = arith.constant 0 : i32
    %c0_i32_1 = arith.constant 0 : i32
    return %c0_i32, %c0_i32_0 : i32, i32
  }
  func.func @transform_2(%arg0: i32) -> (i32, i32) {
    %c0_i32 = arith.constant 0 : i32
    %c0_i32_0 = arith.constant 0 : i32
    %c0_i32_1 = arith.constant 0 : i32
    return %c0_i32, %c0_i32_0 : i32, i32
  }
  func.func @transform_3(%arg0: i32) -> (i32, i32) {
    %c0_i32 = arith.constant 0 : i32
    %c0_i32_0 = arith.constant 0 : i32
    return %arg0, %c0_i32 : i32, i32
  }
  func.func @transform_4(%arg0: i32) -> (i32, i32) {
    %c0_i32 = arith.constant 0 : i32
    %c0_i32_0 = arith.constant 0 : i32
    %c0_i32_1 = arith.constant 0 : i32
    return %c0_i32, %c0_i32_0 : i32, i32
  }
  func.func @transform_5(%arg0: i32) -> (i32, i32) {
    %c0_i32 = arith.constant 0 : i32
    %c0_i32_0 = arith.constant 0 : i32
    return %arg0, %c0_i32 : i32, i32
  }
}

module attributes {stable_mosaic.version = 11 : i64} {
  func.func @_fused_conv12_kernel(%arg0: i32, %arg1: i32, %arg2: memref<1x432x128xbf16, #tpu.memory_space<vmem>>, %arg3: memref<128x128xbf16, #tpu.memory_space<vmem>>, %arg4: memref<3x384x128xbf16, #tpu.memory_space<vmem>>, %arg5: memref<1x128xf32, #tpu.memory_space<vmem>>, %arg6: memref<1x128x128xbf16, #tpu.memory_space<vmem>>) attributes {dimension_semantics = [#tpu.dimension_semantics<parallel>, #tpu.dimension_semantics<parallel>], iteration_bounds = array<i64: 2, 2>, scalar_prefetch = 0 : i64, scratch_operands = 0 : i64, tpu.core_type = #tpu.core_type<tc>, window_params = [{transform_indices = @transform_0, window_bounds = array<i64: 1, 432, 128>}, {pipeline_mode = #tpu.pipeline_mode<synchronous>, transform_indices = @transform_1, window_bounds = array<i64: 128, 128>}, {pipeline_mode = #tpu.pipeline_mode<synchronous>, transform_indices = @transform_2, window_bounds = array<i64: 3, 384, 128>}, {pipeline_mode = #tpu.pipeline_mode<synchronous>, transform_indices = @transform_3, window_bounds = array<i64: 1, 128>}, {transform_indices = @transform_4, window_bounds = array<i64: 1, 128, 128>}]} {
    %c192_i32 = arith.constant 192 : i32
    %0 = arith.muli %arg1, %c192_i32 : i32
    %1 = tpu.assume_multiple %0, 8 : i32
    %c0 = arith.constant 0 : index
    %2 = arith.index_cast %1 : i32 to index
    %c0_0 = arith.constant 0 : index
    %3 = vector.load %arg2[%c0, %2, %c0_0] : memref<1x432x128xbf16, #tpu.memory_space<vmem>>, vector<1x240x128xbf16>
    %4 = vector.shape_cast %3 : vector<1x240x128xbf16> to vector<240x128xbf16>
    %c0_1 = arith.constant 0 : index
    %c0_2 = arith.constant 0 : index
    %5 = vector.load %arg3[%c0_1, %c0_2] : memref<128x128xbf16, #tpu.memory_space<vmem>>, vector<128x128xbf16>
    %cst = arith.constant dense<0.000000e+00> : vector<240x128xf32>
    %6 = tpu.matmul %4, %5, %cst {dimension_numbers = #tpu.dot_dimension_numbers<[1], [0], [0], [1], [0, 0, 1, 1], [], []>} : vector<240x128xbf16>, vector<128x128xbf16>, vector<240x128xf32> -> vector<240x128xf32>
    %cst_3 = arith.constant 0.000000e+00 : f32
    %7 = vector.broadcast %cst_3 : f32 to vector<240x128xf32>
    %8 = arith.maximumf %6, %7 : vector<240x128xf32>
    %9 = arith.truncf %8 : vector<240x128xf32> to vector<240x128xbf16>
    %10 = vector.shape_cast %9 : vector<240x128xbf16> to vector<10x24x128xbf16>
    %11 = vector.extract_strided_slice %10 {offsets = [0, 0, 0], sizes = [10, 16, 128], strides = [1, 1, 1]} : vector<10x24x128xbf16> to vector<10x16x128xbf16>
    %12 = vector.extract_strided_slice %10 {offsets = [0, 1, 0], sizes = [10, 16, 128], strides = [1, 1, 1]} : vector<10x24x128xbf16> to vector<10x16x128xbf16>
    %13 = vector.extract_strided_slice %10 {offsets = [0, 2, 0], sizes = [10, 16, 128], strides = [1, 1, 1]} : vector<10x24x128xbf16> to vector<10x16x128xbf16>
    %14 = tpu.concatenate %11, %12, %13 in 2 : vector<10x16x128xbf16>, vector<10x16x128xbf16>, vector<10x16x128xbf16> -> vector<10x16x384xbf16>
    %c0_4 = arith.constant 0 : index
    %c0_5 = arith.constant 0 : index
    %15 = vector.load %arg5[%c0_4, %c0_5] : memref<1x128xf32, #tpu.memory_space<vmem>>, vector<1x128xf32>
    %16 = vector.shape_cast %14 : vector<10x16x384xbf16> to vector<160x384xbf16>
    %17 = vector.extract_strided_slice %16 {offsets = [0, 0], sizes = [128, 384], strides = [1, 1]} : vector<160x384xbf16> to vector<128x384xbf16>
    %c0_6 = arith.constant 0 : index
    %c0_7 = arith.constant 0 : index
    %c0_8 = arith.constant 0 : index
    %18 = vector.load %arg4[%c0_6, %c0_7, %c0_8] : memref<3x384x128xbf16, #tpu.memory_space<vmem>>, vector<1x384x128xbf16>
    %19 = vector.shape_cast %18 : vector<1x384x128xbf16> to vector<384x128xbf16>
    %cst_9 = arith.constant dense<0.000000e+00> : vector<128x128xf32>
    %20 = tpu.matmul %17, %19, %cst_9 {dimension_numbers = #tpu.dot_dimension_numbers<[1], [0], [0], [1], [0, 0, 1, 1], [], []>} : vector<128x384xbf16>, vector<384x128xbf16>, vector<128x128xf32> -> vector<128x128xf32>
    %21 = vector.extract_strided_slice %16 {offsets = [16, 0], sizes = [128, 384], strides = [1, 1]} : vector<160x384xbf16> to vector<128x384xbf16>
    %c1 = arith.constant 1 : index
    %c0_10 = arith.constant 0 : index
    %c0_11 = arith.constant 0 : index
    %22 = vector.load %arg4[%c1, %c0_10, %c0_11] : memref<3x384x128xbf16, #tpu.memory_space<vmem>>, vector<1x384x128xbf16>
    %23 = vector.shape_cast %22 : vector<1x384x128xbf16> to vector<384x128xbf16>
    %cst_12 = arith.constant dense<0.000000e+00> : vector<128x128xf32>
    %24 = tpu.matmul %21, %23, %cst_12 {dimension_numbers = #tpu.dot_dimension_numbers<[1], [0], [0], [1], [0, 0, 1, 1], [], []>} : vector<128x384xbf16>, vector<384x128xbf16>, vector<128x128xf32> -> vector<128x128xf32>
    %25 = arith.addf %20, %24 : vector<128x128xf32>
    %26 = vector.extract_strided_slice %16 {offsets = [32, 0], sizes = [128, 384], strides = [1, 1]} : vector<160x384xbf16> to vector<128x384xbf16>
    %c2 = arith.constant 2 : index
    %c0_13 = arith.constant 0 : index
    %c0_14 = arith.constant 0 : index
    %27 = vector.load %arg4[%c2, %c0_13, %c0_14] : memref<3x384x128xbf16, #tpu.memory_space<vmem>>, vector<1x384x128xbf16>
    %28 = vector.shape_cast %27 : vector<1x384x128xbf16> to vector<384x128xbf16>
    %cst_15 = arith.constant dense<0.000000e+00> : vector<128x128xf32>
    %29 = tpu.matmul %26, %28, %cst_15 {dimension_numbers = #tpu.dot_dimension_numbers<[1], [0], [0], [1], [0, 0, 1, 1], [], []>} : vector<128x384xbf16>, vector<384x128xbf16>, vector<128x128xf32> -> vector<128x128xf32>
    %30 = arith.addf %25, %29 : vector<128x128xf32>
    %31 = vector.broadcast %15 : vector<1x128xf32> to vector<128x128xf32>
    %32 = arith.addf %30, %31 : vector<128x128xf32>
    %cst_16 = arith.constant 0.000000e+00 : f32
    %33 = vector.broadcast %cst_16 : f32 to vector<128x128xf32>
    %34 = arith.maximumf %32, %33 : vector<128x128xf32>
    %35 = arith.truncf %34 : vector<128x128xf32> to vector<128x128xbf16>
    %c0_17 = arith.constant 0 : index
    %c0_18 = arith.constant 0 : index
    %c0_19 = arith.constant 0 : index
    %36 = vector.load %arg6[%c0_17, %c0_18, %c0_19] : memref<1x128x128xbf16, #tpu.memory_space<vmem>>, vector<1x128x128xbf16>
    %37 = vector.shape_cast %36 : vector<1x128x128xbf16> to vector<128x128xbf16>
    %38 = vector.shape_cast %35 : vector<128x128xbf16> to vector<1x128x128xbf16>
    tpu.vector_store %arg6[%c0_17, %c0_18, %c0_19], %38 {strides = array<i32>} : memref<1x128x128xbf16, #tpu.memory_space<vmem>>, vector<1x128x128xbf16>,
    return
  }
  func.func @transform_0(%arg0: i32, %arg1: i32) -> (i32, i32, i32) {
    %c0_i32 = arith.constant 0 : i32
    %c0_i32_0 = arith.constant 0 : i32
    %c0_i32_1 = arith.constant 0 : i32
    return %arg0, %c0_i32, %c0_i32_0 : i32, i32, i32
  }
  func.func @transform_1(%arg0: i32, %arg1: i32) -> (i32, i32) {
    %c0_i32 = arith.constant 0 : i32
    %c0_i32_0 = arith.constant 0 : i32
    %c0_i32_1 = arith.constant 0 : i32
    return %c0_i32, %c0_i32_0 : i32, i32
  }
  func.func @transform_2(%arg0: i32, %arg1: i32) -> (i32, i32, i32) {
    %c0_i32 = arith.constant 0 : i32
    %c0_i32_0 = arith.constant 0 : i32
    %c0_i32_1 = arith.constant 0 : i32
    %c0_i32_2 = arith.constant 0 : i32
    return %c0_i32, %c0_i32_0, %c0_i32_1 : i32, i32, i32
  }
  func.func @transform_3(%arg0: i32, %arg1: i32) -> (i32, i32) {
    %c0_i32 = arith.constant 0 : i32
    %c0_i32_0 = arith.constant 0 : i32
    %c0_i32_1 = arith.constant 0 : i32
    return %c0_i32, %c0_i32_0 : i32, i32
  }
  func.func @transform_4(%arg0: i32, %arg1: i32) -> (i32, i32, i32) {
    %c0_i32 = arith.constant 0 : i32
    %c0_i32_0 = arith.constant 0 : i32
    return %arg0, %arg1, %c0_i32 : i32, i32, i32
  }
}

</mosaic_0001>

<llo_original>
// kernel: bottleneck_forward.3
$region0: #{bottleneck_forward.3}
  #allocation0 [shape = 'u32[]', space=smem, size = 0x4, offset = 0x4, fixed_abs, tag = 'smem constant byte address 0x4 - core index']
  #allocation1 [shape = 'u32[144,128]{1,0:T(1,128)}', space=vmem, size = 0x12000, scoped, tag = 'internal scratch']
  %s0 = inlined_call_operand.vmem [shape: bf16[512,128], index: 0, kind: input, shape index: {}]
  %s1 = inlined_call_operand.vmem [shape: bf16[128,128], index: 1, kind: input, shape index: {}]
  %s2 = inlined_call_operand.vmem [shape: f32[1,128], index: 2, kind: input, shape index: {}]
  %s3 = inlined_call_operand.vmem [shape: bf16[512,128], index: 3, kind: input, shape index: {}]
  %s4 = inlined_call_operand.vmem [shape: bf16[128,128], index: 4, kind: input, shape index: {}]
  %s5 = inlined_call_operand.vmem [shape: f32[512,128], index: 5, kind: output, shape index: {}]
  %s6 = sld [smem:[#allocation0]]
  $region53: #{bottleneck_forward.3} parent=0
    _
  %s8 = ssub.s32 1, %s6
  %s9 = scalar_select 0, %s8, %s6
  loop: start=0, step=1, limit=4
  $region2: #{bottleneck_forward.3} parent=0 // loop_pre_header
    _
  $region3: #{bottleneck_forward.3} parent=0 // loop_header
    %s11 = sphi 0, %s15
    %p12 = scmp.ge.s32.totalorder %s11, 4
    %s21 = sphi 0, %s23
    %s24 = sphi 0, %s21
    %s25 = sphi 0, %s24
    %s41 = sphi 0, %s25
    %s45 = sphi 0, %s45
    %s47 = sphi 0, %s45
    %s48 = sphi 0, %s47
    %s62 = sphi 0, %s48
    %s66 = sphi 0, %s66
    %s68 = sphi 0, %s66
    %s69 = sphi 0, %s68
    %s83 = sphi 0, %s69
    %s89 = sphi 0, %s91
    %s92 = sphi 0, %s89
    %s93 = sphi 0, %s92
    %s109 = sphi 0, %s93
    %s113 = sphi 0, %s113
    %s115 = sphi 0, %s113
    %s116 = sphi 0, %s115
    %s130 = sphi 0, %s116
    %s136 = sphi 0, %s138
    %s139 = sphi 0, %s136
    %s140 = sphi 0, %s139
    %s156 = sphi 0, %s140
  $region4: #{bottleneck_forward.3} parent=0 // loop_header_branch
    %14 = sbr.rel (%p12) target = $region8
  $region5: #{bottleneck_forward.3} parent=0 // loop_body
    %s16 = ssub.s32 %s11, 1
    %s17 = ssub.s32 %s11, 2
    %s18 = sadd.s32 %s11, 1
    %s19 = ssub.s32 %s11, %s18
    %p20 = scmp.eq.s32.totalorder %s19, 0
    %s22 = sadd.s32 %s21, 1
    %s23 = scalar_select %p20, %s21, %s22
    %p26 = pneg %p20
    %p27 = scmp.eq.s32.totalorder %s11, 1
    %p28 = por %p26, %p27
    %p29 = scmp.ne.s32.totalorder %s21, %s24
    %p30 = scmp.eq.s32.totalorder %s11, 0
    %p31 = por %p29, %p30
    %p32 = scmp.ne.s32.totalorder %s21, %s24
    %p33 = scmp.eq.s32.totalorder %s16, 1
    %p34 = por %p32, %p33
    %p35 = scmp.ne.s32.totalorder %s24, %s25
    %p36 = scmp.eq.s32.totalorder %s16, 0
    %p37 = por %p35, %p36
    %p38 = scmp.ne.s32.totalorder %s24, %s25
    %p39 = scmp.eq.s32.totalorder %s17, 1
    %p40 = por %p38, %p39
    %p42 = scmp.ne.s32.totalorder %s25, %s41
    %p43 = scmp.eq.s32.totalorder %s17, 0
    %p44 = por %p42, %p43
    %s46 = sadd.s32 %s45, 1
    %p49 = scmp.eq.s32.totalorder %s11, 1
    %p50 = scmp.ne.s32.totalorder %s45, %s47
    %p51 = scmp.eq.s32.totalorder %s11, 0
    %p52 = por %p50, %p51
    %p53 = scmp.ne.s32.totalorder %s45, %s47
    %p54 = scmp.eq.s32.totalorder %s16, 1
    %p55 = por %p53, %p54
    %p56 = scmp.ne.s32.totalorder %s47, %s48
    %p57 = scmp.eq.s32.totalorder %s16, 0
    %p58 = por %p56, %p57
    %p59 = scmp.ne.s32.totalorder %s47, %s48
    %p60 = scmp.eq.s32.totalorder %s17, 1
    %p61 = por %p59, %p60
    %p63 = scmp.ne.s32.totalorder %s48, %s62
    %p64 = scmp.eq.s32.totalorder %s17, 0
    %p65 = por %p63, %p64
    %s67 = sadd.s32 %s66, 1
    %p70 = scmp.eq.s32.totalorder %s11, 1
    %p71 = scmp.ne.s32.totalorder %s66, %s68
    %p72 = scmp.eq.s32.totalorder %s11, 0
    %p73 = por %p71, %p72
    %p74 = scmp.ne.s32.totalorder %s66, %s68
    %p75 = scmp.eq.s32.totalorder %s16, 1
    %p76 = por %p74, %p75
    %p77 = scmp.ne.s32.totalorder %s68, %s69
    %p78 = scmp.eq.s32.totalorder %s16, 0
    %p79 = por %p77, %p78
    %p80 = scmp.ne.s32.totalorder %s68, %s69
    %p81 = scmp.eq.s32.totalorder %s17, 1
    %p82 = por %p80, %p81
    %p84 = scmp.ne.s32.totalorder %s69, %s83
    %p85 = scmp.eq.s32.totalorder %s17, 0
    %p86 = por %p84, %p85
    %s87 = ssub.s32 %s11, %s18
    %p88 = scmp.eq.s32.totalorder %s87, 0
    %s90 = sadd.s32 %s89, 1
    %s91 = scalar_select %p88, %s89, %s90
    %p94 = pneg %p88
    %p95 = scmp.eq.s32.totalorder %s11, 1
    %p96 = por %p94, %p95
    %p97 = scmp.ne.s32.totalorder %s89, %s92
    %p98 = scmp.eq.s32.totalorder %s11, 0
    %p99 = por %p97, %p98
    %p100 = scmp.ne.s32.totalorder %s89, %s92
    %p101 = scmp.eq.s32.totalorder %s16, 1
    %p102 = por %p100, %p101
    %p103 = scmp.ne.s32.totalorder %s92, %s93
    %p104 = scmp.eq.s32.totalorder %s16, 0
    %p105 = por %p103, %p104
    %p106 = scmp.ne.s32.totalorder %s92, %s93
    %p107 = scmp.eq.s32.totalorder %s17, 1
    %p108 = por %p106, %p107
    %p110 = scmp.ne.s32.totalorder %s93, %s109
    %p111 = scmp.eq.s32.totalorder %s17, 0
    %p112 = por %p110, %p111
    %s114 = sadd.s32 %s113, 1
    %p117 = scmp.eq.s32.totalorder %s11, 1
    %p118 = scmp.ne.s32.totalorder %s113, %s115
    %p119 = scmp.eq.s32.totalorder %s11, 0
    %p120 = por %p118, %p119
    %p121 = scmp.ne.s32.totalorder %s113, %s115
    %p122 = scmp.eq.s32.totalorder %s16, 1
    %p123 = por %p121, %p122
    %p124 = scmp.ne.s32.totalorder %s115, %s116
    %p125 = scmp.eq.s32.totalorder %s16, 0
    %p126 = por %p124, %p125
    %p127 = scmp.ne.s32.totalorder %s115, %s116
    %p128 = scmp.eq.s32.totalorder %s17, 1
    %p129 = por %p127, %p128
    %p131 = scmp.ne.s32.totalorder %s116, %s130
    %p132 = scmp.eq.s32.totalorder %s17, 0
    %p133 = por %p131, %p132
    %s134 = ssub.s32 %s11, %s18
    %p135 = scmp.eq.s32.totalorder %s134, 0
    %s137 = sadd.s32 %s136, 1
    %s138 = scalar_select %p135, %s136, %s137
    %p141 = pneg %p135
    %p142 = scmp.eq.s32.totalorder %s11, 1
    %p143 = por %p141, %p142
    %p144 = scmp.ne.s32.totalorder %s136, %s139
    %p145 = scmp.eq.s32.totalorder %s11, 0
    %p146 = por %p144, %p145
    %p147 = scmp.ne.s32.totalorder %s136, %s139
    %p148 = scmp.eq.s32.totalorder %s16, 1
    %p149 = por %p147, %p148
    %p150 = scmp.ne.s32.totalorder %s139, %s140
    %p151 = scmp.eq.s32.totalorder %s16, 0
    %p152 = por %p150, %p151
    %p153 = scmp.ne.s32.totalorder %s139, %s140
    %p154 = scmp.eq.s32.totalorder %s17, 1
    %p155 = por %p153, %p154
    %p157 = scmp.ne.s32.totalorder %s140, %s156
    %p158 = scmp.eq.s32.totalorder %s17, 0
    %p159 = por %p157, %p158
    %p160 = scmp.le.s32.totalorder 1, %s11
    %p161 = scmp.lt.s32.totalorder %s11, 3
    %p162 = pnand %p160, %p161
    %p163 = pneg %p162
    // Predicated region
    $region9: #{bottleneck_forward.3} parent=5 // pred_check
      _
    $region10: #{bottleneck_forward.3} parent=5 // pred_check_branch
      %165 = sbr.rel (%p162) target = $region12
    $region11: #{bottleneck_forward.3} parent=5 // pred_region
      %s166 = ssub.s32 %s11, 1
      // Predicated region
      $region13: #{bottleneck_forward.3} parent=11 // pred_check
        %p167 = pneg %p58
      $region14: #{bottleneck_forward.3} parent=11 // pred_check_branch
        %169 = sbr.rel (%p167) target = $region16
      $region15: #{bottleneck_forward.3} parent=11 // pred_region
        _
      $region16: #{bottleneck_forward.3} parent=11 // pred_fallthru
        _
      // Predicated region
      $region17: #{bottleneck_forward.3} parent=11 // pred_check
        %p170 = pneg %p79
      $region18: #{bottleneck_forward.3} parent=11 // pred_check_branch
        %172 = sbr.rel (%p170) target = $region20
      $region19: #{bottleneck_forward.3} parent=11 // pred_region
        _
      $region20: #{bottleneck_forward.3} parent=11 // pred_fallthru
        _
      // Predicated region
      $region21: #{bottleneck_forward.3} parent=11 // pred_check
        %p173 = pneg %p126
      $region22: #{bottleneck_forward.3} parent=11 // pred_check_branch
        %175 = sbr.rel (%p173) target = $region24
      $region23: #{bottleneck_forward.3} parent=11 // pred_region
        _
      $region24: #{bottleneck_forward.3} parent=11 // pred_fallthru
        _
    $region12: #{bottleneck_forward.3} parent=5 // pred_fallthru
      _
    %p176 = scmp.lt.s32.totalorder %s11, 2
    // Predicated region
    $region25: #{bottleneck_forward.3} parent=5 // pred_check
      %p177 = pneg %p176
    $region26: #{bottleneck_forward.3} parent=5 // pred_check_branch
      %179 = sbr.rel (%p177) target = $region28
    $region27: #{bottleneck_forward.3} parent=5 // pred_region
      // Predicated region
      $region29: #{bottleneck_forward.3} parent=27 // pred_check
        %p180 = pneg %p31
      $region30: #{bottleneck_forward.3} parent=27 // pred_check_branch
        %182 = sbr.rel (%p180) target = $region32
      $region31: #{bottleneck_forward.3} parent=27 // pred_region
        %s183 = smul.u32 32, %s11
        %p184 = scmp.lt.s32.totalorder %s183, 63
        %s185 = scalar_select %p184, %s183, 63
        %s186 = smul.addr %s185, 4
        %s187 = scalar_lea.vmem %s0, %s186
        %s188 = smul.u32 32, %s11
      $region32: #{bottleneck_forward.3} parent=27 // pred_fallthru
        _
      // Predicated region
      $region33: #{bottleneck_forward.3} parent=27 // pred_check
        %p189 = pneg %p99
      $region34: #{bottleneck_forward.3} parent=27 // pred_check_branch
        %191 = sbr.rel (%p189) target = $region36
      $region35: #{bottleneck_forward.3} parent=27 // pred_region
        %s192 = smul.u32 32, %s11
        %p193 = scmp.lt.s32.totalorder %s192, 63
        %s194 = scalar_select %p193, %s192, 63
        %s195 = smul.addr %s194, 4
        %s196 = scalar_lea.vmem %s3, %s195
        %s197 = smul.u32 32, %s11
      $region36: #{bottleneck_forward.3} parent=27 // pred_fallthru
        _
    $region28: #{bottleneck_forward.3} parent=5 // pred_fallthru
      _
    %p198 = scmp.le.s32.totalorder 1, %s11
    %p199 = scmp.lt.s32.totalorder %s11, 3
    %p200 = pnand %p198, %p199
    %p201 = pneg %p200
    // Predicated region
    $region37: #{bottleneck_forward.3} parent=5 // pred_check
      _
    $region38: #{bottleneck_forward.3} parent=5 // pred_check_branch
      %203 = sbr.rel (%p200) target = $region40
    $region39: #{bottleneck_forward.3} parent=5 // pred_region
      %s204 = ssub.s32 %s11, 1
      %s205 = smul.u32 32, %s16
      %p206 = scmp.lt.s32.totalorder %s205, 63
      %s207 = scalar_select %p206, %s205, 63
      %s208 = smul.addr %s207, 4
      %s209 = scalar_lea.vmem %s0, %s208
      %p210 = pneg %p37
      %p211 = pneg %p34
      %p212 = pneg %p58
      %p213 = pneg %p55
      %p214 = pneg %p79
      %p215 = pneg %p76
      %s216 = smul.u32 32, %s16
      %p217 = scmp.lt.s32.totalorder %s216, 63
      %s218 = scalar_select %p217, %s216, 63
      %s219 = smul.addr %s218, 4
      %s220 = scalar_lea.vmem %s3, %s219
      %p221 = pneg %p105
      %p222 = pneg %p102
      %p223 = pneg %p126
      %p224 = pneg %p123
      %p225 = pneg %p152
      %p226 = pneg %p149
      %s227 = smul.u32 32, %s16
      %p228 = scmp.lt.s32.totalorder %s227, 63
      %s229 = scalar_select %p228, %s227, 63
      %s230 = smul.addr %s229, 8
      %s231 = scalar_lea.vmem %s5, %s230
      %s232 = smul.u32 32, %s16
      %p233 = scmp.lt.s32.totalorder %s232, 63
      %s234 = scalar_select %p233, %s232, 63
      %s235 = smul.addr %s234, 4
      %s236 = scalar_lea.vmem %s0, %s235
      %s237 = smul.u32 32, %s16
      %s238 = smul.u32 32, %s16
      %p239 = scmp.lt.s32.totalorder %s238, 63
      %s240 = scalar_select %p239, %s238, 63
      %s241 = smul.addr %s240, 4
      %s242 = scalar_lea.vmem %s3, %s241
      %s243 = smul.u32 32, %s16
      %s244 = smul.u32 32, %s16
      %p245 = scmp.lt.s32.totalorder %s244, 63
      %s246 = scalar_select %p245, %s244, 63
      %s247 = smul.addr %s246, 8
      %s248 = scalar_lea.vmem %s5, %s247
      %s249 = smul.u32 32, %s16
      %v251 = vld [vmem:[%s236] sm:$0xf]
      %v252 = vld [vmem:[%s236 + $0x4] sm:$0xf]
      %v253 = vld [vmem:[%s236 + $0x8] sm:$0xf]
      %v254 = vld [vmem:[%s236 + $0xc] sm:$0xf]
      %v255 = vld [vmem:[%s236 + $0x10] sm:$0xf]
      %v256 = vld [vmem:[%s236 + $0x14] sm:$0xf]
      %v257 = vld [vmem:[%s236 + $0x18] sm:$0xf]
      %v258 = vld [vmem:[%s236 + $0x1c] sm:$0xf]
      %v259 = vld [vmem:[%s236 + $0x20] sm:$0xf]
      %v260 = vld [vmem:[%s236 + $0x24] sm:$0xf]
      %v261 = vld [vmem:[%s236 + $0x28] sm:$0xf]
      %v262 = vld [vmem:[%s236 + $0x2c] sm:$0xf]
      %v263 = vld [vmem:[%s236 + $0x30] sm:$0xf]
      %v264 = vld [vmem:[%s236 + $0x34] sm:$0xf]
      %v265 = vld [vmem:[%s236 + $0x38] sm:$0xf]
      %v266 = vld [vmem:[%s236 + $0x3c] sm:$0xf]
      %v267 = vld [vmem:[%s236 + $0x40] sm:$0xf]
      %v268 = vld [vmem:[%s236 + $0x44] sm:$0xf]
      %v269 = vld [vmem:[%s236 + $0x48] sm:$0xf]
      %v270 = vld [vmem:[%s236 + $0x4c] sm:$0xf]
      %v271 = vld [vmem:[%s236 + $0x50] sm:$0xf]
      %v272 = vld [vmem:[%s236 + $0x54] sm:$0xf]
      %v273 = vld [vmem:[%s236 + $0x58] sm:$0xf]
      %v274 = vld [vmem:[%s236 + $0x5c] sm:$0xf]
      %v275 = vld [vmem:[%s236 + $0x60] sm:$0xf]
      %v276 = vld [vmem:[%s236 + $0x64] sm:$0xf]
      %v277 = vld [vmem:[%s236 + $0x68] sm:$0xf]
      %v278 = vld [vmem:[%s236 + $0x6c] sm:$0xf]
      %v279 = vld [vmem:[%s236 + $0x70] sm:$0xf]
      %v280 = vld [vmem:[%s236 + $0x74] sm:$0xf]
      %v281 = vld [vmem:[%s236 + $0x78] sm:$0xf]
      %v282 = vld [vmem:[%s236 + $0x7c] sm:$0xf]
      %v283 = vld [vmem:[%s1] sm:$0xf]
      %v284 = vld [vmem:[%s1 + $0x4] sm:$0xf]
      %v285 = vld [vmem:[%s1 + $0x8] sm:$0xf]
      %v286 = vld [vmem:[%s1 + $0xc] sm:$0xf]
      %v287 = vld [vmem:[%s1 + $0x10] sm:$0xf]
      %v288 = vld [vmem:[%s1 + $0x14] sm:$0xf]
      %v289 = vld [vmem:[%s1 + $0x18] sm:$0xf]
      %v290 = vld [vmem:[%s1 + $0x1c] sm:$0xf]
      %v291 = vld [vmem:[%s1 + $0x20] sm:$0xf]
      %v292 = vld [vmem:[%s1 + $0x24] sm:$0xf]
      %v293 = vld [vmem:[%s1 + $0x28] sm:$0xf]
      %v294 = vld [vmem:[%s1 + $0x2c] sm:$0xf]
      %v295 = vld [vmem:[%s1 + $0x30] sm:$0xf]
      %v296 = vld [vmem:[%s1 + $0x34] sm:$0xf]
      %v297 = vld [vmem:[%s1 + $0x38] sm:$0xf]
      %v298 = vld [vmem:[%s1 + $0x3c] sm:$0xf]
      %v299 = vld [vmem:[%s2] sm:$0x1]
      %v301 = vlaneseq
      %v302 = vshrl.u32 %v301, 7
      %v303 = vsub.s32 0, %v302
      %v304 = vrot.slane %v299, %v303
      %v338 = vunpack.c.l.b16 %v251
      %v339 = vunpack.c.l.b16 %v252
      %v340 = vunpack.c.l.b16 %v253
      %v341 = vunpack.c.l.b16 %v254
      %v342 = vunpack.c.l.b16 %v255
      %v343 = vunpack.c.l.b16 %v256
      %v344 = vunpack.c.l.b16 %v257
      %v345 = vunpack.c.l.b16 %v258
      %v346 = vunpack.c.l.b16 %v259
      %v347 = vunpack.c.l.b16 %v260
      %v348 = vunpack.c.l.b16 %v261
      %v349 = vunpack.c.l.b16 %v262
      %v350 = vunpack.c.l.b16 %v263
      %v351 = vunpack.c.l.b16 %v264
      %v352 = vunpack.c.l.b16 %v265
      %v353 = vunpack.c.l.b16 %v266
      %v354 = vunpack.c.l.b16 %v267
      %v355 = vunpack.c.l.b16 %v268
      %v356 = vunpack.c.l.b16 %v269
      %v357 = vunpack.c.l.b16 %v270
      %v358 = vunpack.c.l.b16 %v271
      %v359 = vunpack.c.l.b16 %v272
      %v360 = vunpack.c.l.b16 %v273
      %v361 = vunpack.c.l.b16 %v274
      %v362 = vunpack.c.l.b16 %v275
      %v363 = vunpack.c.l.b16 %v276
      %v364 = vunpack.c.l.b16 %v277
      %v365 = vunpack.c.l.b16 %v278
      %v366 = vunpack.c.l.b16 %v279
      %v367 = vunpack.c.l.b16 %v280
      %v368 = vunpack.c.l.b16 %v281
      %v369 = vunpack.c.l.b16 %v282
      %v370 = vpack.c.b16 %v339, %v338
      %v371 = vpack.c.b16 %v341, %v340
      %v372 = vpack.c.b16 %v343, %v342
      %v373 = vpack.c.b16 %v345, %v344
      %v374 = vpack.c.b16 %v347, %v346
      %v375 = vpack.c.b16 %v349, %v348
      %v376 = vpack.c.b16 %v351, %v350
      %v377 = vpack.c.b16 %v353, %v352
      %v378 = vpack.c.b16 %v355, %v354
      %v379 = vpack.c.b16 %v357, %v356
      %v380 = vpack.c.b16 %v359, %v358
      %v381 = vpack.c.b16 %v361, %v360
      %v382 = vpack.c.b16 %v363, %v362
      %v383 = vpack.c.b16 %v365, %v364
      %v384 = vpack.c.b16 %v367, %v366
      %v385 = vpack.c.b16 %v369, %v368
      %v418 = vunpack.c.l.b16 %v283
      %v419 = vunpack.c.l.b16 %v284
      %v420 = vunpack.c.l.b16 %v285
      %v421 = vunpack.c.l.b16 %v286
      %v422 = vunpack.c.l.b16 %v287
      %v423 = vunpack.c.l.b16 %v288
      %v424 = vunpack.c.l.b16 %v289
      %v425 = vunpack.c.l.b16 %v290
      %v426 = vunpack.c.l.b16 %v291
      %v427 = vunpack.c.l.b16 %v292
      %v428 = vunpack.c.l.b16 %v293
      %v429 = vunpack.c.l.b16 %v294
      %v430 = vunpack.c.l.b16 %v295
      %v431 = vunpack.c.l.b16 %v296
      %v432 = vunpack.c.l.b16 %v297
      %v433 = vunpack.c.l.b16 %v298
      %v434 = vpack.c.b16 %v419, %v418
      %v435 = vpack.c.b16 %v421, %v420
      %v436 = vpack.c.b16 %v423, %v422
      %v437 = vpack.c.b16 %v425, %v424
      %v438 = vpack.c.b16 %v427, %v426
      %v439 = vpack.c.b16 %v429, %v428
      %v440 = vpack.c.b16 %v431, %v430
      %v441 = vpack.c.b16 %v433, %v432
      %450 = vmatprep.subr.bf16.mxu0 0
      %451 = vmatpush1.bf16.msra.mxu0 %v434
      %452 = vmatprep.subr.bf16.mxu0 0
      %453 = vmatpush1.bf16.msra.mxu0 %v435
      %454 = vmatprep.subr.bf16.mxu0 0
      %455 = vmatpush1.bf16.msra.mxu0 %v436
      %456 = vmatprep.subr.bf16.mxu0 0
      %457 = vmatpush1.bf16.msra.mxu0 %v437
      %458 = vmatprep.subr.bf16.mxu0 0
      %459 = vmatpush1.bf16.msra.mxu0 %v438
      %460 = vmatprep.subr.bf16.mxu0 0
      %461 = vmatpush1.bf16.msra.mxu0 %v439
      %462 = vmatprep.subr.bf16.mxu0 0
      %463 = vmatpush1.bf16.msra.mxu0 %v440
      %464 = vmatprep.subr.bf16.mxu0 0
      %465 = vmatpush1.bf16.msra.mxu0 %v441
      %466 = vmatprep.subr.bf16.mxu0 0
      %467 = vmatpush1.bf16.msra.mxu0 0
      %468 = vmatprep.subr.bf16.mxu0 0
      %469 = vmatpush1.bf16.msra.mxu0 0
      %470 = vmatprep.subr.bf16.mxu0 0
      %471 = vmatpush1.bf16.msra.mxu0 0
      %472 = vmatprep.subr.bf16.mxu0 0
      %473 = vmatpush1.bf16.msra.mxu0 0
      %474 = vmatprep.subr.bf16.mxu0 0
      %475 = vmatpush1.bf16.msra.mxu0 0
      %476 = vmatprep.subr.bf16.mxu0 0
      %477 = vmatpush1.bf16.msra.mxu0 0
      %478 = vmatprep.subr.bf16.mxu0 0
      %479 = vmatpush1.bf16.msra.mxu0 0
      %480 = vmatprep.subr.bf16.mxu0 0
      %481 = vmatpush1.bf16.msra.mxu0 0
      %482 = vmatprep.mubr.bf16.mxu0 0
      %483 = vmatmul.mubr.bf16.gmra.mrb[0].mxu0 %v370
      %v484 = vpop.f32.mrb[0].mxu0
      %v485 = vadd.f32 %v304, %v484
      %v486 = vpop.f32.mrb[0].mxu0
      %v487 = vpop.f32.mrb[0].mxu0
      %v488 = vadd.f32 %v304, %v487
      %v489 = vpop.f32.mrb[0].mxu0
      %490 = vmatprep.mubr.bf16.mxu0 0
      %491 = vmatmul.mubr.bf16.gmra.mrb[0].mxu0 %v371
      %v492 = vpop.f32.mrb[0].mxu0
      %v493 = vadd.f32 %v304, %v492
      %v494 = vpop.f32.mrb[0].mxu0
      %v495 = vpop.f32.mrb[0].mxu0
      %v496 = vadd.f32 %v304, %v495
      %v497 = vpop.f32.mrb[0].mxu0
      %498 = vmatprep.mubr.bf16.mxu0 0
      %499 = vmatmul.mubr.bf16.gmra.mrb[0].mxu0 %v372
      %v500 = vpop.f32.mrb[0].mxu0
      %v501 = vadd.f32 %v304, %v500
      %v502 = vpop.f32.mrb[0].mxu0
      %v503 = vpop.f32.mrb[0].mxu0
      %v504 = vadd.f32 %v304, %v503
      %v505 = vpop.f32.mrb[0].mxu0
      %506 = vmatprep.mubr.bf16.mxu0 0
      %507 = vmatmul.mubr.bf16.gmra.mrb[0].mxu0 %v373
      %v508 = vpop.f32.mrb[0].mxu0
      %v509 = vadd.f32 %v304, %v508
      %v510 = vpop.f32.mrb[0].mxu0
      %v511 = vpop.f32.mrb[0].mxu0
      %v512 = vadd.f32 %v304, %v511
      %v513 = vpop.f32.mrb[0].mxu0
      %514 = vmatprep.mubr.bf16.mxu0 0
      %515 = vmatmul.mubr.bf16.gmra.mrb[0].mxu0 %v374
      %v516 = vpop.f32.mrb[0].mxu0
      %v517 = vadd.f32 %v304, %v516
      %v518 = vpop.f32.mrb[0].mxu0
      %v519 = vpop.f32.mrb[0].mxu0
      %v520 = vadd.f32 %v304, %v519
      %v521 = vpop.f32.mrb[0].mxu0
      %522 = vmatprep.mubr.bf16.mxu0 0
      %523 = vmatmul.mubr.bf16.gmra.mrb[0].mxu0 %v375
      %v524 = vpop.f32.mrb[0].mxu0
      %v525 = vadd.f32 %v304, %v524
      %v526 = vpop.f32.mrb[0].mxu0
      %v527 = vpop.f32.mrb[0].mxu0
      %v528 = vadd.f32 %v304, %v527
      %v529 = vpop.f32.mrb[0].mxu0
      %530 = vmatprep.mubr.bf16.mxu0 0
      %531 = vmatmul.mubr.bf16.gmra.mrb[0].mxu0 %v376
      %v532 = vpop.f32.mrb[0].mxu0
      %v533 = vadd.f32 %v304, %v532
      %v534 = vpop.f32.mrb[0].mxu0
      %v535 = vpop.f32.mrb[0].mxu0
      %v536 = vadd.f32 %v304, %v535
      %v537 = vpop.f32.mrb[0].mxu0
      %538 = vmatprep.mubr.bf16.mxu0 0
      %539 = vmatmul.mubr.bf16.gmra.mrb[0].mxu0 %v377
      %v540 = vpop.f32.mrb[0].mxu0
      %v541 = vadd.f32 %v304, %v540
      %v542 = vpop.f32.mrb[0].mxu0
      %v543 = vpop.f32.mrb[0].mxu0
      %v544 = vadd.f32 %v304, %v543
      %v545 = vpop.f32.mrb[0].mxu0
      %546 = vmatprep.mubr.bf16.mxu0 0
      %547 = vmatmul.mubr.bf16.gmra.mrb[0].mxu0 %v378
      %v548 = vpop.f32.mrb[0].mxu0
      %v549 = vadd.f32 %v304, %v548
      %v550 = vpop.f32.mrb[0].mxu0
      %v551 = vpop.f32.mrb[0].mxu0
      %v552 = vadd.f32 %v304, %v551
      %v553 = vpop.f32.mrb[0].mxu0
      %554 = vmatprep.mubr.bf16.mxu0 0
      %555 = vmatmul.mubr.bf16.gmra.mrb[0].mxu0 %v379
      %v556 = vpop.f32.mrb[0].mxu0
      %v557 = vadd.f32 %v304, %v556
      %v558 = vpop.f32.mrb[0].mxu0
      %v559 = vpop.f32.mrb[0].mxu0
      %v560 = vadd.f32 %v304, %v559
      %v561 = vpop.f32.mrb[0].mxu0
      %562 = vmatprep.mubr.bf16.mxu0 0
      %563 = vmatmul.mubr.bf16.gmra.mrb[0].mxu0 %v380
      %v564 = vpop.f32.mrb[0].mxu0
      %v565 = vadd.f32 %v304, %v564
      %v566 = vpop.f32.mrb[0].mxu0
      %v567 = vpop.f32.mrb[0].mxu0
      %v568 = vadd.f32 %v304, %v567
      %v569 = vpop.f32.mrb[0].mxu0
      %570 = vmatprep.mubr.bf16.mxu0 0
      %571 = vmatmul.mubr.bf16.gmra.mrb[0].mxu0 %v381
      %v572 = vpop.f32.mrb[0].mxu0
      %v573 = vadd.f32 %v304, %v572
      %v574 = vpop.f32.mrb[0].mxu0
      %v575 = vpop.f32.mrb[0].mxu0
      %v576 = vadd.f32 %v304, %v575
      %v577 = vpop.f32.mrb[0].mxu0
      %578 = vmatprep.mubr.bf16.mxu0 0
      %579 = vmatmul.mubr.bf16.gmra.mrb[0].mxu0 %v382
      %v580 = vpop.f32.mrb[0].mxu0
      %v581 = vadd.f32 %v304, %v580
      %v582 = vpop.f32.mrb[0].mxu0
      %v583 = vpop.f32.mrb[0].mxu0
      %v584 = vadd.f32 %v304, %v583
      %v585 = vpop.f32.mrb[0].mxu0
      %586 = vmatprep.mubr.bf16.mxu0 0
      %587 = vmatmul.mubr.bf16.gmra.mrb[0].mxu0 %v383
      %v588 = vpop.f32.mrb[0].mxu0
      %v589 = vadd.f32 %v304, %v588
      %v590 = vpop.f32.mrb[0].mxu0
      %v591 = vpop.f32.mrb[0].mxu0
      %v592 = vadd.f32 %v304, %v591
      %v593 = vpop.f32.mrb[0].mxu0
      %594 = vmatprep.mubr.bf16.mxu0 0
      %595 = vmatmul.mubr.bf16.gmra.mrb[0].mxu0 %v384
      %v596 = vpop.f32.mrb[0].mxu0
      %v597 = vadd.f32 %v304, %v596
      %v598 = vpop.f32.mrb[0].mxu0
      %v599 = vpop.f32.mrb[0].mxu0
      %v600 = vadd.f32 %v304, %v599
      %v601 = vpop.f32.mrb[0].mxu0
      %602 = vmatprep.mubr.bf16.mxu0 0
      %603 = vmatmul.mubr.bf16.gmra.mrb[0].mxu0 %v385
      %v604 = vpop.f32.mrb[0].mxu0
      %v605 = vadd.f32 %v304, %v604
      %v606 = vpop.f32.mrb[0].mxu0
      %v607 = vpop.f32.mrb[0].mxu0
      %v608 = vadd.f32 %v304, %v607
      %v609 = vpop.f32.mrb[0].mxu0
      %610 = vdwg.mxu0
      %v611 = vmax.f32 %v485, 0.0
      %v612 = vmax.f32 %v488, 0.0
      %v613 = vmax.f32 %v493, 0.0
      %v614 = vmax.f32 %v496, 0.0
      %v615 = vmax.f32 %v501, 0.0
      %v616 = vmax.f32 %v504, 0.0
      %v617 = vmax.f32 %v509, 0.0
      %v618 = vmax.f32 %v512, 0.0
      %v619 = vmax.f32 %v517, 0.0
      %v620 = vmax.f32 %v520, 0.0
      %v621 = vmax.f32 %v525, 0.0
      %v622 = vmax.f32 %v528, 0.0
      %v623 = vmax.f32 %v533, 0.0
      %v624 = vmax.f32 %v536, 0.0
      %v625 = vmax.f32 %v541, 0.0
      %v626 = vmax.f32 %v544, 0.0
      %v627 = vmax.f32 %v549, 0.0
      %v628 = vmax.f32 %v552, 0.0
      %v629 = vmax.f32 %v557, 0.0
      %v630 = vmax.f32 %v560, 0.0
      %v631 = vmax.f32 %v565, 0.0
      %v632 = vmax.f32 %v568, 0.0
      %v633 = vmax.f32 %v573, 0.0
      %v634 = vmax.f32 %v576, 0.0
      %v635 = vmax.f32 %v581, 0.0
      %v636 = vmax.f32 %v584, 0.0
      %v637 = vmax.f32 %v589, 0.0
      %v638 = vmax.f32 %v592, 0.0
      %v639 = vmax.f32 %v597, 0.0
      %v640 = vmax.f32 %v600, 0.0
      %v641 = vmax.f32 %v605, 0.0
      %v642 = vmax.f32 %v608, 0.0
      %v643 = vld [vmem:[%s242] sm:$0xf]
      %v644 = vld [vmem:[%s242 + $0x4] sm:$0xf]
      %v645 = vld [vmem:[%s242 + $0x8] sm:$0xf]
      %v646 = vld [vmem:[%s242 + $0xc] sm:$0xf]
      %v647 = vld [vmem:[%s242 + $0x10] sm:$0xf]
      %v648 = vld [vmem:[%s242 + $0x14] sm:$0xf]
      %v649 = vld [vmem:[%s242 + $0x18] sm:$0xf]
      %v650 = vld [vmem:[%s242 + $0x1c] sm:$0xf]
      %v651 = vld [vmem:[%s242 + $0x20] sm:$0xf]
      %v652 = vld [vmem:[%s242 + $0x24] sm:$0xf]
      %v653 = vld [vmem:[%s242 + $0x28] sm:$0xf]
      %v654 = vld [vmem:[%s242 + $0x2c] sm:$0xf]
      %v655 = vld [vmem:[%s242 + $0x30] sm:$0xf]
      %v656 = vld [vmem:[%s242 + $0x34] sm:$0xf]
      %v657 = vld [vmem:[%s242 + $0x38] sm:$0xf]
      %v658 = vld [vmem:[%s242 + $0x3c] sm:$0xf]
      %v659 = vld [vmem:[%s242 + $0x40] sm:$0xf]
      %v660 = vld [vmem:[%s242 + $0x44] sm:$0xf]
      %v661 = vld [vmem:[%s242 + $0x48] sm:$0xf]
      %v662 = vld [vmem:[%s242 + $0x4c] sm:$0xf]
      %v663 = vld [vmem:[%s242 + $0x50] sm:$0xf]
      %v664 = vld [vmem:[%s242 + $0x54] sm:$0xf]
      %v665 = vld [vmem:[%s242 + $0x58] sm:$0xf]
      %v666 = vld [vmem:[%s242 + $0x5c] sm:$0xf]
      %v667 = vld [vmem:[%s242 + $0x60] sm:$0xf]
      %v668 = vld [vmem:[%s242 + $0x64] sm:$0xf]
      %v669 = vld [vmem:[%s242 + $0x68] sm:$0xf]
      %v670 = vld [vmem:[%s242 + $0x6c] sm:$0xf]
      %v671 = vld [vmem:[%s242 + $0x70] sm:$0xf]
      %v672 = vld [vmem:[%s242 + $0x74] sm:$0xf]
      %v673 = vld [vmem:[%s242 + $0x78] sm:$0xf]
      %v674 = vld [vmem:[%s242 + $0x7c] sm:$0xf]
      %v675 = vld [vmem:[%s4] sm:$0xf]
      %v676 = vld [vmem:[%s4 + $0x4] sm:$0xf]
      %v677 = vld [vmem:[%s4 + $0x8] sm:$0xf]
      %v678 = vld [vmem:[%s4 + $0xc] sm:$0xf]
      %v679 = vld [vmem:[%s4 + $0x10] sm:$0xf]
      %v680 = vld [vmem:[%s4 + $0x14] sm:$0xf]
      %v681 = vld [vmem:[%s4 + $0x18] sm:$0xf]
      %v682 = vld [vmem:[%s4 + $0x1c] sm:$0xf]
      %v683 = vld [vmem:[%s4 + $0x20] sm:$0xf]
      %v684 = vld [vmem:[%s4 + $0x24] sm:$0xf]
      %v685 = vld [vmem:[%s4 + $0x28] sm:$0xf]
      %v686 = vld [vmem:[%s4 + $0x2c] sm:$0xf]
      %v687 = vld [vmem:[%s4 + $0x30] sm:$0xf]
      %v688 = vld [vmem:[%s4 + $0x34] sm:$0xf]
      %v689 = vld [vmem:[%s4 + $0x38] sm:$0xf]
      %v690 = vld [vmem:[%s4 + $0x3c] sm:$0xf]
      %v723 = vunpack.c.l.b16 %v643
      %v724 = vunpack.c.l.b16 %v644
      %v725 = vunpack.c.l.b16 %v645
      %v726 = vunpack.c.l.b16 %v646
      %v727 = vunpack.c.l.b16 %v647
      %v728 = vunpack.c.l.b16 %v648
      %v729 = vunpack.c.l.b16 %v649
      %v730 = vunpack.c.l.b16 %v650
      %v731 = vunpack.c.l.b16 %v651
      %v732 = vunpack.c.l.b16 %v652
      %v733 = vunpack.c.l.b16 %v653
      %v734 = vunpack.c.l.b16 %v654
      %v735 = vunpack.c.l.b16 %v655
      %v736 = vunpack.c.l.b16 %v656
      %v737 = vunpack.c.l.b16 %v657
      %v738 = vunpack.c.l.b16 %v658
      %v739 = vunpack.c.l.b16 %v659
      %v740 = vunpack.c.l.b16 %v660
      %v741 = vunpack.c.l.b16 %v661
      %v742 = vunpack.c.l.b16 %v662
      %v743 = vunpack.c.l.b16 %v663
      %v744 = vunpack.c.l.b16 %v664
      %v745 = vunpack.c.l.b16 %v665
      %v746 = vunpack.c.l.b16 %v666
      %v747 = vunpack.c.l.b16 %v667
      %v748 = vunpack.c.l.b16 %v668
      %v749 = vunpack.c.l.b16 %v669
      %v750 = vunpack.c.l.b16 %v670
      %v751 = vunpack.c.l.b16 %v671
      %v752 = vunpack.c.l.b16 %v672
      %v753 = vunpack.c.l.b16 %v673
      %v754 = vunpack.c.l.b16 %v674
      %v755 = vpack.c.b16 %v724, %v723
      %v756 = vpack.c.b16 %v726, %v725
      %v757 = vpack.c.b16 %v728, %v727
      %v758 = vpack.c.b16 %v730, %v729
      %v759 = vpack.c.b16 %v732, %v731
      %v760 = vpack.c.b16 %v734, %v733
      %v761 = vpack.c.b16 %v736, %v735
      %v762 = vpack.c.b16 %v738, %v737
      %v763 = vpack.c.b16 %v740, %v739
      %v764 = vpack.c.b16 %v742, %v741
      %v765 = vpack.c.b16 %v744, %v743
      %v766 = vpack.c.b16 %v746, %v745
      %v767 = vpack.c.b16 %v748, %v747
      %v768 = vpack.c.b16 %v750, %v749
      %v769 = vpack.c.b16 %v752, %v751
      %v770 = vpack.c.b16 %v754, %v753
      %v803 = vunpack.c.l.b16 %v675
      %v804 = vunpack.c.l.b16 %v676
      %v805 = vunpack.c.l.b16 %v677
      %v806 = vunpack.c.l.b16 %v678
      %v807 = vunpack.c.l.b16 %v679
      %v808 = vunpack.c.l.b16 %v680
      %v809 = vunpack.c.l.b16 %v681
      %v810 = vunpack.c.l.b16 %v682
      %v811 = vunpack.c.l.b16 %v683
      %v812 = vunpack.c.l.b16 %v684
      %v813 = vunpack.c.l.b16 %v685
      %v814 = vunpack.c.l.b16 %v686
      %v815 = vunpack.c.l.b16 %v687
      %v816 = vunpack.c.l.b16 %v688
      %v817 = vunpack.c.l.b16 %v689
      %v818 = vunpack.c.l.b16 %v690
      %v819 = vpack.c.b16 %v804, %v803
      %v820 = vpack.c.b16 %v806, %v805
      %v821 = vpack.c.b16 %v808, %v807
      %v822 = vpack.c.b16 %v810, %v809
      %v823 = vpack.c.b16 %v812, %v811
      %v824 = vpack.c.b16 %v814, %v813
      %v825 = vpack.c.b16 %v816, %v815
      %v826 = vpack.c.b16 %v818, %v817
      %835 = vmatprep.subr.bf16.mxu0 0
      %836 = vmatpush1.bf16.msra.mxu0 %v819
      %837 = vmatprep.subr.bf16.mxu0 0
      %838 = vmatpush1.bf16.msra.mxu0 %v820
      %839 = vmatprep.subr.bf16.mxu0 0
      %840 = vmatpush1.bf16.msra.mxu0 %v821
      %841 = vmatprep.subr.bf16.mxu0 0
      %842 = vmatpush1.bf16.msra.mxu0 %v822
      %843 = vmatprep.subr.bf16.mxu0 0
      %844 = vmatpush1.bf16.msra.mxu0 %v823
      %845 = vmatprep.subr.bf16.mxu0 0
      %846 = vmatpush1.bf16.msra.mxu0 %v824
      %847 = vmatprep.subr.bf16.mxu0 0
      %848 = vmatpush1.bf16.msra.mxu0 %v825
      %849 = vmatprep.subr.bf16.mxu0 0
      %850 = vmatpush1.bf16.msra.mxu0 %v826
      %851 = vmatprep.subr.bf16.mxu0 0
      %852 = vmatpush1.bf16.msra.mxu0 0
      %853 = vmatprep.subr.bf16.mxu0 0
      %854 = vmatpush1.bf16.msra.mxu0 0
      %855 = vmatprep.subr.bf16.mxu0 0
      %856 = vmatpush1.bf16.msra.mxu0 0
      %857 = vmatprep.subr.bf16.mxu0 0
      %858 = vmatpush1.bf16.msra.mxu0 0
      %859 = vmatprep.subr.bf16.mxu0 0
      %860 = vmatpush1.bf16.msra.mxu0 0
      %861 = vmatprep.subr.bf16.mxu0 0
      %862 = vmatpush1.bf16.msra.mxu0 0
      %863 = vmatprep.subr.bf16.mxu0 0
      %864 = vmatpush1.bf16.msra.mxu0 0
      %865 = vmatprep.subr.bf16.mxu0 0
      %866 = vmatpush1.bf16.msra.mxu0 0
      %867 = vmatprep.mubr.bf16.mxu0 0
      %868 = vmatmul.mubr.bf16.gmra.mrb[0].mxu0 %v755
      %v869 = vpop.f32.mrb[0].mxu0
      %v870 = vadd.f32 0.0, %v869
      %v871 = vpop.f32.mrb[0].mxu0
      %v872 = vpop.f32.mrb[0].mxu0
      %v873 = vadd.f32 0.0, %v872
      %v874 = vpop.f32.mrb[0].mxu0
      %875 = vmatprep.mubr.bf16.mxu0 0
      %876 = vmatmul.mubr.bf16.gmra.mrb[0].mxu0 %v756
      %v877 = vpop.f32.mrb[0].mxu0
      %v878 = vadd.f32 0.0, %v877
      %v879 = vpop.f32.mrb[0].mxu0
      %v880 = vpop.f32.mrb[0].mxu0
      %v881 = vadd.f32 0.0, %v880
      %v882 = vpop.f32.mrb[0].mxu0
      %883 = vmatprep.mubr.bf16.mxu0 0
      %884 = vmatmul.mubr.bf16.gmra.mrb[0].mxu0 %v757
      %v885 = vpop.f32.mrb[0].mxu0
      %v886 = vadd.f32 0.0, %v885
      %v887 = vpop.f32.mrb[0].mxu0
      %v888 = vpop.f32.mrb[0].mxu0
      %v889 = vadd.f32 0.0, %v888
      %v890 = vpop.f32.mrb[0].mxu0
      %891 = vmatprep.mubr.bf16.mxu0 0
      %892 = vmatmul.mubr.bf16.gmra.mrb[0].mxu0 %v758
      %v893 = vpop.f32.mrb[0].mxu0
      %v894 = vadd.f32 0.0, %v893
      %v895 = vpop.f32.mrb[0].mxu0
      %v896 = vpop.f32.mrb[0].mxu0
      %v897 = vadd.f32 0.0, %v896
      %v898 = vpop.f32.mrb[0].mxu0
      %899 = vmatprep.mubr.bf16.mxu0 0
      %900 = vmatmul.mubr.bf16.gmra.mrb[0].mxu0 %v759
      %v901 = vpop.f32.mrb[0].mxu0
      %v902 = vadd.f32 0.0, %v901
      %v903 = vpop.f32.mrb[0].mxu0
      %v904 = vpop.f32.mrb[0].mxu0
      %v905 = vadd.f32 0.0, %v904
      %v906 = vpop.f32.mrb[0].mxu0
      %907 = vmatprep.mubr.bf16.mxu0 0
      %908 = vmatmul.mubr.bf16.gmra.mrb[0].mxu0 %v760
      %v909 = vpop.f32.mrb[0].mxu0
      %v910 = vadd.f32 0.0, %v909
      %v911 = vpop.f32.mrb[0].mxu0
      %v912 = vpop.f32.mrb[0].mxu0
      %v913 = vadd.f32 0.0, %v912
      %v914 = vpop.f32.mrb[0].mxu0
      %915 = vmatprep.mubr.bf16.mxu0 0
      %916 = vmatmul.mubr.bf16.gmra.mrb[0].mxu0 %v761
      %v917 = vpop.f32.mrb[0].mxu0
      %v918 = vadd.f32 0.0, %v917
      %v919 = vpop.f32.mrb[0].mxu0
      %v920 = vpop.f32.mrb[0].mxu0
      %v921 = vadd.f32 0.0, %v920
      %v922 = vpop.f32.mrb[0].mxu0
      %923 = vmatprep.mubr.bf16.mxu0 0
      %924 = vmatmul.mubr.bf16.gmra.mrb[0].mxu0 %v762
      %v925 = vpop.f32.mrb[0].mxu0
      %v926 = vadd.f32 0.0, %v925
      %v927 = vpop.f32.mrb[0].mxu0
      %v928 = vpop.f32.mrb[0].mxu0
      %v929 = vadd.f32 0.0, %v928
      %v930 = vpop.f32.mrb[0].mxu0
      %931 = vmatprep.mubr.bf16.mxu0 0
      %932 = vmatmul.mubr.bf16.gmra.mrb[0].mxu0 %v763
      %v933 = vpop.f32.mrb[0].mxu0
      %v934 = vadd.f32 0.0, %v933
      %v935 = vpop.f32.mrb[0].mxu0
      %v936 = vpop.f32.mrb[0].mxu0
      %v937 = vadd.f32 0.0, %v936
      %v938 = vpop.f32.mrb[0].mxu0
      %939 = vmatprep.mubr.bf16.mxu0 0
      %940 = vmatmul.mubr.bf16.gmra.mrb[0].mxu0 %v764
      %v941 = vpop.f32.mrb[0].mxu0
      %v942 = vadd.f32 0.0, %v941
      %v943 = vpop.f32.mrb[0].mxu0
      %v944 = vpop.f32.mrb[0].mxu0
      %v945 = vadd.f32 0.0, %v944
      %v946 = vpop.f32.mrb[0].mxu0
      %947 = vmatprep.mubr.bf16.mxu0 0
      %948 = vmatmul.mubr.bf16.gmra.mrb[0].mxu0 %v765
      %v949 = vpop.f32.mrb[0].mxu0
      %v950 = vadd.f32 0.0, %v949
      %v951 = vpop.f32.mrb[0].mxu0
      %v952 = vpop.f32.mrb[0].mxu0
      %v953 = vadd.f32 0.0, %v952
      %v954 = vpop.f32.mrb[0].mxu0
      %955 = vmatprep.mubr.bf16.mxu0 0
      %956 = vmatmul.mubr.bf16.gmra.mrb[0].mxu0 %v766
      %v957 = vpop.f32.mrb[0].mxu0
      %v958 = vadd.f32 0.0, %v957
      %v959 = vpop.f32.mrb[0].mxu0
      %v960 = vpop.f32.mrb[0].mxu0
      %v961 = vadd.f32 0.0, %v960
      %v962 = vpop.f32.mrb[0].mxu0
      %963 = vmatprep.mubr.bf16.mxu0 0
      %964 = vmatmul.mubr.bf16.gmra.mrb[0].mxu0 %v767
      %v965 = vpop.f32.mrb[0].mxu0
      %v966 = vadd.f32 0.0, %v965
      %v967 = vpop.f32.mrb[0].mxu0
      %v968 = vpop.f32.mrb[0].mxu0
      %v969 = vadd.f32 0.0, %v968
      %v970 = vpop.f32.mrb[0].mxu0
      %971 = vmatprep.mubr.bf16.mxu0 0
      %972 = vmatmul.mubr.bf16.gmra.mrb[0].mxu0 %v768
      %v973 = vpop.f32.mrb[0].mxu0
      %v974 = vadd.f32 0.0, %v973
      %v975 = vpop.f32.mrb[0].mxu0
      %v976 = vpop.f32.mrb[0].mxu0
      %v977 = vadd.f32 0.0, %v976
      %v978 = vpop.f32.mrb[0].mxu0
      %979 = vmatprep.mubr.bf16.mxu0 0
      %980 = vmatmul.mubr.bf16.gmra.mrb[0].mxu0 %v769
      %v981 = vpop.f32.mrb[0].mxu0
      %v982 = vadd.f32 0.0, %v981
      %v983 = vpop.f32.mrb[0].mxu0
      %v984 = vpop.f32.mrb[0].mxu0
      %v985 = vadd.f32 0.0, %v984
      %v986 = vpop.f32.mrb[0].mxu0
      %987 = vmatprep.mubr.bf16.mxu0 0
      %988 = vmatmul.mubr.bf16.gmra.mrb[0].mxu0 %v770
      %v989 = vpop.f32.mrb[0].mxu0
      %v990 = vadd.f32 0.0, %v989
      %v991 = vpop.f32.mrb[0].mxu0
      %v992 = vpop.f32.mrb[0].mxu0
      %v993 = vadd.f32 0.0, %v992
      %v994 = vpop.f32.mrb[0].mxu0
      %995 = vdwg.mxu0
      %v996 = vadd.f32 %v611, %v870
      %v997 = vadd.f32 %v612, %v873
      %v998 = vadd.f32 %v613, %v878
      %v999 = vadd.f32 %v614, %v881
      %v1000 = vadd.f32 %v615, %v886
      %v1001 = vadd.f32 %v616, %v889
      %v1002 = vadd.f32 %v617, %v894
      %v1003 = vadd.f32 %v618, %v897
      %v1004 = vadd.f32 %v619, %v902
      %v1005 = vadd.f32 %v620, %v905
      %v1006 = vadd.f32 %v621, %v910
      %v1007 = vadd.f32 %v622, %v913
      %v1008 = vadd.f32 %v623, %v918
      %v1009 = vadd.f32 %v624, %v921
      %v1010 = vadd.f32 %v625, %v926
      %v1011 = vadd.f32 %v626, %v929
      %v1012 = vadd.f32 %v627, %v934
      %v1013 = vadd.f32 %v628, %v937
      %v1014 = vadd.f32 %v629, %v942
      %v1015 = vadd.f32 %v630, %v945
      %v1016 = vadd.f32 %v631, %v950
      %v1017 = vadd.f32 %v632, %v953
      %v1018 = vadd.f32 %v633, %v958
      %v1019 = vadd.f32 %v634, %v961
      %v1020 = vadd.f32 %v635, %v966
      %v1021 = vadd.f32 %v636, %v969
      %v1022 = vadd.f32 %v637, %v974
      %v1023 = vadd.f32 %v638, %v977
      %v1024 = vadd.f32 %v639, %v982
      %v1025 = vadd.f32 %v640, %v985
      %v1026 = vadd.f32 %v641, %v990
      %v1027 = vadd.f32 %v642, %v993
      %v1028 = vmax.f32 %v996, 0.0
      %v1029 = vmax.f32 %v997, 0.0
      %v1030 = vmax.f32 %v998, 0.0
      %v1031 = vmax.f32 %v999, 0.0
      %v1032 = vmax.f32 %v1000, 0.0
      %v1033 = vmax.f32 %v1001, 0.0
      %v1034 = vmax.f32 %v1002, 0.0
      %v1035 = vmax.f32 %v1003, 0.0
      %v1036 = vmax.f32 %v1004, 0.0
      %v1037 = vmax.f32 %v1005, 0.0
      %v1038 = vmax.f32 %v1006, 0.0
      %v1039 = vmax.f32 %v1007, 0.0
      %v1040 = vmax.f32 %v1008, 0.0
      %v1041 = vmax.f32 %v1009, 0.0
      %v1042 = vmax.f32 %v1010, 0.0
      %v1043 = vmax.f32 %v1011, 0.0
      %v1044 = vmax.f32 %v1012, 0.0
      %v1045 = vmax.f32 %v1013, 0.0
      %v1046 = vmax.f32 %v1014, 0.0
      %v1047 = vmax.f32 %v1015, 0.0
      %v1048 = vmax.f32 %v1016, 0.0
      %v1049 = vmax.f32 %v1017, 0.0
      %v1050 = vmax.f32 %v1018, 0.0
      %v1051 = vmax.f32 %v1019, 0.0
      %v1052 = vmax.f32 %v1020, 0.0
      %v1053 = vmax.f32 %v1021, 0.0
      %v1054 = vmax.f32 %v1022, 0.0
      %v1055 = vmax.f32 %v1023, 0.0
      %v1056 = vmax.f32 %v1024, 0.0
      %v1057 = vmax.f32 %v1025, 0.0
      %v1058 = vmax.f32 %v1026, 0.0
      %v1059 = vmax.f32 %v1027, 0.0
      %1060 = vst [vmem:[%s248] sm:$0xff] %v1028
      %1061 = vst [vmem:[%s248 + $0x8] sm:$0xff] %v1029
      %1062 = vst [vmem:[%s248 + $0x10] sm:$0xff] %v1030
      %1063 = vst [vmem:[%s248 + $0x18] sm:$0xff] %v1031
      %1064 = vst [vmem:[%s248 + $0x20] sm:$0xff] %v1032
      %1065 = vst [vmem:[%s248 + $0x28] sm:$0xff] %v1033
      %1066 = vst [vmem:[%s248 + $0x30] sm:$0xff] %v1034
      %1067 = vst [vmem:[%s248 + $0x38] sm:$0xff] %v1035
      %1068 = vst [vmem:[%s248 + $0x40] sm:$0xff] %v1036
      %1069 = vst [vmem:[%s248 + $0x48] sm:$0xff] %v1037
      %1070 = vst [vmem:[%s248 + $0x50] sm:$0xff] %v1038
      %1071 = vst [vmem:[%s248 + $0x58] sm:$0xff] %v1039
      %1072 = vst [vmem:[%s248 + $0x60] sm:$0xff] %v1040
      %1073 = vst [vmem:[%s248 + $0x68] sm:$0xff] %v1041
      %1074 = vst [vmem:[%s248 + $0x70] sm:$0xff] %v1042
      %1075 = vst [vmem:[%s248 + $0x78] sm:$0xff] %v1043
      %1076 = vst [vmem:[%s248 + $0x80] sm:$0xff] %v1044
      %1077 = vst [vmem:[%s248 + $0x88] sm:$0xff] %v1045
      %1078 = vst [vmem:[%s248 + $0x90] sm:$0xff] %v1046
      %1079 = vst [vmem:[%s248 + $0x98] sm:$0xff] %v1047
      %1080 = vst [vmem:[%s248 + $0xa0] sm:$0xff] %v1048
      %1081 = vst [vmem:[%s248 + $0xa8] sm:$0xff] %v1049
      %1082 = vst [vmem:[%s248 + $0xb0] sm:$0xff] %v1050
      %1083 = vst [vmem:[%s248 + $0xb8] sm:$0xff] %v1051
      %1084 = vst [vmem:[%s248 + $0xc0] sm:$0xff] %v1052
      %1085 = vst [vmem:[%s248 + $0xc8] sm:$0xff] %v1053
      %1086 = vst [vmem:[%s248 + $0xd0] sm:$0xff] %v1054
      %1087 = vst [vmem:[%s248 + $0xd8] sm:$0xff] %v1055
      %1088 = vst [vmem:[%s248 + $0xe0] sm:$0xff] %v1056
      %1089 = vst [vmem:[%s248 + $0xe8] sm:$0xff] %v1057
      %1090 = vst [vmem:[%s248 + $0xf0] sm:$0xff] %v1058
      %1091 = vst [vmem:[%s248 + $0xf8] sm:$0xff] %v1059
      %s1092 = smul.u32 32, %s16
      %p1093 = scmp.lt.s32.totalorder %s1092, 63
      %s1094 = scalar_select %p1093, %s1092, 63
      %s1095 = smul.addr %s1094, 8
      %s1096 = scalar_lea.vmem %s5, %s1095
      // Predicated region
      $region41: #{bottleneck_forward.3} parent=39 // pred_check
        %p1097 = pneg %p149
      $region42: #{bottleneck_forward.3} parent=39 // pred_check_branch
        %1099 = sbr.rel (%p1097) target = $region44
      $region43: #{bottleneck_forward.3} parent=39 // pred_region
        %s1100 = smul.u32 32, %s16
      $region44: #{bottleneck_forward.3} parent=39 // pred_fallthru
        _
    $region40: #{bottleneck_forward.3} parent=5 // pred_fallthru
      _
    %p1101 = scmp.le.s32.totalorder 2, %s11
    // Predicated region
    $region45: #{bottleneck_forward.3} parent=5 // pred_check
      %p1102 = pneg %p1101
    $region46: #{bottleneck_forward.3} parent=5 // pred_check_branch
      %1104 = sbr.rel (%p1102) target = $region48
    $region47: #{bottleneck_forward.3} parent=5 // pred_region
      %s1105 = ssub.s32 %s11, 2
      // Predicated region
      $region49: #{bottleneck_forward.3} parent=47 // pred_check
        %p1106 = pneg %p155
      $region50: #{bottleneck_forward.3} parent=47 // pred_check_branch
        %1108 = sbr.rel (%p1106) target = $region52
      $region51: #{bottleneck_forward.3} parent=47 // pred_region
        %s1109 = smul.u32 32, %s17
        %p1110 = scmp.lt.s32.totalorder %s1109, 63
        %s1111 = scalar_select %p1110, %s1109, 63
        %s1112 = smul.addr %s1111, 8
        %s1113 = scalar_lea.vmem %s5, %s1112
      $region52: #{bottleneck_forward.3} parent=47 // pred_fallthru
        _
    $region48: #{bottleneck_forward.3} parent=5 // pred_fallthru
      _
  $region6: #{bottleneck_forward.3} parent=0 // loop_footer
    %s15 = sadd.s32 1, %s11
  $region7: #{bottleneck_forward.3} parent=0 // loop_footer_branch
    %10 = sbr.rel target = $region3
  $region8: #{bottleneck_forward.3} parent=0 // loop_exit
    _

// kernel: bottleneck_forward.2
$region0: #{bottleneck_forward.2}
  #allocation0 [shape = 'u32[]', space=smem, size = 0x4, offset = 0x4, fixed_abs, tag = 'smem constant byte address 0x4 - core index']
  #allocation1 [shape = 'u32[144,128]{1,0:T(1,128)}', space=vmem, size = 0x12000, scoped, tag = 'internal scratch']
  %s0 = inlined_call_operand.vmem [shape: bf16[2,432,128], index: 0, kind: input, shape index: {}]
  %s1 = inlined_call_operand.vmem [shape: bf16[128,128], index: 1, kind: input, shape index: {}]
  %s2 = inlined_call_operand.vmem [shape: bf16[3,384,128], index: 2, kind: input, shape index: {}]
  %s3 = inlined_call_operand.vmem [shape: f32[1,128], index: 3, kind: input, shape index: {}]
  %s4 = inlined_call_operand.vmem [shape: bf16[2,256,128], index: 4, kind: output, shape index: {}]
  %s5 = sld [smem:[#allocation0]]
  $region49: #{bottleneck_forward.2} parent=0
    _
  %s7 = ssub.s32 1, %s5
  %s8 = scalar_select 0, %s7, %s5
  loop: start=0, step=1, limit=6
  $region2: #{bottleneck_forward.2} parent=0 // loop_pre_header
    _
  $region3: #{bottleneck_forward.2} parent=0 // loop_header
    %s10 = sphi 0, %s14
    %p11 = scmp.ge.s32.totalorder %s10, 6
    %s17 = sphi 0, %s29
    %s18 = sphi 0, %s25
    %s19 = sphi 0, %s17
    %s20 = sphi 0, %s18
    %s21 = sphi 0, %s19
    %s22 = sphi 0, %s20
    %s32 = sphi 0, %s34
    %s35 = sphi 0, %s32
    %s36 = sphi 0, %s35
    %s52 = sphi 0, %s36
    %s56 = sphi 0, %s56
    %s58 = sphi 0, %s56
    %s59 = sphi 0, %s58
    %s73 = sphi 0, %s59
    %s77 = sphi 0, %s77
    %s79 = sphi 0, %s77
    %s80 = sphi 0, %s79
    %s94 = sphi 0, %s80
    %s98 = sphi 0, %s98
    %s100 = sphi 0, %s98
    %s101 = sphi 0, %s100
    %s115 = sphi 0, %s101
    %s123 = sphi 0, %s125
    %s126 = sphi 0, %s123
    %s127 = sphi 0, %s126
    %s143 = sphi 0, %s127
  $region4: #{bottleneck_forward.2} parent=0 // loop_header_branch
    %13 = sbr.rel (%p11) target = $region8
  $region5: #{bottleneck_forward.2} parent=0 // loop_body
    %s15 = ssub.s32 %s10, 1
    %s16 = ssub.s32 %s10, 2
    %s23 = sadd.s32 1, %s18
    %p24 = scmp.ge.s32.totalorder %s23, 2
    %s25 = scalar_select %p24, 0, %s23
    %s26 = sadd.s32 1, %s17
    %s27 = scalar_select %p24, %s26, %s17
    %p28 = scmp.ge.s32.totalorder %s27, 2
    %s29 = scalar_select %p28, 0, %s27
    %s30 = ssub.s32 %s17, %s29
    %p31 = scmp.eq.s32.totalorder %s30, 0
    %s33 = sadd.s32 %s32, 1
    %s34 = scalar_select %p31, %s32, %s33
    %p37 = pneg %p31
    %p38 = scmp.eq.s32.totalorder %s10, 3
    %p39 = por %p37, %p38
    %p40 = scmp.ne.s32.totalorder %s32, %s35
    %p41 = scmp.eq.s32.totalorder %s10, 0
    %p42 = por %p40, %p41
    %p43 = scmp.ne.s32.totalorder %s32, %s35
    %p44 = scmp.eq.s32.totalorder %s15, 3
    %p45 = por %p43, %p44
    %p46 = scmp.ne.s32.totalorder %s35, %s36
    %p47 = scmp.eq.s32.totalorder %s15, 0
    %p48 = por %p46, %p47
    %p49 = scmp.ne.s32.totalorder %s35, %s36
    %p50 = scmp.eq.s32.totalorder %s16, 3
    %p51 = por %p49, %p50
    %p53 = scmp.ne.s32.totalorder %s36, %s52
    %p54 = scmp.eq.s32.totalorder %s16, 0
    %p55 = por %p53, %p54
    %s57 = sadd.s32 %s56, 1
    %p60 = scmp.eq.s32.totalorder %s10, 3
    %p61 = scmp.ne.s32.totalorder %s56, %s58
    %p62 = scmp.eq.s32.totalorder %s10, 0
    %p63 = por %p61, %p62
    %p64 = scmp.ne.s32.totalorder %s56, %s58
    %p65 = scmp.eq.s32.totalorder %s15, 3
    %p66 = por %p64, %p65
    %p67 = scmp.ne.s32.totalorder %s58, %s59
    %p68 = scmp.eq.s32.totalorder %s15, 0
    %p69 = por %p67, %p68
    %p70 = scmp.ne.s32.totalorder %s58, %s59
    %p71 = scmp.eq.s32.totalorder %s16, 3
    %p72 = por %p70, %p71
    %p74 = scmp.ne.s32.totalorder %s59, %s73
    %p75 = scmp.eq.s32.totalorder %s16, 0
    %p76 = por %p74, %p75
    %s78 = sadd.s32 %s77, 1
    %p81 = scmp.eq.s32.totalorder %s10, 3
    %p82 = scmp.ne.s32.totalorder %s77, %s79
    %p83 = scmp.eq.s32.totalorder %s10, 0
    %p84 = por %p82, %p83
    %p85 = scmp.ne.s32.totalorder %s77, %s79
    %p86 = scmp.eq.s32.totalorder %s15, 3
    %p87 = por %p85, %p86
    %p88 = scmp.ne.s32.totalorder %s79, %s80
    %p89 = scmp.eq.s32.totalorder %s15, 0
    %p90 = por %p88, %p89
    %p91 = scmp.ne.s32.totalorder %s79, %s80
    %p92 = scmp.eq.s32.totalorder %s16, 3
    %p93 = por %p91, %p92
    %p95 = scmp.ne.s32.totalorder %s80, %s94
    %p96 = scmp.eq.s32.totalorder %s16, 0
    %p97 = por %p95, %p96
    %s99 = sadd.s32 %s98, 1
    %p102 = scmp.eq.s32.totalorder %s10, 3
    %p103 = scmp.ne.s32.totalorder %s98, %s100
    %p104 = scmp.eq.s32.totalorder %s10, 0
    %p105 = por %p103, %p104
    %p106 = scmp.ne.s32.totalorder %s98, %s100
    %p107 = scmp.eq.s32.totalorder %s15, 3
    %p108 = por %p106, %p107
    %p109 = scmp.ne.s32.totalorder %s100, %s101
    %p110 = scmp.eq.s32.totalorder %s15, 0
    %p111 = por %p109, %p110
    %p112 = scmp.ne.s32.totalorder %s100, %s101
    %p113 = scmp.eq.s32.totalorder %s16, 3
    %p114 = por %p112, %p113
    %p116 = scmp.ne.s32.totalorder %s101, %s115
    %p117 = scmp.eq.s32.totalorder %s16, 0
    %p118 = por %p116, %p117
    %s119 = ssub.s32 %s17, %s29
    %s120 = ssub.s32 %s18, %s25
    %s121 = sor.u32 %s119, %s120
    %p122 = scmp.eq.s32.totalorder %s121, 0
    %s124 = sadd.s32 %s123, 1
    %s125 = scalar_select %p122, %s123, %s124
    %p128 = pneg %p122
    %p129 = scmp.eq.s32.totalorder %s10, 3
    %p130 = por %p128, %p129
    %p131 = scmp.ne.s32.totalorder %s123, %s126
    %p132 = scmp.eq.s32.totalorder %s10, 0
    %p133 = por %p131, %p132
    %p134 = scmp.ne.s32.totalorder %s123, %s126
    %p135 = scmp.eq.s32.totalorder %s15, 3
    %p136 = por %p134, %p135
    %p137 = scmp.ne.s32.totalorder %s126, %s127
    %p138 = scmp.eq.s32.totalorder %s15, 0
    %p139 = por %p137, %p138
    %p140 = scmp.ne.s32.totalorder %s126, %s127
    %p141 = scmp.eq.s32.totalorder %s16, 3
    %p142 = por %p140, %p141
    %p144 = scmp.ne.s32.totalorder %s127, %s143
    %p145 = scmp.eq.s32.totalorder %s16, 0
    %p146 = por %p144, %p145
    %p147 = scmp.le.s32.totalorder 1, %s10
    %p148 = scmp.lt.s32.totalorder %s10, 5
    %p149 = pnand %p147, %p148
    %p150 = pneg %p149
    // Predicated region
    $region9: #{bottleneck_forward.2} parent=5 // pred_check
      _
    $region10: #{bottleneck_forward.2} parent=5 // pred_check_branch
      %152 = sbr.rel (%p149) target = $region12
    $region11: #{bottleneck_forward.2} parent=5 // pred_region
      %s153 = ssub.s32 %s10, 1
      // Predicated region
      $region13: #{bottleneck_forward.2} parent=11 // pred_check
        %p154 = pneg %p69
      $region14: #{bottleneck_forward.2} parent=11 // pred_check_branch
        %156 = sbr.rel (%p154) target = $region16
      $region15: #{bottleneck_forward.2} parent=11 // pred_region
        _
      $region16: #{bottleneck_forward.2} parent=11 // pred_fallthru
        _
      // Predicated region
      $region17: #{bottleneck_forward.2} parent=11 // pred_check
        %p157 = pneg %p90
      $region18: #{bottleneck_forward.2} parent=11 // pred_check_branch
        %159 = sbr.rel (%p157) target = $region20
      $region19: #{bottleneck_forward.2} parent=11 // pred_region
        _
      $region20: #{bottleneck_forward.2} parent=11 // pred_fallthru
        _
      // Predicated region
      $region21: #{bottleneck_forward.2} parent=11 // pred_check
        %p160 = pneg %p111
      $region22: #{bottleneck_forward.2} parent=11 // pred_check_branch
        %162 = sbr.rel (%p160) target = $region24
      $region23: #{bottleneck_forward.2} parent=11 // pred_region
        _
      $region24: #{bottleneck_forward.2} parent=11 // pred_fallthru
        _
    $region12: #{bottleneck_forward.2} parent=5 // pred_fallthru
      _
    %p163 = scmp.lt.s32.totalorder %s10, 4
    // Predicated region
    $region25: #{bottleneck_forward.2} parent=5 // pred_check
      %p164 = pneg %p163
    $region26: #{bottleneck_forward.2} parent=5 // pred_check_branch
      %166 = sbr.rel (%p164) target = $region28
    $region27: #{bottleneck_forward.2} parent=5 // pred_region
      // Predicated region
      $region29: #{bottleneck_forward.2} parent=27 // pred_check
        %p167 = pneg %p42
      $region30: #{bottleneck_forward.2} parent=27 // pred_check_branch
        %169 = sbr.rel (%p167) target = $region32
      $region31: #{bottleneck_forward.2} parent=27 // pred_region
        %p170 = scmp.lt.s32.totalorder %s17, 1
        %s171 = scalar_select %p170, %s17, 1
        %s172 = smul.addr %s171, 54
        %s173 = smul.addr %s172, 4
        %s174 = scalar_lea.vmem %s0, %s173
      $region32: #{bottleneck_forward.2} parent=27 // pred_fallthru
        _
    $region28: #{bottleneck_forward.2} parent=5 // pred_fallthru
      _
    %p175 = scmp.le.s32.totalorder 1, %s10
    %p176 = scmp.lt.s32.totalorder %s10, 5
    %p177 = pnand %p175, %p176
    %p178 = pneg %p177
    // Predicated region
    $region33: #{bottleneck_forward.2} parent=5 // pred_check
      _
    $region34: #{bottleneck_forward.2} parent=5 // pred_check_branch
      %180 = sbr.rel (%p177) target = $region36
    $region35: #{bottleneck_forward.2} parent=5 // pred_region
      %s181 = ssub.s32 %s10, 1
      %p182 = scmp.lt.s32.totalorder %s19, 1
      %s183 = scalar_select %p182, %s19, 1
      %s184 = smul.addr %s183, 54
      %s185 = smul.addr %s184, 4
      %s186 = scalar_lea.vmem %s0, %s185
      %p187 = pneg %p48
      %p188 = pneg %p45
      %p189 = pneg %p69
      %p190 = pneg %p66
      %p191 = pneg %p90
      %p192 = pneg %p87
      %p193 = pneg %p111
      %p194 = pneg %p108
      %p195 = pneg %p139
      %p196 = pneg %p136
      %s197 = smul.u32 16, %s20
      %p198 = scmp.lt.s32.totalorder %s19, 1
      %s199 = scalar_select %p198, %s19, 1
      %p200 = scmp.lt.s32.totalorder %s197, 31
      %s201 = scalar_select %p200, %s197, 31
      %s202 = smul.addr %s199, 32
      %s203 = sadd.s32 %s201, %s202
      %s204 = smul.addr %s203, 4
      %s205 = scalar_lea.vmem %s4, %s204
      %p206 = scmp.lt.s32.totalorder %s19, 1
      %s207 = scalar_select %p206, %s19, 1
      %s208 = smul.addr %s207, 54
      %s209 = smul.addr %s208, 4
      %s210 = scalar_lea.vmem %s0, %s209
      %s211 = smul.u32 16, %s20
      %p212 = scmp.lt.s32.totalorder %s19, 1
      %s213 = scalar_select %p212, %s19, 1
      %p214 = scmp.lt.s32.totalorder %s211, 31
      %s215 = scalar_select %p214, %s211, 31
      %s216 = smul.addr %s213, 32
      %s217 = sadd.s32 %s215, %s216
      %s218 = smul.addr %s217, 4
      %s219 = scalar_lea.vmem %s4, %s218
      %s220 = smul.u32 16, %s20
      %s222 = smul.u32 %s20, 192
      %s223 = sshra.s32 %s222, 3
      %s224 = sand.u32 %s222, 7
      %s225 = smul.addr %s223, 4
      %s226 = scalar_lea.vmem %s210, %s225
      %v227 = vld [vmem:[%s226] sm:$0xf]
      %v228 = vld [vmem:[%s226 + $0x4] sm:$0xf]
      %v229 = vld [vmem:[%s226 + $0x8] sm:$0xf]
      %v230 = vld [vmem:[%s226 + $0xc] sm:$0xf]
      %v231 = vld [vmem:[%s226 + $0x10] sm:$0xf]
      %v232 = vld [vmem:[%s226 + $0x14] sm:$0xf]
      %v233 = vld [vmem:[%s226 + $0x18] sm:$0xf]
      %v234 = vld [vmem:[%s226 + $0x1c] sm:$0xf]
      %v235 = vld [vmem:[%s226 + $0x20] sm:$0xf]
      %v236 = vld [vmem:[%s226 + $0x24] sm:$0xf]
      %v237 = vld [vmem:[%s226 + $0x28] sm:$0xf]
      %v238 = vld [vmem:[%s226 + $0x2c] sm:$0xf]
      %v239 = vld [vmem:[%s226 + $0x30] sm:$0xf]
      %v240 = vld [vmem:[%s226 + $0x34] sm:$0xf]
      %v241 = vld [vmem:[%s226 + $0x38] sm:$0xf]
      %v242 = vld [vmem:[%s226 + $0x3c] sm:$0xf]
      %v243 = vld [vmem:[%s226 + $0x40] sm:$0xf]
      %v244 = vld [vmem:[%s226 + $0x44] sm:$0xf]
      %v245 = vld [vmem:[%s226 + $0x48] sm:$0xf]
      %v246 = vld [vmem:[%s226 + $0x4c] sm:$0xf]
      %v247 = vld [vmem:[%s226 + $0x50] sm:$0xf]
      %v248 = vld [vmem:[%s226 + $0x54] sm:$0xf]
      %v249 = vld [vmem:[%s226 + $0x58] sm:$0xf]
      %v250 = vld [vmem:[%s226 + $0x5c] sm:$0xf]
      %v251 = vld [vmem:[%s226 + $0x60] sm:$0xf]
      %v252 = vld [vmem:[%s226 + $0x64] sm:$0xf]
      %v253 = vld [vmem:[%s226 + $0x68] sm:$0xf]
      %v254 = vld [vmem:[%s226 + $0x6c] sm:$0xf]
      %v255 = vld [vmem:[%s226 + $0x70] sm:$0xf]
      %v256 = vld [vmem:[%s226 + $0x74] sm:$0xf]
      %v257 = vld [vmem:[%s1] sm:$0xf]
      %v258 = vld [vmem:[%s1 + $0x4] sm:$0xf]
      %v259 = vld [vmem:[%s1 + $0x8] sm:$0xf]
      %v260 = vld [vmem:[%s1 + $0xc] sm:$0xf]
      %v261 = vld [vmem:[%s1 + $0x10] sm:$0xf]
      %v262 = vld [vmem:[%s1 + $0x14] sm:$0xf]
      %v263 = vld [vmem:[%s1 + $0x18] sm:$0xf]
      %v264 = vld [vmem:[%s1 + $0x1c] sm:$0xf]
      %v265 = vld [vmem:[%s1 + $0x20] sm:$0xf]
      %v266 = vld [vmem:[%s1 + $0x24] sm:$0xf]
      %v267 = vld [vmem:[%s1 + $0x28] sm:$0xf]
      %v268 = vld [vmem:[%s1 + $0x2c] sm:$0xf]
      %v269 = vld [vmem:[%s1 + $0x30] sm:$0xf]
      %v270 = vld [vmem:[%s1 + $0x34] sm:$0xf]
      %v271 = vld [vmem:[%s1 + $0x38] sm:$0xf]
      %v272 = vld [vmem:[%s1 + $0x3c] sm:$0xf]
      %v303 = vunpack.c.l.b16 %v227
      %v304 = vunpack.c.l.b16 %v228
      %v305 = vunpack.c.l.b16 %v229
      %v306 = vunpack.c.l.b16 %v230
      %v307 = vunpack.c.l.b16 %v231
      %v308 = vunpack.c.l.b16 %v232
      %v309 = vunpack.c.l.b16 %v233
      %v310 = vunpack.c.l.b16 %v234
      %v311 = vunpack.c.l.b16 %v235
      %v312 = vunpack.c.l.b16 %v236
      %v313 = vunpack.c.l.b16 %v237
      %v314 = vunpack.c.l.b16 %v238
      %v315 = vunpack.c.l.b16 %v239
      %v316 = vunpack.c.l.b16 %v240
      %v317 = vunpack.c.l.b16 %v241
      %v318 = vunpack.c.l.b16 %v242
      %v319 = vunpack.c.l.b16 %v243
      %v320 = vunpack.c.l.b16 %v244
      %v321 = vunpack.c.l.b16 %v245
      %v322 = vunpack.c.l.b16 %v246
      %v323 = vunpack.c.l.b16 %v247
      %v324 = vunpack.c.l.b16 %v248
      %v325 = vunpack.c.l.b16 %v249
      %v326 = vunpack.c.l.b16 %v250
      %v327 = vunpack.c.l.b16 %v251
      %v328 = vunpack.c.l.b16 %v252
      %v329 = vunpack.c.l.b16 %v253
      %v330 = vunpack.c.l.b16 %v254
      %v331 = vunpack.c.l.b16 %v255
      %v332 = vunpack.c.l.b16 %v256
      %v333 = vpack.c.b16 %v304, %v303
      %v334 = vpack.c.b16 %v306, %v305
      %v335 = vpack.c.b16 %v308, %v307
      %v336 = vpack.c.b16 %v310, %v309
      %v337 = vpack.c.b16 %v312, %v311
      %v338 = vpack.c.b16 %v314, %v313
      %v339 = vpack.c.b16 %v316, %v315
      %v340 = vpack.c.b16 %v318, %v317
      %v341 = vpack.c.b16 %v320, %v319
      %v342 = vpack.c.b16 %v322, %v321
      %v343 = vpack.c.b16 %v324, %v323
      %v344 = vpack.c.b16 %v326, %v325
      %v345 = vpack.c.b16 %v328, %v327
      %v346 = vpack.c.b16 %v330, %v329
      %v347 = vpack.c.b16 %v332, %v331
      %v379 = vunpack.c.l.b16 %v257
      %v380 = vunpack.c.l.b16 %v258
      %v381 = vunpack.c.l.b16 %v259
      %v382 = vunpack.c.l.b16 %v260
      %v383 = vunpack.c.l.b16 %v261
      %v384 = vunpack.c.l.b16 %v262
      %v385 = vunpack.c.l.b16 %v263
      %v386 = vunpack.c.l.b16 %v264
      %v387 = vunpack.c.l.b16 %v265
      %v388 = vunpack.c.l.b16 %v266
      %v389 = vunpack.c.l.b16 %v267
      %v390 = vunpack.c.l.b16 %v268
      %v391 = vunpack.c.l.b16 %v269
      %v392 = vunpack.c.l.b16 %v270
      %v393 = vunpack.c.l.b16 %v271
      %v394 = vunpack.c.l.b16 %v272
      %v395 = vpack.c.b16 %v380, %v379
      %v396 = vpack.c.b16 %v382, %v381
      %v397 = vpack.c.b16 %v384, %v383
      %v398 = vpack.c.b16 %v386, %v385
      %v399 = vpack.c.b16 %v388, %v387
      %v400 = vpack.c.b16 %v390, %v389
      %v401 = vpack.c.b16 %v392, %v391
      %v402 = vpack.c.b16 %v394, %v393
      %411 = vmatprep.subr.bf16.mxu0 0
      %412 = vmatpush1.bf16.msra.mxu0 %v395
      %413 = vmatprep.subr.bf16.mxu0 0
      %414 = vmatpush1.bf16.msra.mxu0 %v396
      %415 = vmatprep.subr.bf16.mxu0 0
      %416 = vmatpush1.bf16.msra.mxu0 %v397
      %417 = vmatprep.subr.bf16.mxu0 0
      %418 = vmatpush1.bf16.msra.mxu0 %v398
      %419 = vmatprep.subr.bf16.mxu0 0
      %420 = vmatpush1.bf16.msra.mxu0 %v399
      %421 = vmatprep.subr.bf16.mxu0 0
      %422 = vmatpush1.bf16.msra.mxu0 %v400
      %423 = vmatprep.subr.bf16.mxu0 0
      %424 = vmatpush1.bf16.msra.mxu0 %v401
      %425 = vmatprep.subr.bf16.mxu0 0
      %426 = vmatpush1.bf16.msra.mxu0 %v402
      %427 = vmatprep.subr.bf16.mxu0 0
      %428 = vmatpush1.bf16.msra.mxu0 0
      %429 = vmatprep.subr.bf16.mxu0 0
      %430 = vmatpush1.bf16.msra.mxu0 0
      %431 = vmatprep.subr.bf16.mxu0 0
      %432 = vmatpush1.bf16.msra.mxu0 0
      %433 = vmatprep.subr.bf16.mxu0 0
      %434 = vmatpush1.bf16.msra.mxu0 0
      %435 = vmatprep.subr.bf16.mxu0 0
      %436 = vmatpush1.bf16.msra.mxu0 0
      %437 = vmatprep.subr.bf16.mxu0 0
      %438 = vmatpush1.bf16.msra.mxu0 0
      %439 = vmatprep.subr.bf16.mxu0 0
      %440 = vmatpush1.bf16.msra.mxu0 0
      %441 = vmatprep.subr.bf16.mxu0 0
      %442 = vmatpush1.bf16.msra.mxu0 0
      %443 = vmatprep.mubr.bf16.mxu0 0
      %444 = vmatmul.mubr.bf16.gmra.mrb[0].mxu0 %v333
      %v445 = vpop.f32.mrb[0].mxu0
      %v446 = vadd.f32 0.0, %v445
      %v447 = vpop.f32.mrb[0].mxu0
      %v448 = vpop.f32.mrb[0].mxu0
      %v449 = vadd.f32 0.0, %v448
      %v450 = vpop.f32.mrb[0].mxu0
      %451 = vmatprep.mubr.bf16.mxu0 0
      %452 = vmatmul.mubr.bf16.gmra.mrb[0].mxu0 %v334
      %v453 = vpop.f32.mrb[0].mxu0
      %v454 = vadd.f32 0.0, %v453
      %v455 = vpop.f32.mrb[0].mxu0
      %v456 = vpop.f32.mrb[0].mxu0
      %v457 = vadd.f32 0.0, %v456
      %v458 = vpop.f32.mrb[0].mxu0
      %459 = vmatprep.mubr.bf16.mxu0 0
      %460 = vmatmul.mubr.bf16.gmra.mrb[0].mxu0 %v335
      %v461 = vpop.f32.mrb[0].mxu0
      %v462 = vadd.f32 0.0, %v461
      %v463 = vpop.f32.mrb[0].mxu0
      %v464 = vpop.f32.mrb[0].mxu0
      %v465 = vadd.f32 0.0, %v464
      %v466 = vpop.f32.mrb[0].mxu0
      %467 = vmatprep.mubr.bf16.mxu0 0
      %468 = vmatmul.mubr.bf16.gmra.mrb[0].mxu0 %v336
      %v469 = vpop.f32.mrb[0].mxu0
      %v470 = vadd.f32 0.0, %v469
      %v471 = vpop.f32.mrb[0].mxu0
      %v472 = vpop.f32.mrb[0].mxu0
      %v473 = vadd.f32 0.0, %v472
      %v474 = vpop.f32.mrb[0].mxu0
      %475 = vmatprep.mubr.bf16.mxu0 0
      %476 = vmatmul.mubr.bf16.gmra.mrb[0].mxu0 %v337
      %v477 = vpop.f32.mrb[0].mxu0
      %v478 = vadd.f32 0.0, %v477
      %v479 = vpop.f32.mrb[0].mxu0
      %v480 = vpop.f32.mrb[0].mxu0
      %v481 = vadd.f32 0.0, %v480
      %v482 = vpop.f32.mrb[0].mxu0
      %483 = vmatprep.mubr.bf16.mxu0 0
      %484 = vmatmul.mubr.bf16.gmra.mrb[0].mxu0 %v338
      %v485 = vpop.f32.mrb[0].mxu0
      %v486 = vadd.f32 0.0, %v485
      %v487 = vpop.f32.mrb[0].mxu0
      %v488 = vpop.f32.mrb[0].mxu0
      %v489 = vadd.f32 0.0, %v488
      %v490 = vpop.f32.mrb[0].mxu0
      %491 = vmatprep.mubr.bf16.mxu0 0
      %492 = vmatmul.mubr.bf16.gmra.mrb[0].mxu0 %v339
      %v493 = vpop.f32.mrb[0].mxu0
      %v494 = vadd.f32 0.0, %v493
      %v495 = vpop.f32.mrb[0].mxu0
      %v496 = vpop.f32.mrb[0].mxu0
      %v497 = vadd.f32 0.0, %v496
      %v498 = vpop.f32.mrb[0].mxu0
      %499 = vmatprep.mubr.bf16.mxu0 0
      %500 = vmatmul.mubr.bf16.gmra.mrb[0].mxu0 %v340
      %v501 = vpop.f32.mrb[0].mxu0
      %v502 = vadd.f32 0.0, %v501
      %v503 = vpop.f32.mrb[0].mxu0
      %v504 = vpop.f32.mrb[0].mxu0
      %v505 = vadd.f32 0.0, %v504
      %v506 = vpop.f32.mrb[0].mxu0
      %507 = vmatprep.mubr.bf16.mxu0 0
      %508 = vmatmul.mubr.bf16.gmra.mrb[0].mxu0 %v341
      %v509 = vpop.f32.mrb[0].mxu0
      %v510 = vadd.f32 0.0, %v509
      %v511 = vpop.f32.mrb[0].mxu0
      %v512 = vpop.f32.mrb[0].mxu0
      %v513 = vadd.f32 0.0, %v512
      %v514 = vpop.f32.mrb[0].mxu0
      %515 = vmatprep.mubr.bf16.mxu0 0
      %516 = vmatmul.mubr.bf16.gmra.mrb[0].mxu0 %v342
      %v517 = vpop.f32.mrb[0].mxu0
      %v518 = vadd.f32 0.0, %v517
      %v519 = vpop.f32.mrb[0].mxu0
      %v520 = vpop.f32.mrb[0].mxu0
      %v521 = vadd.f32 0.0, %v520
      %v522 = vpop.f32.mrb[0].mxu0
      %523 = vmatprep.mubr.bf16.mxu0 0
      %524 = vmatmul.mubr.bf16.gmra.mrb[0].mxu0 %v343
      %v525 = vpop.f32.mrb[0].mxu0
      %v526 = vadd.f32 0.0, %v525
      %v527 = vpop.f32.mrb[0].mxu0
      %v528 = vpop.f32.mrb[0].mxu0
      %v529 = vadd.f32 0.0, %v528
      %v530 = vpop.f32.mrb[0].mxu0
      %531 = vmatprep.mubr.bf16.mxu0 0
      %532 = vmatmul.mubr.bf16.gmra.mrb[0].mxu0 %v344
      %v533 = vpop.f32.mrb[0].mxu0
      %v534 = vadd.f32 0.0, %v533
      %v535 = vpop.f32.mrb[0].mxu0
      %v536 = vpop.f32.mrb[0].mxu0
      %v537 = vadd.f32 0.0, %v536
      %v538 = vpop.f32.mrb[0].mxu0
      %539 = vmatprep.mubr.bf16.mxu0 0
      %540 = vmatmul.mubr.bf16.gmra.mrb[0].mxu0 %v345
      %v541 = vpop.f32.mrb[0].mxu0
      %v542 = vadd.f32 0.0, %v541
      %v543 = vpop.f32.mrb[0].mxu0
      %v544 = vpop.f32.mrb[0].mxu0
      %v545 = vadd.f32 0.0, %v544
      %v546 = vpop.f32.mrb[0].mxu0
      %547 = vmatprep.mubr.bf16.mxu0 0
      %548 = vmatmul.mubr.bf16.gmra.mrb[0].mxu0 %v346
      %v549 = vpop.f32.mrb[0].mxu0
      %v550 = vadd.f32 0.0, %v549
      %v551 = vpop.f32.mrb[0].mxu0
      %v552 = vpop.f32.mrb[0].mxu0
      %v553 = vadd.f32 0.0, %v552
      %v554 = vpop.f32.mrb[0].mxu0
      %555 = vmatprep.mubr.bf16.mxu0 0
      %556 = vmatmul.mubr.bf16.gmra.mrb[0].mxu0 %v347
      %v557 = vpop.f32.mrb[0].mxu0
      %v558 = vadd.f32 0.0, %v557
      %v559 = vpop.f32.mrb[0].mxu0
      %v560 = vpop.f32.mrb[0].mxu0
      %v561 = vadd.f32 0.0, %v560
      %v562 = vpop.f32.mrb[0].mxu0
      %563 = vdwg.mxu0
      %v564 = vmax.f32 %v446, 0.0
      %v565 = vmax.f32 %v449, 0.0
      %v566 = vmax.f32 %v454, 0.0
      %v567 = vmax.f32 %v457, 0.0
      %v568 = vmax.f32 %v462, 0.0
      %v569 = vmax.f32 %v465, 0.0
      %v570 = vmax.f32 %v470, 0.0
      %v571 = vmax.f32 %v473, 0.0
      %v572 = vmax.f32 %v478, 0.0
      %v573 = vmax.f32 %v481, 0.0
      %v574 = vmax.f32 %v486, 0.0
      %v575 = vmax.f32 %v489, 0.0
      %v576 = vmax.f32 %v494, 0.0
      %v577 = vmax.f32 %v497, 0.0
      %v578 = vmax.f32 %v502, 0.0
      %v579 = vmax.f32 %v505, 0.0
      %v580 = vmax.f32 %v510, 0.0
      %v581 = vmax.f32 %v513, 0.0
      %v582 = vmax.f32 %v518, 0.0
      %v583 = vmax.f32 %v521, 0.0
      %v584 = vmax.f32 %v526, 0.0
      %v585 = vmax.f32 %v529, 0.0
      %v586 = vmax.f32 %v534, 0.0
      %v587 = vmax.f32 %v537, 0.0
      %v588 = vmax.f32 %v542, 0.0
      %v589 = vmax.f32 %v545, 0.0
      %v590 = vmax.f32 %v550, 0.0
      %v591 = vmax.f32 %v553, 0.0
      %v592 = vmax.f32 %v558, 0.0
      %v593 = vmax.f32 %v561, 0.0
      %v594 = vpack.c.bf16 %v565, %v564
      %v595 = vpack.c.bf16 %v567, %v566
      %v596 = vpack.c.bf16 %v569, %v568
      %v597 = vpack.c.bf16 %v571, %v570
      %v598 = vpack.c.bf16 %v573, %v572
      %v599 = vpack.c.bf16 %v575, %v574
      %v600 = vpack.c.bf16 %v577, %v576
      %v601 = vpack.c.bf16 %v579, %v578
      %v602 = vpack.c.bf16 %v581, %v580
      %v603 = vpack.c.bf16 %v583, %v582
      %v604 = vpack.c.bf16 %v585, %v584
      %v605 = vpack.c.bf16 %v587, %v586
      %v606 = vpack.c.bf16 %v589, %v588
      %v607 = vpack.c.bf16 %v591, %v590
      %v608 = vpack.c.bf16 %v593, %v592
      %v624 = vunpack.c.l.b16 %v594
      %v625 = vunpack.c.h.b16 %v594
      %v626 = vunpack.c.l.b16 %v595
      %v627 = vunpack.c.h.b16 %v595
      %v628 = vunpack.c.l.b16 %v596
      %v629 = vunpack.c.h.b16 %v596
      %v630 = vunpack.c.l.b16 %v597
      %v631 = vunpack.c.h.b16 %v597
      %v632 = vunpack.c.l.b16 %v598
      %v633 = vunpack.c.h.b16 %v598
      %v634 = vunpack.c.l.b16 %v599
      %v635 = vunpack.c.h.b16 %v599
      %v636 = vunpack.c.l.b16 %v600
      %v637 = vunpack.c.h.b16 %v600
      %v638 = vunpack.c.l.b16 %v601
      %v639 = vunpack.c.h.b16 %v601
      %v640 = vunpack.c.l.b16 %v602
      %v641 = vunpack.c.h.b16 %v602
      %v642 = vunpack.c.l.b16 %v603
      %v643 = vunpack.c.h.b16 %v603
      %v644 = vunpack.c.l.b16 %v604
      %v645 = vunpack.c.h.b16 %v604
      %v646 = vunpack.c.l.b16 %v605
      %v647 = vunpack.c.h.b16 %v605
      %v648 = vunpack.c.l.b16 %v606
      %v649 = vunpack.c.h.b16 %v606
      %v650 = vunpack.c.l.b16 %v607
      %v651 = vunpack.c.h.b16 %v607
      %v652 = vunpack.c.l.b16 %v608
      %v653 = vunpack.c.h.b16 %v608
      %v654 = vpack.c.b16 %v625, %v624
      %v655 = vpack.c.b16 %v628, %v627
      %v656 = vpack.c.b16 %v631, %v630
      %v657 = vpack.c.b16 %v634, %v633
      %v658 = vpack.c.b16 %v637, %v636
      %v659 = vpack.c.b16 %v640, %v639
      %v660 = vpack.c.b16 %v643, %v642
      %v661 = vpack.c.b16 %v646, %v645
      %v662 = vpack.c.b16 %v649, %v648
      %v663 = vpack.c.b16 %v652, %v651
      %v674 = vpack.c.b16 %v626, %v626
      %v675 = vpack.c.b16 %v629, %v629
      %v676 = vpack.c.b16 %v632, %v632
      %v677 = vpack.c.b16 %v635, %v635
      %v678 = vpack.c.b16 %v638, %v638
      %v679 = vpack.c.b16 %v641, %v641
      %v680 = vpack.c.b16 %v644, %v644
      %v681 = vpack.c.b16 %v647, %v647
      %v682 = vpack.c.b16 %v650, %v650
      %v683 = vpack.c.b16 %v653, %v653
      %vm684 = vsmask.f32 7424
      %v686 = vshrl.u32 %v654, 16
      %v688 = vshll.u32 %v654, 16
      %v690 = vrot.slane %v688, 1
      %v691 = vor.u32 %v686, %v690
      %v693 = vshll.u32 %v674, 16
      %v695 = vrot.slane %v693, 1
      %v696 = vsel %vm684, %v691, %v695
      %v698 = vshrl.u32 %v655, 16
      %v700 = vshll.u32 %v655, 16
      %v702 = vrot.slane %v700, 1
      %v703 = vor.u32 %v698, %v702
      %v705 = vshll.u32 %v675, 16
      %v707 = vrot.slane %v705, 1
      %v708 = vsel %vm684, %v703, %v707
      %v710 = vshrl.u32 %v656, 16
      %v712 = vshll.u32 %v656, 16
      %v714 = vrot.slane %v712, 1
      %v715 = vor.u32 %v710, %v714
      %v717 = vshll.u32 %v676, 16
      %v719 = vrot.slane %v717, 1
      %v720 = vsel %vm684, %v715, %v719
      %v722 = vshrl.u32 %v657, 16
      %v724 = vshll.u32 %v657, 16
      %v726 = vrot.slane %v724, 1
      %v727 = vor.u32 %v722, %v726
      %v729 = vshll.u32 %v677, 16
      %v731 = vrot.slane %v729, 1
      %v732 = vsel %vm684, %v727, %v731
      %v734 = vshrl.u32 %v658, 16
      %v736 = vshll.u32 %v658, 16
      %v738 = vrot.slane %v736, 1
      %v739 = vor.u32 %v734, %v738
      %v741 = vshll.u32 %v678, 16
      %v743 = vrot.slane %v741, 1
      %v744 = vsel %vm684, %v739, %v743
      %v746 = vshrl.u32 %v659, 16
      %v748 = vshll.u32 %v659, 16
      %v750 = vrot.slane %v748, 1
      %v751 = vor.u32 %v746, %v750
      %v753 = vshll.u32 %v679, 16
      %v755 = vrot.slane %v753, 1
      %v756 = vsel %vm684, %v751, %v755
      %v758 = vshrl.u32 %v660, 16
      %v760 = vshll.u32 %v660, 16
      %v762 = vrot.slane %v760, 1
      %v763 = vor.u32 %v758, %v762
      %v765 = vshll.u32 %v680, 16
      %v767 = vrot.slane %v765, 1
      %v768 = vsel %vm684, %v763, %v767
      %v770 = vshrl.u32 %v661, 16
      %v772 = vshll.u32 %v661, 16
      %v774 = vrot.slane %v772, 1
      %v775 = vor.u32 %v770, %v774
      %v777 = vshll.u32 %v681, 16
      %v779 = vrot.slane %v777, 1
      %v780 = vsel %vm684, %v775, %v779
      %v782 = vshrl.u32 %v662, 16
      %v784 = vshll.u32 %v662, 16
      %v786 = vrot.slane %v784, 1
      %v787 = vor.u32 %v782, %v786
      %v789 = vshll.u32 %v682, 16
      %v791 = vrot.slane %v789, 1
      %v792 = vsel %vm684, %v787, %v791
      %v794 = vshrl.u32 %v663, 16
      %v796 = vshll.u32 %v663, 16
      %v798 = vrot.slane %v796, 1
      %v799 = vor.u32 %v794, %v798
      %v801 = vshll.u32 %v683, 16
      %v803 = vrot.slane %v801, 1
      %v804 = vsel %vm684, %v799, %v803
      %vm815 = vcmask 1046528
      %v816 = vrot.slane %v654, 1
      %v817 = vrot.slane %v674, 1
      %v818 = vsel %vm815, %v816, %v817
      %v819 = vrot.slane %v655, 1
      %v820 = vrot.slane %v675, 1
      %v821 = vsel %vm815, %v819, %v820
      %v822 = vrot.slane %v656, 1
      %v823 = vrot.slane %v676, 1
      %v824 = vsel %vm815, %v822, %v823
      %v825 = vrot.slane %v657, 1
      %v826 = vrot.slane %v677, 1
      %v827 = vsel %vm815, %v825, %v826
      %v828 = vrot.slane %v658, 1
      %v829 = vrot.slane %v678, 1
      %v830 = vsel %vm815, %v828, %v829
      %v831 = vrot.slane %v659, 1
      %v832 = vrot.slane %v679, 1
      %v833 = vsel %vm815, %v831, %v832
      %v834 = vrot.slane %v660, 1
      %v835 = vrot.slane %v680, 1
      %v836 = vsel %vm815, %v834, %v835
      %v837 = vrot.slane %v661, 1
      %v838 = vrot.slane %v681, 1
      %v839 = vsel %vm815, %v837, %v838
      %v840 = vrot.slane %v662, 1
      %v841 = vrot.slane %v682, 1
      %v842 = vsel %vm815, %v840, %v841
      %v843 = vrot.slane %v663, 1
      %v844 = vrot.slane %v683, 1
      %v845 = vsel %vm815, %v843, %v844
      %v856 = vld [vmem:[%s3] sm:$0x1]
      %v857 = vld [vmem:[%s2] sm:$0xf]
      %v858 = vld [vmem:[%s2 + $0x4] sm:$0xf]
      %v859 = vld [vmem:[%s2 + $0x8] sm:$0xf]
      %v860 = vld [vmem:[%s2 + $0xc] sm:$0xf]
      %v861 = vld [vmem:[%s2 + $0x10] sm:$0xf]
      %v862 = vld [vmem:[%s2 + $0x14] sm:$0xf]
      %v863 = vld [vmem:[%s2 + $0x18] sm:$0xf]
      %v864 = vld [vmem:[%s2 + $0x1c] sm:$0xf]
      %v865 = vld [vmem:[%s2 + $0x20] sm:$0xf]
      %v866 = vld [vmem:[%s2 + $0x24] sm:$0xf]
      %v867 = vld [vmem:[%s2 + $0x28] sm:$0xf]
      %v868 = vld [vmem:[%s2 + $0x2c] sm:$0xf]
      %v869 = vld [vmem:[%s2 + $0x30] sm:$0xf]
      %v870 = vld [vmem:[%s2 + $0x34] sm:$0xf]
      %v871 = vld [vmem:[%s2 + $0x38] sm:$0xf]
      %v872 = vld [vmem:[%s2 + $0x3c] sm:$0xf]
      %v873 = vld [vmem:[%s2 + $0x40] sm:$0xf]
      %v874 = vld [vmem:[%s2 + $0x44] sm:$0xf]
      %v875 = vld [vmem:[%s2 + $0x48] sm:$0xf]
      %v876 = vld [vmem:[%s2 + $0x4c] sm:$0xf]
      %v877 = vld [vmem:[%s2 + $0x50] sm:$0xf]
      %v878 = vld [vmem:[%s2 + $0x54] sm:$0xf]
      %v879 = vld [vmem:[%s2 + $0x58] sm:$0xf]
      %v880 = vld [vmem:[%s2 + $0x5c] sm:$0xf]
      %v881 = vld [vmem:[%s2 + $0x60] sm:$0xf]
      %v882 = vld [vmem:[%s2 + $0x64] sm:$0xf]
      %v883 = vld [vmem:[%s2 + $0x68] sm:$0xf]
      %v884 = vld [vmem:[%s2 + $0x6c] sm:$0xf]
      %v885 = vld [vmem:[%s2 + $0x70] sm:$0xf]
      %v886 = vld [vmem:[%s2 + $0x74] sm:$0xf]
      %v887 = vld [vmem:[%s2 + $0x78] sm:$0xf]
      %v888 = vld [vmem:[%s2 + $0x7c] sm:$0xf]
      %v889 = vld [vmem:[%s2 + $0x80] sm:$0xf]
      %v890 = vld [vmem:[%s2 + $0x84] sm:$0xf]
      %v891 = vld [vmem:[%s2 + $0x88] sm:$0xf]
      %v892 = vld [vmem:[%s2 + $0x8c] sm:$0xf]
      %v893 = vld [vmem:[%s2 + $0x90] sm:$0xf]
      %v894 = vld [vmem:[%s2 + $0x94] sm:$0xf]
      %v895 = vld [vmem:[%s2 + $0x98] sm:$0xf]
      %v896 = vld [vmem:[%s2 + $0x9c] sm:$0xf]
      %v897 = vld [vmem:[%s2 + $0xa0] sm:$0xf]
      %v898 = vld [vmem:[%s2 + $0xa4] sm:$0xf]
      %v899 = vld [vmem:[%s2 + $0xa8] sm:$0xf]
      %v900 = vld [vmem:[%s2 + $0xac] sm:$0xf]
      %v901 = vld [vmem:[%s2 + $0xb0] sm:$0xf]
      %v902 = vld [vmem:[%s2 + $0xb4] sm:$0xf]
      %v903 = vld [vmem:[%s2 + $0xb8] sm:$0xf]
      %v904 = vld [vmem:[%s2 + $0xbc] sm:$0xf]
      %s905 = scalar_lea.vmem %s2, 192
      %v906 = vld [vmem:[%s905] sm:$0xf]
      %v907 = vld [vmem:[%s905 + $0x4] sm:$0xf]
      %v908 = vld [vmem:[%s905 + $0x8] sm:$0xf]
      %v909 = vld [vmem:[%s905 + $0xc] sm:$0xf]
      %v910 = vld [vmem:[%s905 + $0x10] sm:$0xf]
      %v911 = vld [vmem:[%s905 + $0x14] sm:$0xf]
      %v912 = vld [vmem:[%s905 + $0x18] sm:$0xf]
      %v913 = vld [vmem:[%s905 + $0x1c] sm:$0xf]
      %v914 = vld [vmem:[%s905 + $0x20] sm:$0xf]
      %v915 = vld [vmem:[%s905 + $0x24] sm:$0xf]
      %v916 = vld [vmem:[%s905 + $0x28] sm:$0xf]
      %v917 = vld [vmem:[%s905 + $0x2c] sm:$0xf]
      %v918 = vld [vmem:[%s905 + $0x30] sm:$0xf]
      %v919 = vld [vmem:[%s905 + $0x34] sm:$0xf]
      %v920 = vld [vmem:[%s905 + $0x38] sm:$0xf]
      %v921 = vld [vmem:[%s905 + $0x3c] sm:$0xf]
      %v922 = vld [vmem:[%s905 + $0x40] sm:$0xf]
      %v923 = vld [vmem:[%s905 + $0x44] sm:$0xf]
      %v924 = vld [vmem:[%s905 + $0x48] sm:$0xf]
      %v925 = vld [vmem:[%s905 + $0x4c] sm:$0xf]
      %v926 = vld [vmem:[%s905 + $0x50] sm:$0xf]
      %v927 = vld [vmem:[%s905 + $0x54] sm:$0xf]
      %v928 = vld [vmem:[%s905 + $0x58] sm:$0xf]
      %v929 = vld [vmem:[%s905 + $0x5c] sm:$0xf]
      %v930 = vld [vmem:[%s905 + $0x60] sm:$0xf]
      %v931 = vld [vmem:[%s905 + $0x64] sm:$0xf]
      %v932 = vld [vmem:[%s905 + $0x68] sm:$0xf]
      %v933 = vld [vmem:[%s905 + $0x6c] sm:$0xf]
      %v934 = vld [vmem:[%s905 + $0x70] sm:$0xf]
      %v935 = vld [vmem:[%s905 + $0x74] sm:$0xf]
      %v936 = vld [vmem:[%s905 + $0x78] sm:$0xf]
      %v937 = vld [vmem:[%s905 + $0x7c] sm:$0xf]
      %v938 = vld [vmem:[%s905 + $0x80] sm:$0xf]
      %v939 = vld [vmem:[%s905 + $0x84] sm:$0xf]
      %v940 = vld [vmem:[%s905 + $0x88] sm:$0xf]
      %v941 = vld [vmem:[%s905 + $0x8c] sm:$0xf]
      %v942 = vld [vmem:[%s905 + $0x90] sm:$0xf]
      %v943 = vld [vmem:[%s905 + $0x94] sm:$0xf]
      %v944 = vld [vmem:[%s905 + $0x98] sm:$0xf]
      %v945 = vld [vmem:[%s905 + $0x9c] sm:$0xf]
      %v946 = vld [vmem:[%s905 + $0xa0] sm:$0xf]
      %v947 = vld [vmem:[%s905 + $0xa4] sm:$0xf]
      %v948 = vld [vmem:[%s905 + $0xa8] sm:$0xf]
      %v949 = vld [vmem:[%s905 + $0xac] sm:$0xf]
      %v950 = vld [vmem:[%s905 + $0xb0] sm:$0xf]
      %v951 = vld [vmem:[%s905 + $0xb4] sm:$0xf]
      %v952 = vld [vmem:[%s905 + $0xb8] sm:$0xf]
      %v953 = vld [vmem:[%s905 + $0xbc] sm:$0xf]
      %v1002 = vunpack.c.l.b16 %v906
      %v1003 = vunpack.c.l.b16 %v907
      %v1004 = vunpack.c.l.b16 %v908
      %v1005 = vunpack.c.l.b16 %v909
      %v1006 = vunpack.c.l.b16 %v910
      %v1007 = vunpack.c.l.b16 %v911
      %v1008 = vunpack.c.l.b16 %v912
      %v1009 = vunpack.c.l.b16 %v913
      %v1010 = vunpack.c.l.b16 %v914
      %v1011 = vunpack.c.l.b16 %v915
      %v1012 = vunpack.c.l.b16 %v916
      %v1013 = vunpack.c.l.b16 %v917
      %v1014 = vunpack.c.l.b16 %v918
      %v1015 = vunpack.c.l.b16 %v919
      %v1016 = vunpack.c.l.b16 %v920
      %v1017 = vunpack.c.l.b16 %v921
      %v1018 = vunpack.c.l.b16 %v922
      %v1019 = vunpack.c.l.b16 %v923
      %v1020 = vunpack.c.l.b16 %v924
      %v1021 = vunpack.c.l.b16 %v925
      %v1022 = vunpack.c.l.b16 %v926
      %v1023 = vunpack.c.l.b16 %v927
      %v1024 = vunpack.c.l.b16 %v928
      %v1025 = vunpack.c.l.b16 %v929
      %v1026 = vunpack.c.l.b16 %v930
      %v1027 = vunpack.c.l.b16 %v931
      %v1028 = vunpack.c.l.b16 %v932
      %v1029 = vunpack.c.l.b16 %v933
      %v1030 = vunpack.c.l.b16 %v934
      %v1031 = vunpack.c.l.b16 %v935
      %v1032 = vunpack.c.l.b16 %v936
      %v1033 = vunpack.c.l.b16 %v937
      %v1034 = vunpack.c.l.b16 %v938
      %v1035 = vunpack.c.l.b16 %v939
      %v1036 = vunpack.c.l.b16 %v940
      %v1037 = vunpack.c.l.b16 %v941
      %v1038 = vunpack.c.l.b16 %v942
      %v1039 = vunpack.c.l.b16 %v943
      %v1040 = vunpack.c.l.b16 %v944
      %v1041 = vunpack.c.l.b16 %v945
      %v1042 = vunpack.c.l.b16 %v946
      %v1043 = vunpack.c.l.b16 %v947
      %v1044 = vunpack.c.l.b16 %v948
      %v1045 = vunpack.c.l.b16 %v949
      %v1046 = vunpack.c.l.b16 %v950
      %v1047 = vunpack.c.l.b16 %v951
      %v1048 = vunpack.c.l.b16 %v952
      %v1049 = vunpack.c.l.b16 %v953
      %v1050 = vpack.c.b16 %v1003, %v1002
      %v1051 = vpack.c.b16 %v1005, %v1004
      %v1052 = vpack.c.b16 %v1007, %v1006
      %v1053 = vpack.c.b16 %v1009, %v1008
      %v1054 = vpack.c.b16 %v1011, %v1010
      %v1055 = vpack.c.b16 %v1013, %v1012
      %v1056 = vpack.c.b16 %v1015, %v1014
      %v1057 = vpack.c.b16 %v1017, %v1016
      %v1058 = vpack.c.b16 %v1019, %v1018
      %v1059 = vpack.c.b16 %v1021, %v1020
      %v1060 = vpack.c.b16 %v1023, %v1022
      %v1061 = vpack.c.b16 %v1025, %v1024
      %v1062 = vpack.c.b16 %v1027, %v1026
      %v1063 = vpack.c.b16 %v1029, %v1028
      %v1064 = vpack.c.b16 %v1031, %v1030
      %v1065 = vpack.c.b16 %v1033, %v1032
      %v1066 = vpack.c.b16 %v1035, %v1034
      %v1067 = vpack.c.b16 %v1037, %v1036
      %v1068 = vpack.c.b16 %v1039, %v1038
      %v1069 = vpack.c.b16 %v1041, %v1040
      %v1070 = vpack.c.b16 %v1043, %v1042
      %v1071 = vpack.c.b16 %v1045, %v1044
      %v1072 = vpack.c.b16 %v1047, %v1046
      %v1073 = vpack.c.b16 %v1049, %v1048
      %1098 = vmatprep.subr.bf16.mxu0 0
      %1099 = vmatpush1.bf16.msra.mxu0 %v1050
      %1100 = vmatprep.subr.bf16.mxu0 0
      %1101 = vmatpush1.bf16.msra.mxu0 %v1051
      %1102 = vmatprep.subr.bf16.mxu0 0
      %1103 = vmatpush1.bf16.msra.mxu0 %v1052
      %1104 = vmatprep.subr.bf16.mxu0 0
      %1105 = vmatpush1.bf16.msra.mxu0 %v1053
      %1106 = vmatprep.subr.bf16.mxu0 0
      %1107 = vmatpush1.bf16.msra.mxu0 %v1054
      %1108 = vmatprep.subr.bf16.mxu0 0
      %1109 = vmatpush1.bf16.msra.mxu0 %v1055
      %1110 = vmatprep.subr.bf16.mxu0 0
      %1111 = vmatpush1.bf16.msra.mxu0 %v1056
      %1112 = vmatprep.subr.bf16.mxu0 0
      %1113 = vmatpush1.bf16.msra.mxu0 %v1057
      %1114 = vmatprep.subr.bf16.mxu0 0
      %1115 = vmatpush1.bf16.msra.mxu0 %v1058
      %1116 = vmatprep.subr.bf16.mxu0 0
      %1117 = vmatpush1.bf16.msra.mxu0 %v1059
      %1118 = vmatprep.subr.bf16.mxu0 0
      %1119 = vmatpush1.bf16.msra.mxu0 %v1060
      %1120 = vmatprep.subr.bf16.mxu0 0
      %1121 = vmatpush1.bf16.msra.mxu0 %v1061
      %1122 = vmatprep.subr.bf16.mxu0 0
      %1123 = vmatpush1.bf16.msra.mxu0 %v1062
      %1124 = vmatprep.subr.bf16.mxu0 0
      %1125 = vmatpush1.bf16.msra.mxu0 %v1063
      %1126 = vmatprep.subr.bf16.mxu0 0
      %1127 = vmatpush1.bf16.msra.mxu0 %v1064
      %1128 = vmatprep.subr.bf16.mxu0 0
      %1129 = vmatpush1.bf16.msra.mxu0 %v1065
      %1130 = vmatprep.mubr.bf16.mxu0 %v708
      %1131 = vmatmul.mubr.bf16.gmra.mrb[0].mxu0 %v655
      %v1132 = vpop.f32.mrb[0].mxu0
      %v1133 = vadd.f32 0.0, %v1132
      %v1134 = vpop.f32.mrb[0].mxu0
      %v1135 = vpop.f32.mrb[0].mxu0
      %v1136 = vadd.f32 0.0, %v1135
      %v1137 = vpop.f32.mrb[0].mxu0
      %1138 = vmatprep.mubr.bf16.mxu0 %v720
      %1139 = vmatmul.mubr.bf16.gmra.mrb[0].mxu0 %v656
      %v1140 = vpop.f32.mrb[0].mxu0
      %v1141 = vadd.f32 0.0, %v1140
      %v1142 = vpop.f32.mrb[0].mxu0
      %v1143 = vpop.f32.mrb[0].mxu0
      %v1144 = vadd.f32 0.0, %v1143
      %v1145 = vpop.f32.mrb[0].mxu0
      %1146 = vmatprep.mubr.bf16.mxu0 %v732
      %1147 = vmatmul.mubr.bf16.gmra.mrb[0].mxu0 %v657
      %v1148 = vpop.f32.mrb[0].mxu0
      %v1149 = vadd.f32 0.0, %v1148
      %v1150 = vpop.f32.mrb[0].mxu0
      %v1151 = vpop.f32.mrb[0].mxu0
      %v1152 = vadd.f32 0.0, %v1151
      %v1153 = vpop.f32.mrb[0].mxu0
      %1154 = vmatprep.mubr.bf16.mxu0 %v744
      %1155 = vmatmul.mubr.bf16.gmra.mrb[0].mxu0 %v658
      %v1156 = vpop.f32.mrb[0].mxu0
      %v1157 = vadd.f32 0.0, %v1156
      %v1158 = vpop.f32.mrb[0].mxu0
      %v1159 = vpop.f32.mrb[0].mxu0
      %v1160 = vadd.f32 0.0, %v1159
      %v1161 = vpop.f32.mrb[0].mxu0
      %1162 = vmatprep.mubr.bf16.mxu0 %v756
      %1163 = vmatmul.mubr.bf16.gmra.mrb[0].mxu0 %v659
      %v1164 = vpop.f32.mrb[0].mxu0
      %v1165 = vadd.f32 0.0, %v1164
      %v1166 = vpop.f32.mrb[0].mxu0
      %v1167 = vpop.f32.mrb[0].mxu0
      %v1168 = vadd.f32 0.0, %v1167
      %v1169 = vpop.f32.mrb[0].mxu0
      %1170 = vmatprep.mubr.bf16.mxu0 %v768
      %1171 = vmatmul.mubr.bf16.gmra.mrb[0].mxu0 %v660
      %v1172 = vpop.f32.mrb[0].mxu0
      %v1173 = vadd.f32 0.0, %v1172
      %v1174 = vpop.f32.mrb[0].mxu0
      %v1175 = vpop.f32.mrb[0].mxu0
      %v1176 = vadd.f32 0.0, %v1175
      %v1177 = vpop.f32.mrb[0].mxu0
      %1178 = vmatprep.mubr.bf16.mxu0 %v780
      %1179 = vmatmul.mubr.bf16.gmra.mrb[0].mxu0 %v661
      %v1180 = vpop.f32.mrb[0].mxu0
      %v1181 = vadd.f32 0.0, %v1180
      %v1182 = vpop.f32.mrb[0].mxu0
      %v1183 = vpop.f32.mrb[0].mxu0
      %v1184 = vadd.f32 0.0, %v1183
      %v1185 = vpop.f32.mrb[0].mxu0
      %1186 = vmatprep.mubr.bf16.mxu0 %v792
      %1187 = vmatmul.mubr.bf16.gmra.mrb[0].mxu0 %v662
      %v1188 = vpop.f32.mrb[0].mxu0
      %v1189 = vadd.f32 0.0, %v1188
      %v1190 = vpop.f32.mrb[0].mxu0
      %v1191 = vpop.f32.mrb[0].mxu0
      %v1192 = vadd.f32 0.0, %v1191
      %v1193 = vpop.f32.mrb[0].mxu0
      %1194 = vdwg.mxu0
      %1195 = vmatprep.subr.bf16.mxu0 0
      %1196 = vmatpush1.bf16.msra.mxu0 %v1066
      %1197 = vmatprep.subr.bf16.mxu0 0
      %1198 = vmatpush1.bf16.msra.mxu0 %v1067
      %1199 = vmatprep.subr.bf16.mxu0 0
      %1200 = vmatpush1.bf16.msra.mxu0 %v1068
      %1201 = vmatprep.subr.bf16.mxu0 0
      %1202 = vmatpush1.bf16.msra.mxu0 %v1069
      %1203 = vmatprep.subr.bf16.mxu0 0
      %1204 = vmatpush1.bf16.msra.mxu0 %v1070
      %1205 = vmatprep.subr.bf16.mxu0 0
      %1206 = vmatpush1.bf16.msra.mxu0 %v1071
      %1207 = vmatprep.subr.bf16.mxu0 0
      %1208 = vmatpush1.bf16.msra.mxu0 %v1072
      %1209 = vmatprep.subr.bf16.mxu0 0
      %1210 = vmatpush1.bf16.msra.mxu0 %v1073
      %1211 = vmatprep.subr.bf16.mxu0 0
      %1212 = vmatpush1.bf16.msra.mxu0 0
      %1213 = vmatprep.subr.bf16.mxu0 0
      %1214 = vmatpush1.bf16.msra.mxu0 0
      %1215 = vmatprep.subr.bf16.mxu0 0
      %1216 = vmatpush1.bf16.msra.mxu0 0
      %1217 = vmatprep.subr.bf16.mxu0 0
      %1218 = vmatpush1.bf16.msra.mxu0 0
      %1219 = vmatprep.subr.bf16.mxu0 0
      %1220 = vmatpush1.bf16.msra.mxu0 0
      %1221 = vmatprep.subr.bf16.mxu0 0
      %1222 = vmatpush1.bf16.msra.mxu0 0
      %1223 = vmatprep.subr.bf16.mxu0 0
      %1224 = vmatpush1.bf16.msra.mxu0 0
      %1225 = vmatprep.subr.bf16.mxu0 0
      %1226 = vmatpush1.bf16.msra.mxu0 0
      %1227 = vmatprep.mubr.bf16.mxu0 0
      %1228 = vmatmul.mubr.bf16.gmra.mrb[0].mxu0 %v821
      %v1229 = vpop.f32.mrb[0].mxu0
      %v1230 = vadd.f32 %v1133, %v1229
      %v1231 = vpop.f32.mrb[0].mxu0
      %v1232 = vpop.f32.mrb[0].mxu0
      %v1233 = vadd.f32 %v1136, %v1232
      %v1234 = vpop.f32.mrb[0].mxu0
      %1235 = vmatprep.mubr.bf16.mxu0 0
      %1236 = vmatmul.mubr.bf16.gmra.mrb[0].mxu0 %v824
      %v1237 = vpop.f32.mrb[0].mxu0
      %v1238 = vadd.f32 %v1141, %v1237
      %v1239 = vpop.f32.mrb[0].mxu0
      %v1240 = vpop.f32.mrb[0].mxu0
      %v1241 = vadd.f32 %v1144, %v1240
      %v1242 = vpop.f32.mrb[0].mxu0
      %1243 = vmatprep.mubr.bf16.mxu0 0
      %1244 = vmatmul.mubr.bf16.gmra.mrb[0].mxu0 %v827
      %v1245 = vpop.f32.mrb[0].mxu0
      %v1246 = vadd.f32 %v1149, %v1245
      %v1247 = vpop.f32.mrb[0].mxu0
      %v1248 = vpop.f32.mrb[0].mxu0
      %v1249 = vadd.f32 %v1152, %v1248
      %v1250 = vpop.f32.mrb[0].mxu0
      %1251 = vmatprep.mubr.bf16.mxu0 0
      %1252 = vmatmul.mubr.bf16.gmra.mrb[0].mxu0 %v830
      %v1253 = vpop.f32.mrb[0].mxu0
      %v1254 = vadd.f32 %v1157, %v1253
      %v1255 = vpop.f32.mrb[0].mxu0
      %v1256 = vpop.f32.mrb[0].mxu0
      %v1257 = vadd.f32 %v1160, %v1256
      %v1258 = vpop.f32.mrb[0].mxu0
      %1259 = vmatprep.mubr.bf16.mxu0 0
      %1260 = vmatmul.mubr.bf16.gmra.mrb[0].mxu0 %v833
      %v1261 = vpop.f32.mrb[0].mxu0
      %v1262 = vadd.f32 %v1165, %v1261
      %v1263 = vpop.f32.mrb[0].mxu0
      %v1264 = vpop.f32.mrb[0].mxu0
      %v1265 = vadd.f32 %v1168, %v1264
      %v1266 = vpop.f32.mrb[0].mxu0
      %1267 = vmatprep.mubr.bf16.mxu0 0
      %1268 = vmatmul.mubr.bf16.gmra.mrb[0].mxu0 %v836
      %v1269 = vpop.f32.mrb[0].mxu0
      %v1270 = vadd.f32 %v1173, %v1269
      %v1271 = vpop.f32.mrb[0].mxu0
      %v1272 = vpop.f32.mrb[0].mxu0
      %v1273 = vadd.f32 %v1176, %v1272
      %v1274 = vpop.f32.mrb[0].mxu0
      %1275 = vmatprep.mubr.bf16.mxu0 0
      %1276 = vmatmul.mubr.bf16.gmra.mrb[0].mxu0 %v839
      %v1277 = vpop.f32.mrb[0].mxu0
      %v1278 = vadd.f32 %v1181, %v1277
      %v1279 = vpop.f32.mrb[0].mxu0
      %v1280 = vpop.f32.mrb[0].mxu0
      %v1281 = vadd.f32 %v1184, %v1280
      %v1282 = vpop.f32.mrb[0].mxu0
      %1283 = vmatprep.mubr.bf16.mxu0 0
      %1284 = vmatmul.mubr.bf16.gmra.mrb[0].mxu0 %v842
      %v1285 = vpop.f32.mrb[0].mxu0
      %v1286 = vadd.f32 %v1189, %v1285
      %v1287 = vpop.f32.mrb[0].mxu0
      %v1288 = vpop.f32.mrb[0].mxu0
      %v1289 = vadd.f32 %v1192, %v1288
      %v1290 = vpop.f32.mrb[0].mxu0
      %1291 = vdwg.mxu0
      %v1340 = vunpack.c.l.b16 %v857
      %v1341 = vunpack.c.l.b16 %v858
      %v1342 = vunpack.c.l.b16 %v859
      %v1343 = vunpack.c.l.b16 %v860
      %v1344 = vunpack.c.l.b16 %v861
      %v1345 = vunpack.c.l.b16 %v862
      %v1346 = vunpack.c.l.b16 %v863
      %v1347 = vunpack.c.l.b16 %v864
      %v1348 = vunpack.c.l.b16 %v865
      %v1349 = vunpack.c.l.b16 %v866
      %v1350 = vunpack.c.l.b16 %v867
      %v1351 = vunpack.c.l.b16 %v868
      %v1352 = vunpack.c.l.b16 %v869
      %v1353 = vunpack.c.l.b16 %v870
      %v1354 = vunpack.c.l.b16 %v871
      %v1355 = vunpack.c.l.b16 %v872
      %v1356 = vunpack.c.l.b16 %v873
      %v1357 = vunpack.c.l.b16 %v874
      %v1358 = vunpack.c.l.b16 %v875
      %v1359 = vunpack.c.l.b16 %v876
      %v1360 = vunpack.c.l.b16 %v877
      %v1361 = vunpack.c.l.b16 %v878
      %v1362 = vunpack.c.l.b16 %v879
      %v1363 = vunpack.c.l.b16 %v880
      %v1364 = vunpack.c.l.b16 %v881
      %v1365 = vunpack.c.l.b16 %v882
      %v1366 = vunpack.c.l.b16 %v883
      %v1367 = vunpack.c.l.b16 %v884
      %v1368 = vunpack.c.l.b16 %v885
      %v1369 = vunpack.c.l.b16 %v886
      %v1370 = vunpack.c.l.b16 %v887
      %v1371 = vunpack.c.l.b16 %v888
      %v1372 = vunpack.c.l.b16 %v889
      %v1373 = vunpack.c.l.b16 %v890
      %v1374 = vunpack.c.l.b16 %v891
      %v1375 = vunpack.c.l.b16 %v892
      %v1376 = vunpack.c.l.b16 %v893
      %v1377 = vunpack.c.l.b16 %v894
      %v1378 = vunpack.c.l.b16 %v895
      %v1379 = vunpack.c.l.b16 %v896
      %v1380 = vunpack.c.l.b16 %v897
      %v1381 = vunpack.c.l.b16 %v898
      %v1382 = vunpack.c.l.b16 %v899
      %v1383 = vunpack.c.l.b16 %v900
      %v1384 = vunpack.c.l.b16 %v901
      %v1385 = vunpack.c.l.b16 %v902
      %v1386 = vunpack.c.l.b16 %v903
      %v1387 = vunpack.c.l.b16 %v904
      %v1388 = vpack.c.b16 %v1341, %v1340
      %v1389 = vpack.c.b16 %v1343, %v1342
      %v1390 = vpack.c.b16 %v1345, %v1344
      %v1391 = vpack.c.b16 %v1347, %v1346
      %v1392 = vpack.c.b16 %v1349, %v1348
      %v1393 = vpack.c.b16 %v1351, %v1350
      %v1394 = vpack.c.b16 %v1353, %v1352
      %v1395 = vpack.c.b16 %v1355, %v1354
      %v1396 = vpack.c.b16 %v1357, %v1356
      %v1397 = vpack.c.b16 %v1359, %v1358
      %v1398 = vpack.c.b16 %v1361, %v1360
      %v1399 = vpack.c.b16 %v1363, %v1362
      %v1400 = vpack.c.b16 %v1365, %v1364
      %v1401 = vpack.c.b16 %v1367, %v1366
      %v1402 = vpack.c.b16 %v1369, %v1368
      %v1403 = vpack.c.b16 %v1371, %v1370
      %v1404 = vpack.c.b16 %v1373, %v1372
      %v1405 = vpack.c.b16 %v1375, %v1374
      %v1406 = vpack.c.b16 %v1377, %v1376
      %v1407 = vpack.c.b16 %v1379, %v1378
      %v1408 = vpack.c.b16 %v1381, %v1380
      %v1409 = vpack.c.b16 %v1383, %v1382
      %v1410 = vpack.c.b16 %v1385, %v1384
      %v1411 = vpack.c.b16 %v1387, %v1386
      %1436 = vmatprep.subr.bf16.mxu0 0
      %1437 = vmatpush1.bf16.msra.mxu0 %v1388
      %1438 = vmatprep.subr.bf16.mxu0 0
      %1439 = vmatpush1.bf16.msra.mxu0 %v1389
      %1440 = vmatprep.subr.bf16.mxu0 0
      %1441 = vmatpush1.bf16.msra.mxu0 %v1390
      %1442 = vmatprep.subr.bf16.mxu0 0
      %1443 = vmatpush1.bf16.msra.mxu0 %v1391
      %1444 = vmatprep.subr.bf16.mxu0 0
      %1445 = vmatpush1.bf16.msra.mxu0 %v1392
      %1446 = vmatprep.subr.bf16.mxu0 0
      %1447 = vmatpush1.bf16.msra.mxu0 %v1393
      %1448 = vmatprep.subr.bf16.mxu0 0
      %1449 = vmatpush1.bf16.msra.mxu0 %v1394
      %1450 = vmatprep.subr.bf16.mxu0 0
      %1451 = vmatpush1.bf16.msra.mxu0 %v1395
      %1452 = vmatprep.subr.bf16.mxu0 0
      %1453 = vmatpush1.bf16.msra.mxu0 %v1396
      %1454 = vmatprep.subr.bf16.mxu0 0
      %1455 = vmatpush1.bf16.msra.mxu0 %v1397
      %1456 = vmatprep.subr.bf16.mxu0 0
      %1457 = vmatpush1.bf16.msra.mxu0 %v1398
      %1458 = vmatprep.subr.bf16.mxu0 0
      %1459 = vmatpush1.bf16.msra.mxu0 %v1399
      %1460 = vmatprep.subr.bf16.mxu0 0
      %1461 = vmatpush1.bf16.msra.mxu0 %v1400
      %1462 = vmatprep.subr.bf16.mxu0 0
      %1463 = vmatpush1.bf16.msra.mxu0 %v1401
      %1464 = vmatprep.subr.bf16.mxu0 0
      %1465 = vmatpush1.bf16.msra.mxu0 %v1402
      %1466 = vmatprep.subr.bf16.mxu0 0
      %1467 = vmatpush1.bf16.msra.mxu0 %v1403
      %1468 = vmatprep.mubr.bf16.mxu0 %v696
      %1469 = vmatmul.mubr.bf16.gmra.mrb[0].mxu0 %v654
      %v1470 = vpop.f32.mrb[0].mxu0
      %v1471 = vadd.f32 %v1230, %v1470
      %v1472 = vpop.f32.mrb[0].mxu0
      %v1473 = vpop.f32.mrb[0].mxu0
      %v1474 = vadd.f32 %v1233, %v1473
      %v1475 = vpop.f32.mrb[0].mxu0
      %1476 = vmatprep.mubr.bf16.mxu0 %v708
      %1477 = vmatmul.mubr.bf16.gmra.mrb[0].mxu0 %v655
      %v1478 = vpop.f32.mrb[0].mxu0
      %v1479 = vadd.f32 %v1238, %v1478
      %v1480 = vpop.f32.mrb[0].mxu0
      %v1481 = vpop.f32.mrb[0].mxu0
      %v1482 = vadd.f32 %v1241, %v1481
      %v1483 = vpop.f32.mrb[0].mxu0
      %1484 = vmatprep.mubr.bf16.mxu0 %v720
      %1485 = vmatmul.mubr.bf16.gmra.mrb[0].mxu0 %v656
      %v1486 = vpop.f32.mrb[0].mxu0
      %v1487 = vadd.f32 %v1246, %v1486
      %v1488 = vpop.f32.mrb[0].mxu0
      %v1489 = vpop.f32.mrb[0].mxu0
      %v1490 = vadd.f32 %v1249, %v1489
      %v1491 = vpop.f32.mrb[0].mxu0
      %1492 = vmatprep.mubr.bf16.mxu0 %v732
      %1493 = vmatmul.mubr.bf16.gmra.mrb[0].mxu0 %v657
      %v1494 = vpop.f32.mrb[0].mxu0
      %v1495 = vadd.f32 %v1254, %v1494
      %v1496 = vpop.f32.mrb[0].mxu0
      %v1497 = vpop.f32.mrb[0].mxu0
      %v1498 = vadd.f32 %v1257, %v1497
      %v1499 = vpop.f32.mrb[0].mxu0
      %1500 = vmatprep.mubr.bf16.mxu0 %v744
      %1501 = vmatmul.mubr.bf16.gmra.mrb[0].mxu0 %v658
      %v1502 = vpop.f32.mrb[0].mxu0
      %v1503 = vadd.f32 %v1262, %v1502
      %v1504 = vpop.f32.mrb[0].mxu0
      %v1505 = vpop.f32.mrb[0].mxu0
      %v1506 = vadd.f32 %v1265, %v1505
      %v1507 = vpop.f32.mrb[0].mxu0
      %1508 = vmatprep.mubr.bf16.mxu0 %v756
      %1509 = vmatmul.mubr.bf16.gmra.mrb[0].mxu0 %v659
      %v1510 = vpop.f32.mrb[0].mxu0
      %v1511 = vadd.f32 %v1270, %v1510
      %v1512 = vpop.f32.mrb[0].mxu0
      %v1513 = vpop.f32.mrb[0].mxu0
      %v1514 = vadd.f32 %v1273, %v1513
      %v1515 = vpop.f32.mrb[0].mxu0
      %1516 = vmatprep.mubr.bf16.mxu0 %v768
      %1517 = vmatmul.mubr.bf16.gmra.mrb[0].mxu0 %v660
      %v1518 = vpop.f32.mrb[0].mxu0
      %v1519 = vadd.f32 %v1278, %v1518
      %v1520 = vpop.f32.mrb[0].mxu0
      %v1521 = vpop.f32.mrb[0].mxu0
      %v1522 = vadd.f32 %v1281, %v1521
      %v1523 = vpop.f32.mrb[0].mxu0
      %1524 = vmatprep.mubr.bf16.mxu0 %v780
      %1525 = vmatmul.mubr.bf16.gmra.mrb[0].mxu0 %v661
      %v1526 = vpop.f32.mrb[0].mxu0
      %v1527 = vadd.f32 %v1286, %v1526
      %v1528 = vpop.f32.mrb[0].mxu0
      %v1529 = vpop.f32.mrb[0].mxu0
      %v1530 = vadd.f32 %v1289, %v1529
      %v1531 = vpop.f32.mrb[0].mxu0
      %1532 = vdwg.mxu0
      %1533 = vmatprep.subr.bf16.mxu0 0
      %1534 = vmatpush1.bf16.msra.mxu0 %v1404
      %1535 = vmatprep.subr.bf16.mxu0 0
      %1536 = vmatpush1.bf16.msra.mxu0 %v1405
      %1537 = vmatprep.subr.bf16.mxu0 0
      %1538 = vmatpush1.bf16.msra.mxu0 %v1406
      %1539 = vmatprep.subr.bf16.mxu0 0
      %1540 = vmatpush1.bf16.msra.mxu0 %v1407
      %1541 = vmatprep.subr.bf16.mxu0 0
      %1542 = vmatpush1.bf16.msra.mxu0 %v1408
      %1543 = vmatprep.subr.bf16.mxu0 0
      %1544 = vmatpush1.bf16.msra.mxu0 %v1409
      %1545 = vmatprep.subr.bf16.mxu0 0
      %1546 = vmatpush1.bf16.msra.mxu0 %v1410
      %1547 = vmatprep.subr.bf16.mxu0 0
      %1548 = vmatpush1.bf16.msra.mxu0 %v1411
      %1549 = vmatprep.subr.bf16.mxu0 0
      %1550 = vmatpush1.bf16.msra.mxu0 0
      %1551 = vmatprep.subr.bf16.mxu0 0
      %1552 = vmatpush1.bf16.msra.mxu0 0
      %1553 = vmatprep.subr.bf16.mxu0 0
      %1554 = vmatpush1.bf16.msra.mxu0 0
      %1555 = vmatprep.subr.bf16.mxu0 0
      %1556 = vmatpush1.bf16.msra.mxu0 0
      %1557 = vmatprep.subr.bf16.mxu0 0
      %1558 = vmatpush1.bf16.msra.mxu0 0
      %1559 = vmatprep.subr.bf16.mxu0 0
      %1560 = vmatpush1.bf16.msra.mxu0 0
      %1561 = vmatprep.subr.bf16.mxu0 0
      %1562 = vmatpush1.bf16.msra.mxu0 0
      %1563 = vmatprep.subr.bf16.mxu0 0
      %1564 = vmatpush1.bf16.msra.mxu0 0
      %1565 = vmatprep.mubr.bf16.mxu0 0
      %1566 = vmatmul.mubr.bf16.gmra.mrb[0].mxu0 %v818
      %v1567 = vpop.f32.mrb[0].mxu0
      %v1568 = vadd.f32 %v1471, %v1567
      %v1569 = vpop.f32.mrb[0].mxu0
      %v1570 = vpop.f32.mrb[0].mxu0
      %v1571 = vadd.f32 %v1474, %v1570
      %v1572 = vpop.f32.mrb[0].mxu0
      %1573 = vmatprep.mubr.bf16.mxu0 0
      %1574 = vmatmul.mubr.bf16.gmra.mrb[0].mxu0 %v821
      %v1575 = vpop.f32.mrb[0].mxu0
      %v1576 = vadd.f32 %v1479, %v1575
      %v1577 = vpop.f32.mrb[0].mxu0
      %v1578 = vpop.f32.mrb[0].mxu0
      %v1579 = vadd.f32 %v1482, %v1578
      %v1580 = vpop.f32.mrb[0].mxu0
      %1581 = vmatprep.mubr.bf16.mxu0 0
      %1582 = vmatmul.mubr.bf16.gmra.mrb[0].mxu0 %v824
      %v1583 = vpop.f32.mrb[0].mxu0
      %v1584 = vadd.f32 %v1487, %v1583
      %v1585 = vpop.f32.mrb[0].mxu0
      %v1586 = vpop.f32.mrb[0].mxu0
      %v1587 = vadd.f32 %v1490, %v1586
      %v1588 = vpop.f32.mrb[0].mxu0
      %1589 = vmatprep.mubr.bf16.mxu0 0
      %1590 = vmatmul.mubr.bf16.gmra.mrb[0].mxu0 %v827
      %v1591 = vpop.f32.mrb[0].mxu0
      %v1592 = vadd.f32 %v1495, %v1591
      %v1593 = vpop.f32.mrb[0].mxu0
      %v1594 = vpop.f32.mrb[0].mxu0
      %v1595 = vadd.f32 %v1498, %v1594
      %v1596 = vpop.f32.mrb[0].mxu0
      %1597 = vmatprep.mubr.bf16.mxu0 0
      %1598 = vmatmul.mubr.bf16.gmra.mrb[0].mxu0 %v830
      %v1599 = vpop.f32.mrb[0].mxu0
      %v1600 = vadd.f32 %v1503, %v1599
      %v1601 = vpop.f32.mrb[0].mxu0
      %v1602 = vpop.f32.mrb[0].mxu0
      %v1603 = vadd.f32 %v1506, %v1602
      %v1604 = vpop.f32.mrb[0].mxu0
      %1605 = vmatprep.mubr.bf16.mxu0 0
      %1606 = vmatmul.mubr.bf16.gmra.mrb[0].mxu0 %v833
      %v1607 = vpop.f32.mrb[0].mxu0
      %v1608 = vadd.f32 %v1511, %v1607
      %v1609 = vpop.f32.mrb[0].mxu0
      %v1610 = vpop.f32.mrb[0].mxu0
      %v1611 = vadd.f32 %v1514, %v1610
      %v1612 = vpop.f32.mrb[0].mxu0
      %1613 = vmatprep.mubr.bf16.mxu0 0
      %1614 = vmatmul.mubr.bf16.gmra.mrb[0].mxu0 %v836
      %v1615 = vpop.f32.mrb[0].mxu0
      %v1616 = vadd.f32 %v1519, %v1615
      %v1617 = vpop.f32.mrb[0].mxu0
      %v1618 = vpop.f32.mrb[0].mxu0
      %v1619 = vadd.f32 %v1522, %v1618
      %v1620 = vpop.f32.mrb[0].mxu0
      %1621 = vmatprep.mubr.bf16.mxu0 0
      %1622 = vmatmul.mubr.bf16.gmra.mrb[0].mxu0 %v839
      %v1623 = vpop.f32.mrb[0].mxu0
      %v1624 = vadd.f32 %v1527, %v1623
      %v1625 = vpop.f32.mrb[0].mxu0
      %v1626 = vpop.f32.mrb[0].mxu0
      %v1627 = vadd.f32 %v1530, %v1626
      %v1628 = vpop.f32.mrb[0].mxu0
      %1629 = vdwg.mxu0
      %s1630 = scalar_lea.vmem %s2, 384
      %v1631 = vld [vmem:[%s1630] sm:$0xf]
      %v1632 = vld [vmem:[%s1630 + $0x4] sm:$0xf]
      %v1633 = vld [vmem:[%s1630 + $0x8] sm:$0xf]
      %v1634 = vld [vmem:[%s1630 + $0xc] sm:$0xf]
      %v1635 = vld [vmem:[%s1630 + $0x10] sm:$0xf]
      %v1636 = vld [vmem:[%s1630 + $0x14] sm:$0xf]
      %v1637 = vld [vmem:[%s1630 + $0x18] sm:$0xf]
      %v1638 = vld [vmem:[%s1630 + $0x1c] sm:$0xf]
      %v1639 = vld [vmem:[%s1630 + $0x20] sm:$0xf]
      %v1640 = vld [vmem:[%s1630 + $0x24] sm:$0xf]
      %v1641 = vld [vmem:[%s1630 + $0x28] sm:$0xf]
      %v1642 = vld [vmem:[%s1630 + $0x2c] sm:$0xf]
      %v1643 = vld [vmem:[%s1630 + $0x30] sm:$0xf]
      %v1644 = vld [vmem:[%s1630 + $0x34] sm:$0xf]
      %v1645 = vld [vmem:[%s1630 + $0x38] sm:$0xf]
      %v1646 = vld [vmem:[%s1630 + $0x3c] sm:$0xf]
      %v1647 = vld [vmem:[%s1630 + $0x40] sm:$0xf]
      %v1648 = vld [vmem:[%s1630 + $0x44] sm:$0xf]
      %v1649 = vld [vmem:[%s1630 + $0x48] sm:$0xf]
      %v1650 = vld [vmem:[%s1630 + $0x4c] sm:$0xf]
      %v1651 = vld [vmem:[%s1630 + $0x50] sm:$0xf]
      %v1652 = vld [vmem:[%s1630 + $0x54] sm:$0xf]
      %v1653 = vld [vmem:[%s1630 + $0x58] sm:$0xf]
      %v1654 = vld [vmem:[%s1630 + $0x5c] sm:$0xf]
      %v1655 = vld [vmem:[%s1630 + $0x60] sm:$0xf]
      %v1656 = vld [vmem:[%s1630 + $0x64] sm:$0xf]
      %v1657 = vld [vmem:[%s1630 + $0x68] sm:$0xf]
      %v1658 = vld [vmem:[%s1630 + $0x6c] sm:$0xf]
      %v1659 = vld [vmem:[%s1630 + $0x70] sm:$0xf]
      %v1660 = vld [vmem:[%s1630 + $0x74] sm:$0xf]
      %v1661 = vld [vmem:[%s1630 + $0x78] sm:$0xf]
      %v1662 = vld [vmem:[%s1630 + $0x7c] sm:$0xf]
      %v1663 = vld [vmem:[%s1630 + $0x80] sm:$0xf]
      %v1664 = vld [vmem:[%s1630 + $0x84] sm:$0xf]
      %v1665 = vld [vmem:[%s1630 + $0x88] sm:$0xf]
      %v1666 = vld [vmem:[%s1630 + $0x8c] sm:$0xf]
      %v1667 = vld [vmem:[%s1630 + $0x90] sm:$0xf]
      %v1668 = vld [vmem:[%s1630 + $0x94] sm:$0xf]
      %v1669 = vld [vmem:[%s1630 + $0x98] sm:$0xf]
      %v1670 = vld [vmem:[%s1630 + $0x9c] sm:$0xf]
      %v1671 = vld [vmem:[%s1630 + $0xa0] sm:$0xf]
      %v1672 = vld [vmem:[%s1630 + $0xa4] sm:$0xf]
      %v1673 = vld [vmem:[%s1630 + $0xa8] sm:$0xf]
      %v1674 = vld [vmem:[%s1630 + $0xac] sm:$0xf]
      %v1675 = vld [vmem:[%s1630 + $0xb0] sm:$0xf]
      %v1676 = vld [vmem:[%s1630 + $0xb4] sm:$0xf]
      %v1677 = vld [vmem:[%s1630 + $0xb8] sm:$0xf]
      %v1678 = vld [vmem:[%s1630 + $0xbc] sm:$0xf]
      %v1727 = vunpack.c.l.b16 %v1631
      %v1728 = vunpack.c.l.b16 %v1632
      %v1729 = vunpack.c.l.b16 %v1633
      %v1730 = vunpack.c.l.b16 %v1634
      %v1731 = vunpack.c.l.b16 %v1635
      %v1732 = vunpack.c.l.b16 %v1636
      %v1733 = vunpack.c.l.b16 %v1637
      %v1734 = vunpack.c.l.b16 %v1638
      %v1735 = vunpack.c.l.b16 %v1639
      %v1736 = vunpack.c.l.b16 %v1640
      %v1737 = vunpack.c.l.b16 %v1641
      %v1738 = vunpack.c.l.b16 %v1642
      %v1739 = vunpack.c.l.b16 %v1643
      %v1740 = vunpack.c.l.b16 %v1644
      %v1741 = vunpack.c.l.b16 %v1645
      %v1742 = vunpack.c.l.b16 %v1646
      %v1743 = vunpack.c.l.b16 %v1647
      %v1744 = vunpack.c.l.b16 %v1648
      %v1745 = vunpack.c.l.b16 %v1649
      %v1746 = vunpack.c.l.b16 %v1650
      %v1747 = vunpack.c.l.b16 %v1651
      %v1748 = vunpack.c.l.b16 %v1652
      %v1749 = vunpack.c.l.b16 %v1653
      %v1750 = vunpack.c.l.b16 %v1654
      %v1751 = vunpack.c.l.b16 %v1655
      %v1752 = vunpack.c.l.b16 %v1656
      %v1753 = vunpack.c.l.b16 %v1657
      %v1754 = vunpack.c.l.b16 %v1658
      %v1755 = vunpack.c.l.b16 %v1659
      %v1756 = vunpack.c.l.b16 %v1660
      %v1757 = vunpack.c.l.b16 %v1661
      %v1758 = vunpack.c.l.b16 %v1662
      %v1759 = vunpack.c.l.b16 %v1663
      %v1760 = vunpack.c.l.b16 %v1664
      %v1761 = vunpack.c.l.b16 %v1665
      %v1762 = vunpack.c.l.b16 %v1666
      %v1763 = vunpack.c.l.b16 %v1667
      %v1764 = vunpack.c.l.b16 %v1668
      %v1765 = vunpack.c.l.b16 %v1669
      %v1766 = vunpack.c.l.b16 %v1670
      %v1767 = vunpack.c.l.b16 %v1671
      %v1768 = vunpack.c.l.b16 %v1672
      %v1769 = vunpack.c.l.b16 %v1673
      %v1770 = vunpack.c.l.b16 %v1674
      %v1771 = vunpack.c.l.b16 %v1675
      %v1772 = vunpack.c.l.b16 %v1676
      %v1773 = vunpack.c.l.b16 %v1677
      %v1774 = vunpack.c.l.b16 %v1678
      %v1775 = vpack.c.b16 %v1728, %v1727
      %v1776 = vpack.c.b16 %v1730, %v1729
      %v1777 = vpack.c.b16 %v1732, %v1731
      %v1778 = vpack.c.b16 %v1734, %v1733
      %v1779 = vpack.c.b16 %v1736, %v1735
      %v1780 = vpack.c.b16 %v1738, %v1737
      %v1781 = vpack.c.b16 %v1740, %v1739
      %v1782 = vpack.c.b16 %v1742, %v1741
      %v1783 = vpack.c.b16 %v1744, %v1743
      %v1784 = vpack.c.b16 %v1746, %v1745
      %v1785 = vpack.c.b16 %v1748, %v1747
      %v1786 = vpack.c.b16 %v1750, %v1749
      %v1787 = vpack.c.b16 %v1752, %v1751
      %v1788 = vpack.c.b16 %v1754, %v1753
      %v1789 = vpack.c.b16 %v1756, %v1755
      %v1790 = vpack.c.b16 %v1758, %v1757
      %v1791 = vpack.c.b16 %v1760, %v1759
      %v1792 = vpack.c.b16 %v1762, %v1761
      %v1793 = vpack.c.b16 %v1764, %v1763
      %v1794 = vpack.c.b16 %v1766, %v1765
      %v1795 = vpack.c.b16 %v1768, %v1767
      %v1796 = vpack.c.b16 %v1770, %v1769
      %v1797 = vpack.c.b16 %v1772, %v1771
      %v1798 = vpack.c.b16 %v1774, %v1773
      %1823 = vmatprep.subr.bf16.mxu0 0
      %1824 = vmatpush1.bf16.msra.mxu0 %v1775
      %1825 = vmatprep.subr.bf16.mxu0 0
      %1826 = vmatpush1.bf16.msra.mxu0 %v1776
      %1827 = vmatprep.subr.bf16.mxu0 0
      %1828 = vmatpush1.bf16.msra.mxu0 %v1777
      %1829 = vmatprep.subr.bf16.mxu0 0
      %1830 = vmatpush1.bf16.msra.mxu0 %v1778
      %1831 = vmatprep.subr.bf16.mxu0 0
      %1832 = vmatpush1.bf16.msra.mxu0 %v1779
      %1833 = vmatprep.subr.bf16.mxu0 0
      %1834 = vmatpush1.bf16.msra.mxu0 %v1780
      %1835 = vmatprep.subr.bf16.mxu0 0
      %1836 = vmatpush1.bf16.msra.mxu0 %v1781
      %1837 = vmatprep.subr.bf16.mxu0 0
      %1838 = vmatpush1.bf16.msra.mxu0 %v1782
      %1839 = vmatprep.subr.bf16.mxu0 0
      %1840 = vmatpush1.bf16.msra.mxu0 %v1783
      %1841 = vmatprep.subr.bf16.mxu0 0
      %1842 = vmatpush1.bf16.msra.mxu0 %v1784
      %1843 = vmatprep.subr.bf16.mxu0 0
      %1844 = vmatpush1.bf16.msra.mxu0 %v1785
      %1845 = vmatprep.subr.bf16.mxu0 0
      %1846 = vmatpush1.bf16.msra.mxu0 %v1786
      %1847 = vmatprep.subr.bf16.mxu0 0
      %1848 = vmatpush1.bf16.msra.mxu0 %v1787
      %1849 = vmatprep.subr.bf16.mxu0 0
      %1850 = vmatpush1.bf16.msra.mxu0 %v1788
      %1851 = vmatprep.subr.bf16.mxu0 0
      %1852 = vmatpush1.bf16.msra.mxu0 %v1789
      %1853 = vmatprep.subr.bf16.mxu0 0
      %1854 = vmatpush1.bf16.msra.mxu0 %v1790
      %1855 = vmatprep.mubr.bf16.mxu0 %v720
      %1856 = vmatmul.mubr.bf16.gmra.mrb[0].mxu0 %v656
      %v1857 = vpop.f32.mrb[0].mxu0
      %v1858 = vadd.f32 0.0, %v1857
      %v1859 = vpop.f32.mrb[0].mxu0
      %v1860 = vpop.f32.mrb[0].mxu0
      %v1861 = vadd.f32 0.0, %v1860
      %v1862 = vpop.f32.mrb[0].mxu0
      %1863 = vmatprep.mubr.bf16.mxu0 %v732
      %1864 = vmatmul.mubr.bf16.gmra.mrb[0].mxu0 %v657
      %v1865 = vpop.f32.mrb[0].mxu0
      %v1866 = vadd.f32 0.0, %v1865
      %v1867 = vpop.f32.mrb[0].mxu0
      %v1868 = vpop.f32.mrb[0].mxu0
      %v1869 = vadd.f32 0.0, %v1868
      %v1870 = vpop.f32.mrb[0].mxu0
      %1871 = vmatprep.mubr.bf16.mxu0 %v744
      %1872 = vmatmul.mubr.bf16.gmra.mrb[0].mxu0 %v658
      %v1873 = vpop.f32.mrb[0].mxu0
      %v1874 = vadd.f32 0.0, %v1873
      %v1875 = vpop.f32.mrb[0].mxu0
      %v1876 = vpop.f32.mrb[0].mxu0
      %v1877 = vadd.f32 0.0, %v1876
      %v1878 = vpop.f32.mrb[0].mxu0
      %1879 = vmatprep.mubr.bf16.mxu0 %v756
      %1880 = vmatmul.mubr.bf16.gmra.mrb[0].mxu0 %v659
      %v1881 = vpop.f32.mrb[0].mxu0
      %v1882 = vadd.f32 0.0, %v1881
      %v1883 = vpop.f32.mrb[0].mxu0
      %v1884 = vpop.f32.mrb[0].mxu0
      %v1885 = vadd.f32 0.0, %v1884
      %v1886 = vpop.f32.mrb[0].mxu0
      %1887 = vmatprep.mubr.bf16.mxu0 %v768
      %1888 = vmatmul.mubr.bf16.gmra.mrb[0].mxu0 %v660
      %v1889 = vpop.f32.mrb[0].mxu0
      %v1890 = vadd.f32 0.0, %v1889
      %v1891 = vpop.f32.mrb[0].mxu0
      %v1892 = vpop.f32.mrb[0].mxu0
      %v1893 = vadd.f32 0.0, %v1892
      %v1894 = vpop.f32.mrb[0].mxu0
      %1895 = vmatprep.mubr.bf16.mxu0 %v780
      %1896 = vmatmul.mubr.bf16.gmra.mrb[0].mxu0 %v661
      %v1897 = vpop.f32.mrb[0].mxu0
      %v1898 = vadd.f32 0.0, %v1897
      %v1899 = vpop.f32.mrb[0].mxu0
      %v1900 = vpop.f32.mrb[0].mxu0
      %v1901 = vadd.f32 0.0, %v1900
      %v1902 = vpop.f32.mrb[0].mxu0
      %1903 = vmatprep.mubr.bf16.mxu0 %v792
      %1904 = vmatmul.mubr.bf16.gmra.mrb[0].mxu0 %v662
      %v1905 = vpop.f32.mrb[0].mxu0
      %v1906 = vadd.f32 0.0, %v1905
      %v1907 = vpop.f32.mrb[0].mxu0
      %v1908 = vpop.f32.mrb[0].mxu0
      %v1909 = vadd.f32 0.0, %v1908
      %v1910 = vpop.f32.mrb[0].mxu0
      %1911 = vmatprep.mubr.bf16.mxu0 %v804
      %1912 = vmatmul.mubr.bf16.gmra.mrb[0].mxu0 %v663
      %v1913 = vpop.f32.mrb[0].mxu0
      %v1914 = vadd.f32 0.0, %v1913
      %v1915 = vpop.f32.mrb[0].mxu0
      %v1916 = vpop.f32.mrb[0].mxu0
      %v1917 = vadd.f32 0.0, %v1916
      %v1918 = vpop.f32.mrb[0].mxu0
      %1919 = vdwg.mxu0
      %1920 = vmatprep.subr.bf16.mxu0 0
      %1921 = vmatpush1.bf16.msra.mxu0 %v1791
      %1922 = vmatprep.subr.bf16.mxu0 0
      %1923 = vmatpush1.bf16.msra.mxu0 %v1792
      %1924 = vmatprep.subr.bf16.mxu0 0
      %1925 = vmatpush1.bf16.msra.mxu0 %v1793
      %1926 = vmatprep.subr.bf16.mxu0 0
      %1927 = vmatpush1.bf16.msra.mxu0 %v1794
      %1928 = vmatprep.subr.bf16.mxu0 0
      %1929 = vmatpush1.bf16.msra.mxu0 %v1795
      %1930 = vmatprep.subr.bf16.mxu0 0
      %1931 = vmatpush1.bf16.msra.mxu0 %v1796
      %1932 = vmatprep.subr.bf16.mxu0 0
      %1933 = vmatpush1.bf16.msra.mxu0 %v1797
      %1934 = vmatprep.subr.bf16.mxu0 0
      %1935 = vmatpush1.bf16.msra.mxu0 %v1798
      %1936 = vmatprep.subr.bf16.mxu0 0
      %1937 = vmatpush1.bf16.msra.mxu0 0
      %1938 = vmatprep.subr.bf16.mxu0 0
      %1939 = vmatpush1.bf16.msra.mxu0 0
      %1940 = vmatprep.subr.bf16.mxu0 0
      %1941 = vmatpush1.bf16.msra.mxu0 0
      %1942 = vmatprep.subr.bf16.mxu0 0
      %1943 = vmatpush1.bf16.msra.mxu0 0
      %1944 = vmatprep.subr.bf16.mxu0 0
      %1945 = vmatpush1.bf16.msra.mxu0 0
      %1946 = vmatprep.subr.bf16.mxu0 0
      %1947 = vmatpush1.bf16.msra.mxu0 0
      %1948 = vmatprep.subr.bf16.mxu0 0
      %1949 = vmatpush1.bf16.msra.mxu0 0
      %1950 = vmatprep.subr.bf16.mxu0 0
      %1951 = vmatpush1.bf16.msra.mxu0 0
      %1952 = vmatprep.mubr.bf16.mxu0 0
      %1953 = vmatmul.mubr.bf16.gmra.mrb[0].mxu0 %v824
      %v1954 = vpop.f32.mrb[0].mxu0
      %v1955 = vadd.f32 %v1858, %v1954
      %v1956 = vpop.f32.mrb[0].mxu0
      %v1957 = vpop.f32.mrb[0].mxu0
      %v1958 = vadd.f32 %v1861, %v1957
      %v1959 = vpop.f32.mrb[0].mxu0
      %1960 = vmatprep.mubr.bf16.mxu0 0
      %1961 = vmatmul.mubr.bf16.gmra.mrb[0].mxu0 %v827
      %v1962 = vpop.f32.mrb[0].mxu0
      %v1963 = vadd.f32 %v1866, %v1962
      %v1964 = vpop.f32.mrb[0].mxu0
      %v1965 = vpop.f32.mrb[0].mxu0
      %v1966 = vadd.f32 %v1869, %v1965
      %v1967 = vpop.f32.mrb[0].mxu0
      %1968 = vmatprep.mubr.bf16.mxu0 0
      %1969 = vmatmul.mubr.bf16.gmra.mrb[0].mxu0 %v830
      %v1970 = vpop.f32.mrb[0].mxu0
      %v1971 = vadd.f32 %v1874, %v1970
      %v1972 = vpop.f32.mrb[0].mxu0
      %v1973 = vpop.f32.mrb[0].mxu0
      %v1974 = vadd.f32 %v1877, %v1973
      %v1975 = vpop.f32.mrb[0].mxu0
      %1976 = vmatprep.mubr.bf16.mxu0 0
      %1977 = vmatmul.mubr.bf16.gmra.mrb[0].mxu0 %v833
      %v1978 = vpop.f32.mrb[0].mxu0
      %v1979 = vadd.f32 %v1882, %v1978
      %v1980 = vpop.f32.mrb[0].mxu0
      %v1981 = vpop.f32.mrb[0].mxu0
      %v1982 = vadd.f32 %v1885, %v1981
      %v1983 = vpop.f32.mrb[0].mxu0
      %1984 = vmatprep.mubr.bf16.mxu0 0
      %1985 = vmatmul.mubr.bf16.gmra.mrb[0].mxu0 %v836
      %v1986 = vpop.f32.mrb[0].mxu0
      %v1987 = vadd.f32 %v1890, %v1986
      %v1988 = vpop.f32.mrb[0].mxu0
      %v1989 = vpop.f32.mrb[0].mxu0
      %v1990 = vadd.f32 %v1893, %v1989
      %v1991 = vpop.f32.mrb[0].mxu0
      %1992 = vmatprep.mubr.bf16.mxu0 0
      %1993 = vmatmul.mubr.bf16.gmra.mrb[0].mxu0 %v839
      %v1994 = vpop.f32.mrb[0].mxu0
      %v1995 = vadd.f32 %v1898, %v1994
      %v1996 = vpop.f32.mrb[0].mxu0
      %v1997 = vpop.f32.mrb[0].mxu0
      %v1998 = vadd.f32 %v1901, %v1997
      %v1999 = vpop.f32.mrb[0].mxu0
      %2000 = vmatprep.mubr.bf16.mxu0 0
      %2001 = vmatmul.mubr.bf16.gmra.mrb[0].mxu0 %v842
      %v2002 = vpop.f32.mrb[0].mxu0
      %v2003 = vadd.f32 %v1906, %v2002
      %v2004 = vpop.f32.mrb[0].mxu0
      %v2005 = vpop.f32.mrb[0].mxu0
      %v2006 = vadd.f32 %v1909, %v2005
      %v2007 = vpop.f32.mrb[0].mxu0
      %2008 = vmatprep.mubr.bf16.mxu0 0
      %2009 = vmatmul.mubr.bf16.gmra.mrb[0].mxu0 %v845
      %v2010 = vpop.f32.mrb[0].mxu0
      %v2011 = vadd.f32 %v1914, %v2010
      %v2012 = vpop.f32.mrb[0].mxu0
      %v2013 = vpop.f32.mrb[0].mxu0
      %v2014 = vadd.f32 %v1917, %v2013
      %v2015 = vpop.f32.mrb[0].mxu0
      %2016 = vdwg.mxu0
      %v2017 = vadd.f32 %v1568, %v1955
      %v2018 = vadd.f32 %v1571, %v1958
      %v2019 = vadd.f32 %v1576, %v1963
      %v2020 = vadd.f32 %v1579, %v1966
      %v2021 = vadd.f32 %v1584, %v1971
      %v2022 = vadd.f32 %v1587, %v1974
      %v2023 = vadd.f32 %v1592, %v1979
      %v2024 = vadd.f32 %v1595, %v1982
      %v2025 = vadd.f32 %v1600, %v1987
      %v2026 = vadd.f32 %v1603, %v1990
      %v2027 = vadd.f32 %v1608, %v1995
      %v2028 = vadd.f32 %v1611, %v1998
      %v2029 = vadd.f32 %v1616, %v2003
      %v2030 = vadd.f32 %v1619, %v2006
      %v2031 = vadd.f32 %v1624, %v2011
      %v2032 = vadd.f32 %v1627, %v2014
      %v2034 = vlaneseq
      %v2035 = vshrl.u32 %v2034, 7
      %v2036 = vsub.s32 0, %v2035
      %v2037 = vrot.slane %v856, %v2036
      %v2039 = vadd.f32 %v2017, %v2037
      %v2040 = vadd.f32 %v2018, %v2037
      %v2041 = vadd.f32 %v2019, %v2037
      %v2042 = vadd.f32 %v2020, %v2037
      %v2043 = vadd.f32 %v2021, %v2037
      %v2044 = vadd.f32 %v2022, %v2037
      %v2045 = vadd.f32 %v2023, %v2037
      %v2046 = vadd.f32 %v2024, %v2037
      %v2047 = vadd.f32 %v2025, %v2037
      %v2048 = vadd.f32 %v2026, %v2037
      %v2049 = vadd.f32 %v2027, %v2037
      %v2050 = vadd.f32 %v2028, %v2037
      %v2051 = vadd.f32 %v2029, %v2037
      %v2052 = vadd.f32 %v2030, %v2037
      %v2053 = vadd.f32 %v2031, %v2037
      %v2054 = vadd.f32 %v2032, %v2037
      %v2055 = vmax.f32 %v2039, 0.0
      %v2056 = vmax.f32 %v2040, 0.0
      %v2057 = vmax.f32 %v2041, 0.0
      %v2058 = vmax.f32 %v2042, 0.0
      %v2059 = vmax.f32 %v2043, 0.0
      %v2060 = vmax.f32 %v2044, 0.0
      %v2061 = vmax.f32 %v2045, 0.0
      %v2062 = vmax.f32 %v2046, 0.0
      %v2063 = vmax.f32 %v2047, 0.0
      %v2064 = vmax.f32 %v2048, 0.0
      %v2065 = vmax.f32 %v2049, 0.0
      %v2066 = vmax.f32 %v2050, 0.0
      %v2067 = vmax.f32 %v2051, 0.0
      %v2068 = vmax.f32 %v2052, 0.0
      %v2069 = vmax.f32 %v2053, 0.0
      %v2070 = vmax.f32 %v2054, 0.0
      %v2071 = vpack.c.bf16 %v2056, %v2055
      %v2072 = vpack.c.bf16 %v2058, %v2057
      %v2073 = vpack.c.bf16 %v2060, %v2059
      %v2074 = vpack.c.bf16 %v2062, %v2061
      %v2075 = vpack.c.bf16 %v2064, %v2063
      %v2076 = vpack.c.bf16 %v2066, %v2065
      %v2077 = vpack.c.bf16 %v2068, %v2067
      %v2078 = vpack.c.bf16 %v2070, %v2069
      %v2087 = vunpack.c.l.b16 %v2071
      %v2088 = vunpack.c.h.b16 %v2071
      %v2089 = vunpack.c.l.b16 %v2072
      %v2090 = vunpack.c.h.b16 %v2072
      %v2091 = vunpack.c.l.b16 %v2073
      %v2092 = vunpack.c.h.b16 %v2073
      %v2093 = vunpack.c.l.b16 %v2074
      %v2094 = vunpack.c.h.b16 %v2074
      %v2095 = vunpack.c.l.b16 %v2075
      %v2096 = vunpack.c.h.b16 %v2075
      %v2097 = vunpack.c.l.b16 %v2076
      %v2098 = vunpack.c.h.b16 %v2076
      %v2099 = vunpack.c.l.b16 %v2077
      %v2100 = vunpack.c.h.b16 %v2077
      %v2101 = vunpack.c.l.b16 %v2078
      %v2102 = vunpack.c.h.b16 %v2078
      %v2103 = vpack.c.b16 %v2087, %v2087
      %v2104 = vpack.c.b16 %v2088, %v2088
      %v2105 = vpack.c.b16 %v2089, %v2089
      %v2106 = vpack.c.b16 %v2090, %v2090
      %v2107 = vpack.c.b16 %v2091, %v2091
      %v2108 = vpack.c.b16 %v2092, %v2092
      %v2109 = vpack.c.b16 %v2093, %v2093
      %v2110 = vpack.c.b16 %v2094, %v2094
      %v2111 = vpack.c.b16 %v2095, %v2095
      %v2112 = vpack.c.b16 %v2096, %v2096
      %v2113 = vpack.c.b16 %v2097, %v2097
      %v2114 = vpack.c.b16 %v2098, %v2098
      %v2115 = vpack.c.b16 %v2099, %v2099
      %v2116 = vpack.c.b16 %v2100, %v2100
      %v2117 = vpack.c.b16 %v2101, %v2101
      %v2118 = vpack.c.b16 %v2102, %v2102
      %2135 = vst [vmem:[%s219] sm:$0xf] %v2103
      %2136 = vst [vmem:[%s219 + $0x4] sm:$0xf] %v2104
      %2137 = vst [vmem:[%s219 + $0x8] sm:$0xf] %v2105
      %2138 = vst [vmem:[%s219 + $0xc] sm:$0xf] %v2106
      %2139 = vst [vmem:[%s219 + $0x10] sm:$0xf] %v2107
      %2140 = vst [vmem:[%s219 + $0x14] sm:$0xf] %v2108
      %2141 = vst [vmem:[%s219 + $0x18] sm:$0xf] %v2109
      %2142 = vst [vmem:[%s219 + $0x1c] sm:$0xf] %v2110
      %2143 = vst [vmem:[%s219 + $0x20] sm:$0xf] %v2111
      %2144 = vst [vmem:[%s219 + $0x24] sm:$0xf] %v2112
      %2145 = vst [vmem:[%s219 + $0x28] sm:$0xf] %v2113
      %2146 = vst [vmem:[%s219 + $0x2c] sm:$0xf] %v2114
      %2147 = vst [vmem:[%s219 + $0x30] sm:$0xf] %v2115
      %2148 = vst [vmem:[%s219 + $0x34] sm:$0xf] %v2116
      %2149 = vst [vmem:[%s219 + $0x38] sm:$0xf] %v2117
      %2150 = vst [vmem:[%s219 + $0x3c] sm:$0xf] %v2118
      %s2151 = smul.u32 16, %s20
      %p2152 = scmp.lt.s32.totalorder %s19, 1
      %s2153 = scalar_select %p2152, %s19, 1
      %p2154 = scmp.lt.s32.totalorder %s2151, 31
      %s2155 = scalar_select %p2154, %s2151, 31
      %s2156 = smul.addr %s2153, 32
      %s2157 = sadd.s32 %s2155, %s2156
      %s2158 = smul.addr %s2157, 4
      %s2159 = scalar_lea.vmem %s4, %s2158
      // Predicated region
      $region37: #{bottleneck_forward.2} parent=35 // pred_check
        %p2160 = pneg %p136
      $region38: #{bottleneck_forward.2} parent=35 // pred_check_branch
        %2162 = sbr.rel (%p2160) target = $region40
      $region39: #{bottleneck_forward.2} parent=35 // pred_region
        %s2163 = smul.u32 16, %s20
      $region40: #{bottleneck_forward.2} parent=35 // pred_fallthru
        _
    $region36: #{bottleneck_forward.2} parent=5 // pred_fallthru
      _
    %p2164 = scmp.le.s32.totalorder 2, %s10
    // Predicated region
    $region41: #{bottleneck_forward.2} parent=5 // pred_check
      %p2165 = pneg %p2164
    $region42: #{bottleneck_forward.2} parent=5 // pred_check_branch
      %2167 = sbr.rel (%p2165) target = $region44
    $region43: #{bottleneck_forward.2} parent=5 // pred_region
      %s2168 = ssub.s32 %s10, 2
      // Predicated region
      $region45: #{bottleneck_forward.2} parent=43 // pred_check
        %p2169 = pneg %p142
      $region46: #{bottleneck_forward.2} parent=43 // pred_check_branch
        %2171 = sbr.rel (%p2169) target = $region48
      $region47: #{bottleneck_forward.2} parent=43 // pred_region
        %s2172 = smul.u32 16, %s22
        %p2173 = scmp.lt.s32.totalorder %s21, 1
        %s2174 = scalar_select %p2173, %s21, 1
        %p2175 = scmp.lt.s32.totalorder %s2172, 31
        %s2176 = scalar_select %p2175, %s2172, 31
        %s2177 = smul.addr %s2174, 32
        %s2178 = sadd.s32 %s2176, %s2177
        %s2179 = smul.addr %s2178, 4
        %s2180 = scalar_lea.vmem %s4, %s2179
      $region48: #{bottleneck_forward.2} parent=43 // pred_fallthru
        _
    $region44: #{bottleneck_forward.2} parent=5 // pred_fallthru
      _
  $region6: #{bottleneck_forward.2} parent=0 // loop_footer
    %s14 = sadd.s32 1, %s10
  $region7: #{bottleneck_forward.2} parent=0 // loop_footer_branch
    %9 = sbr.rel target = $region3
  $region8: #{bottleneck_forward.2} parent=0 // loop_exit
    _

</llo_original>
